<compile_context>
chip_gen: v6e
topology: v6e:2x2x1
jax: 0.10.0
libtpu: 0.0.40
codegen_flags: <defaults>
</compile_context>

<pallas_src>
import functools

import jax
import jax.numpy as jnp
from jax.experimental import pallas as pl
from jax.experimental.pallas import tpu as pltpu


def _spatial_attention_kernel(
    w_ref,        # (2, K*K) f32 SMEM: row 0 -> avg-map filter, row 1 -> max-map filter
    x_ref,        # (1, TC, H*W) VMEM: one lane-dense channel tile of one batch element
    o_ref,        # (1, 1, H, W) VMEM: sigmoid(conv) output (written on last c step)
    sum_ref,      # (1, H*W) f32 VMEM scratch: running channel sum
    max_ref,      # (1, H*W) f32 VMEM scratch: running channel max
    avg_pad_ref,  # (Hp, Wp) f32 VMEM scratch: zero-padded avg map
    max_pad_ref,  # (Hp, Wp) f32 VMEM scratch: zero-padded max map
    avg_sh_ref,   # (K, Hp, W) f32 VMEM scratch: lane-shifted copies of avg map
    max_sh_ref,   # (K, Hp, W) f32 VMEM scratch: lane-shifted copies of max map
    *, C, H, W, K,
):
    pad = (K - 1) // 2
    c = pl.program_id(1)
    nc = pl.num_programs(1)

    # --- Streamed channel-tile partial pooling on a lane-dense (TC, H*W) block. ---
    x = x_ref[0]                                                       # (TC, H*W)
    part_sum = jnp.sum(x.astype(jnp.float32), axis=0, keepdims=True)   # f32 accumulate
    part_max = jnp.max(x, axis=0, keepdims=True).astype(jnp.float32)

    @pl.when(c == 0)
    def _():
        sum_ref[...] = part_sum
        max_ref[...] = part_max

    @pl.when(c > 0)
    def _():
        sum_ref[...] = sum_ref[...] + part_sum
        max_ref[...] = jnp.maximum(max_ref[...], part_max)

    # --- Finalize on the last channel tile: pad, KxK conv, sigmoid, store. ---
    @pl.when(c == nc - 1)
    def _():
        Hp, Wp = H + 2 * pad, W + 2 * pad

        # Zero-pad only the tiny pooled maps (cheap VMEM/VPU work).
        zeros_p = jnp.zeros((Hp, Wp), jnp.float32)
        avg_pad_ref[...] = zeros_p
        max_pad_ref[...] = zeros_p

        # De-flatten the pooled rows straight into the zero-padded maps
        # (2*H tiny masked stores, executed once per batch element).
        inv_c = 1.0 / C
        for i in range(H):
            row = slice(i * W, (i + 1) * W)
            avg_pad_ref[pad + i:pad + i + 1, pad:pad + W] = sum_ref[:, row] * inv_c
            max_pad_ref[pad + i:pad + i + 1, pad:pad + W] = max_ref[:, row]

        # Hoist the lane (dw) shifts: 2*K cross-lane relayouts total.
        avg_p = avg_pad_ref[...]
        max_p = max_pad_ref[...]
        for dw in range(K):
            avg_sh_ref[dw] = avg_p[:, dw:dw + W]
            max_sh_ref[dw] = max_p[:, dw:dw + W]

        # Inner MAC loop: only sublane-offset reads; 4 independent accumulators
        # break the single serial add chain for the VLIW packer.
        acc_a0 = jnp.zeros((H, W), jnp.float32)
        acc_a1 = jnp.zeros((H, W), jnp.float32)
        acc_m0 = jnp.zeros((H, W), jnp.float32)
        acc_m1 = jnp.zeros((H, W), jnp.float32)
        for dh in range(K):
            for dw in range(K):
                k = dh * K + dw
                a_t = w_ref[0, k] * avg_sh_ref[dw, dh:dh + H, :]
                m_t = w_ref[1, k] * max_sh_ref[dw, dh:dh + H, :]
                if dh % 2 == 0:
                    acc_a0 = acc_a0 + a_t
                    acc_m0 = acc_m0 + m_t
                else:
                    acc_a1 = acc_a1 + a_t
                    acc_m1 = acc_m1 + m_t

        acc = (acc_a0 + acc_a1) + (acc_m0 + acc_m1)
        o_ref[0, 0] = jax.nn.sigmoid(acc).astype(o_ref.dtype)


def _round_up(x, m):
    return ((x + m - 1) // m) * m


def _pick_channel_tile(C, HW, itemsize, budget_bytes=4 << 20):
    """Largest channel tile whose *padded* VMEM block fits the per-buffer budget.

    The (1, TC, HW) input block has last-two dims (TC, HW); the TPU tiling rule
    requires TC to be a multiple of the sublane tile or equal to C.  The DMA
    target in VMEM is padded to (sublane, 128) tiles, so the budget check uses
    the padded footprint (the old heuristic ignored padding and could blow the
    scoped-VMEM limit for small-W / large-C inputs).
    """
    sub = max(8, 32 // itemsize)                  # f32: 8, bf16: 16, int8: 32
    lane_bytes = _round_up(HW, 128) * itemsize

    def block_bytes(tc):
        return _round_up(tc, sub) * lane_bytes

    cands = [d for d in range(1, C + 1) if C % d == 0 and (d == C or d % sub == 0)]
    fitting = [d for d in cands if block_bytes(d) <= budget_bytes]
    return max(fitting) if fitting else min(cands)


def spatial_attention(x, weight, *, kernel_size=7, channel_tile=None):
    """x: (N, C, H, W); weight: (1, 2, K, K) conv filter (no bias)."""
    assert kernel_size in (3, 7), "kernel size must be 3 or 7"
    pad = 3 if kernel_size == 7 else 1
    N, C, H, W = x.shape
    K = kernel_size
    Hp, Wp = H + 2 * pad, W + 2 * pad
    HW = H * W

    sub = max(8, 32 // x.dtype.itemsize)
    if channel_tile is None:
        channel_tile = _pick_channel_tile(C, HW, x.dtype.itemsize)
    TC = channel_tile
    assert C % TC == 0, "channel_tile must divide C"
    assert TC == C or TC % sub == 0, "channel_tile must be a sublane multiple or equal C"
    n_ct = C // TC

    # Glue kept in plain JAX: free metadata reshapes only (no HBM-level pad/copy).
    x_flat = x.reshape(N, C, HW)
    w_flat = weight.reshape(2, K * K).astype(jnp.float32)

    kernel = functools.partial(_spatial_attention_kernel, C=C, H=H, W=W, K=K)

    return pl.pallas_call(
        kernel,
        out_shape=jax.ShapeDtypeStruct((N, 1, H, W), x.dtype),
        grid=(N, n_ct),
        in_specs=[
            # Small conv filter: scalar table in SMEM.
            pl.BlockSpec(memory_space=pltpu.MemorySpace.SMEM),
            # One lane-dense (batch, channel-tile, H*W) block per grid step.
            pl.BlockSpec((1, TC, HW), lambda n, c: (n, c, 0)),
        ],
        # Output block is constant along the channel-reduction axis; it stays
        # resident in VMEM and is written only on the last channel step.
        out_specs=pl.BlockSpec((1, 1, H, W), lambda n, c: (n, 0, 0, 0)),
        scratch_shapes=[
            pltpu.VMEM((1, HW), jnp.float32),       # running channel sum
            pltpu.VMEM((1, HW), jnp.float32),       # running channel max
            pltpu.VMEM((Hp, Wp), jnp.float32),      # zero-padded avg map
            pltpu.VMEM((Hp, Wp), jnp.float32),      # zero-padded max map
            pltpu.VMEM((K, Hp, W), jnp.float32),    # lane-shifted avg copies
            pltpu.VMEM((K, Hp, W), jnp.float32),    # lane-shifted max copies
        ],
        compiler_params=pltpu.CompilerParams(
            dimension_semantics=("parallel", "arbitrary")),
    )(w_flat, x_flat)


def _reference(x, weight, kernel_size):
    pad = 3 if kernel_size == 7 else 1
    avg = jnp.mean(x, axis=1, keepdims=True)
    mx = jnp.max(x, axis=1, keepdims=True)
    cat = jnp.concatenate([avg, mx], axis=1)
    y = jax.lax.conv_general_dilated(
        cat, weight, window_strides=(1, 1),
        padding=[(pad, pad), (pad, pad)],
        dimension_numbers=("NCHW", "OIHW", "NCHW"),
        precision=jax.lax.Precision.HIGHEST)
    return jax.nn.sigmoid(y)


if __name__ == "__main__":
    key = jax.random.PRNGKey(0)
    kx, kw, kx2, kw2 = jax.random.split(key, 4)

    # --- Config 1: module defaults (kernel_size=7), single channel tile. ---
    N, C, H, W = 2, 4, 16, 16
    K = 7
    x = jax.random.normal(kx, (N, C, H, W), dtype=jnp.float32)

    # Deterministic Conv2d(2, 1, 7, bias=False) init (kaiming-uniform style,
    # fan_in = 2 * K * K), mirroring the PyTorch module's parameter shape.
    fan_in = 2 * K * K
    bound = 1.0 / (fan_in ** 0.5)
    weight = jax.random.uniform(
        kw, (1, 2, K, K), minval=-bound, maxval=bound, dtype=jnp.float32)

    out = jax.block_until_ready(spatial_attention(x, weight, kernel_size=K))
    assert out.shape == (N, 1, H, W)
    assert bool(jnp.all(jnp.isfinite(out)))
    ref = _reference(x, weight, K)
    err = float(jnp.max(jnp.abs(out - ref)))
    assert err < 1e-4, f"mismatch vs reference (K=7): {err}"

    # --- Config 2: exercises the multi-channel-tile reduction path and K=3. ---
    N2, C2, H2, W2 = 2, 16, 8, 8
    K2 = 3
    x2 = jax.random.normal(kx2, (N2, C2, H2, W2), dtype=jnp.float32)
    fan_in2 = 2 * K2 * K2
    bound2 = 1.0 / (fan_in2 ** 0.5)
    weight2 = jax.random.uniform(
        kw2, (1, 2, K2, K2), minval=-bound2, maxval=bound2, dtype=jnp.float32)

    out2 = jax.block_until_ready(
        spatial_attention(x2, weight2, kernel_size=K2, channel_tile=8))
    ref2 = _reference(x2, weight2, K2)
    err2 = float(jnp.max(jnp.abs(out2 - ref2)))
    assert err2 < 1e-4, f"mismatch vs reference (K=3): {err2}"

    print("KERNEL_OK")
</pallas_src>

<mosaic_0001>
module attributes {stable_mosaic.version = 11 : i64} {
  func.func @_spatial_attention_kernel(%arg0: i32, %arg1: i32, %arg2: memref<2x49xf32, #tpu.memory_space<smem>>, %arg3: memref<1x4x256xf32, #tpu.memory_space<vmem>>, %arg4: memref<1x1x16x16xf32, #tpu.memory_space<vmem>>, %arg5: memref<1x256xf32, #tpu.memory_space<vmem>>, %arg6: memref<1x256xf32, #tpu.memory_space<vmem>>, %arg7: memref<22x22xf32, #tpu.memory_space<vmem>>, %arg8: memref<22x22xf32, #tpu.memory_space<vmem>>, %arg9: memref<7x22x16xf32, #tpu.memory_space<vmem>>, %arg10: memref<7x22x16xf32, #tpu.memory_space<vmem>>) attributes {dimension_semantics = [#tpu.dimension_semantics<parallel>, #tpu.dimension_semantics<arbitrary>], iteration_bounds = array<i64: 2, 1>, scalar_prefetch = 0 : i64, scratch_operands = 6 : i64, tpu.core_type = #tpu.core_type<tc>, window_params = [{transform_indices = @transform_0, window_bounds = array<i64: 2, 49>}, {transform_indices = @transform_1, window_bounds = array<i64: 1, 4, 256>}, {transform_indices = @transform_2, window_bounds = array<i64: 1, 1, 16, 16>}]} {
    %c0 = arith.constant 0 : index
    %c0_0 = arith.constant 0 : index
    %c0_1 = arith.constant 0 : index
    %0 = vector.load %arg3[%c0, %c0_0, %c0_1] : memref<1x4x256xf32, #tpu.memory_space<vmem>>, vector<1x4x256xf32>
    %1 = vector.shape_cast %0 : vector<1x4x256xf32> to vector<4x256xf32>
    %cst = arith.constant dense<0.000000e+00> : vector<256xf32>
    %2 = vector.multi_reduction <add>, %1, %cst [0] : vector<4x256xf32> to vector<256xf32>
    %3 = vector.shape_cast %2 : vector<256xf32> to vector<1x256xf32>
    %cst_2 = arith.constant dense<0xFF800000> : vector<256xf32>
    %4 = vector.multi_reduction <maximumf>, %1, %cst_2 [0] : vector<4x256xf32> to vector<256xf32>
    %5 = vector.shape_cast %4 : vector<256xf32> to vector<1x256xf32>
    %c0_i32 = arith.constant 0 : i32
    %6 = arith.cmpi eq, %arg1, %c0_i32 : i32
    %7 = arith.extui %6 : i1 to i32
    %c0_i32_3 = arith.constant 0 : i32
    %8 = arith.cmpi ne, %7, %c0_i32_3 : i32
    scf.if %8 {
      %c0_8 = arith.constant 0 : index
      %c0_9 = arith.constant 0 : index
      %15 = vector.load %arg5[%c0_8, %c0_9] : memref<1x256xf32, #tpu.memory_space<vmem>>, vector<1x256xf32>
      tpu.vector_store %arg5[%c0_8, %c0_9], %3 {strides = array<i32>} : memref<1x256xf32, #tpu.memory_space<vmem>>, vector<1x256xf32>,
      %c0_10 = arith.constant 0 : index
      %c0_11 = arith.constant 0 : index
      %16 = vector.load %arg6[%c0_10, %c0_11] : memref<1x256xf32, #tpu.memory_space<vmem>>, vector<1x256xf32>
      tpu.vector_store %arg6[%c0_10, %c0_11], %5 {strides = array<i32>} : memref<1x256xf32, #tpu.memory_space<vmem>>, vector<1x256xf32>,
    } else {
    }
    %c0_i32_4 = arith.constant 0 : i32
    %9 = arith.cmpi sgt, %arg1, %c0_i32_4 : i32
    %10 = arith.extui %9 : i1 to i32
    %c0_i32_5 = arith.constant 0 : i32
    %11 = arith.cmpi ne, %10, %c0_i32_5 : i32
    scf.if %11 {
      %c0_8 = arith.constant 0 : index
      %c0_9 = arith.constant 0 : index
      %15 = vector.load %arg5[%c0_8, %c0_9] : memref<1x256xf32, #tpu.memory_space<vmem>>, vector<1x256xf32>
      %16 = arith.addf %15, %3 : vector<1x256xf32>
      %c0_10 = arith.constant 0 : index
      %c0_11 = arith.constant 0 : index
      %17 = vector.load %arg5[%c0_10, %c0_11] : memref<1x256xf32, #tpu.memory_space<vmem>>, vector<1x256xf32>
      tpu.vector_store %arg5[%c0_10, %c0_11], %16 {strides = array<i32>} : memref<1x256xf32, #tpu.memory_space<vmem>>, vector<1x256xf32>,
      %c0_12 = arith.constant 0 : index
      %c0_13 = arith.constant 0 : index
      %18 = vector.load %arg6[%c0_12, %c0_13] : memref<1x256xf32, #tpu.memory_space<vmem>>, vector<1x256xf32>
      %19 = arith.maximumf %18, %5 : vector<1x256xf32>
      %c0_14 = arith.constant 0 : index
      %c0_15 = arith.constant 0 : index
      %20 = vector.load %arg6[%c0_14, %c0_15] : memref<1x256xf32, #tpu.memory_space<vmem>>, vector<1x256xf32>
      tpu.vector_store %arg6[%c0_14, %c0_15], %19 {strides = array<i32>} : memref<1x256xf32, #tpu.memory_space<vmem>>, vector<1x256xf32>,
    } else {
    }
    %c0_i32_6 = arith.constant 0 : i32
    %12 = arith.cmpi eq, %arg1, %c0_i32_6 : i32
    %13 = arith.extui %12 : i1 to i32
    %c0_i32_7 = arith.constant 0 : i32
    %14 = arith.cmpi ne, %13, %c0_i32_7 : i32
    scf.if %14 {
      %cst_8 = arith.constant 0.000000e+00 : f32
      %15 = vector.broadcast %cst_8 : f32 to vector<22x22xf32>
      %c0_9 = arith.constant 0 : index
      %c0_10 = arith.constant 0 : index
      %16 = vector.load %arg7[%c0_9, %c0_10] : memref<22x22xf32, #tpu.memory_space<vmem>>, vector<22x22xf32>
      tpu.vector_store %arg7[%c0_9, %c0_10], %15 {strides = array<i32>} : memref<22x22xf32, #tpu.memory_space<vmem>>, vector<22x22xf32>,
      %c0_11 = arith.constant 0 : index
      %c0_12 = arith.constant 0 : index
      %17 = vector.load %arg8[%c0_11, %c0_12] : memref<22x22xf32, #tpu.memory_space<vmem>>, vector<22x22xf32>
      tpu.vector_store %arg8[%c0_11, %c0_12], %15 {strides = array<i32>} : memref<22x22xf32, #tpu.memory_space<vmem>>, vector<22x22xf32>,
      %c0_13 = arith.constant 0 : index
      %c0_14 = arith.constant 0 : index
      %18 = vector.load %arg5[%c0_13, %c0_14] : memref<1x256xf32, #tpu.memory_space<vmem>>, vector<1x16xf32>
      %cst_15 = arith.constant 2.500000e-01 : f32
      %19 = vector.broadcast %cst_15 : f32 to vector<1x16xf32>
      %20 = arith.mulf %18, %19 : vector<1x16xf32>
      %c3 = arith.constant 3 : index
      %c3_16 = arith.constant 3 : index
      %21 = vector.load %arg7[%c3, %c3_16] : memref<22x22xf32, #tpu.memory_space<vmem>>, vector<1x16xf32>
      tpu.vector_store %arg7[%c3, %c3_16], %20 {strides = array<i32>} : memref<22x22xf32, #tpu.memory_space<vmem>>, vector<1x16xf32>,
      %c0_17 = arith.constant 0 : index
      %c0_18 = arith.constant 0 : index
      %22 = vector.load %arg6[%c0_17, %c0_18] : memref<1x256xf32, #tpu.memory_space<vmem>>, vector<1x16xf32>
      %c3_19 = arith.constant 3 : index
      %c3_20 = arith.constant 3 : index
      %23 = vector.load %arg8[%c3_19, %c3_20] : memref<22x22xf32, #tpu.memory_space<vmem>>, vector<1x16xf32>
      tpu.vector_store %arg8[%c3_19, %c3_20], %22 {strides = array<i32>} : memref<22x22xf32, #tpu.memory_space<vmem>>, vector<1x16xf32>,
      %c0_21 = arith.constant 0 : index
      %c16 = arith.constant 16 : index
      %24 = vector.load %arg5[%c0_21, %c16] : memref<1x256xf32, #tpu.memory_space<vmem>>, vector<1x16xf32>
      %cst_22 = arith.constant 2.500000e-01 : f32
      %25 = vector.broadcast %cst_22 : f32 to vector<1x16xf32>
      %26 = arith.mulf %24, %25 : vector<1x16xf32>
      %c4 = arith.constant 4 : index
      %c3_23 = arith.constant 3 : index
      %27 = vector.load %arg7[%c4, %c3_23] : memref<22x22xf32, #tpu.memory_space<vmem>>, vector<1x16xf32>
      tpu.vector_store %arg7[%c4, %c3_23], %26 {strides = array<i32>} : memref<22x22xf32, #tpu.memory_space<vmem>>, vector<1x16xf32>,
      %c0_24 = arith.constant 0 : index
      %c16_25 = arith.constant 16 : index
      %28 = vector.load %arg6[%c0_24, %c16_25] : memref<1x256xf32, #tpu.memory_space<vmem>>, vector<1x16xf32>
      %c4_26 = arith.constant 4 : index
      %c3_27 = arith.constant 3 : index
      %29 = vector.load %arg8[%c4_26, %c3_27] : memref<22x22xf32, #tpu.memory_space<vmem>>, vector<1x16xf32>
      tpu.vector_store %arg8[%c4_26, %c3_27], %28 {strides = array<i32>} : memref<22x22xf32, #tpu.memory_space<vmem>>, vector<1x16xf32>,
      %c0_28 = arith.constant 0 : index
      %c32 = arith.constant 32 : index
      %30 = vector.load %arg5[%c0_28, %c32] : memref<1x256xf32, #tpu.memory_space<vmem>>, vector<1x16xf32>
      %cst_29 = arith.constant 2.500000e-01 : f32
      %31 = vector.broadcast %cst_29 : f32 to vector<1x16xf32>
      %32 = arith.mulf %30, %31 : vector<1x16xf32>
      %c5 = arith.constant 5 : index
      %c3_30 = arith.constant 3 : index
      %33 = vector.load %arg7[%c5, %c3_30] : memref<22x22xf32, #tpu.memory_space<vmem>>, vector<1x16xf32>
      tpu.vector_store %arg7[%c5, %c3_30], %32 {strides = array<i32>} : memref<22x22xf32, #tpu.memory_space<vmem>>, vector<1x16xf32>,
      %c0_31 = arith.constant 0 : index
      %c32_32 = arith.constant 32 : index
      %34 = vector.load %arg6[%c0_31, %c32_32] : memref<1x256xf32, #tpu.memory_space<vmem>>, vector<1x16xf32>
      %c5_33 = arith.constant 5 : index
      %c3_34 = arith.constant 3 : index
      %35 = vector.load %arg8[%c5_33, %c3_34] : memref<22x22xf32, #tpu.memory_space<vmem>>, vector<1x16xf32>
      tpu.vector_store %arg8[%c5_33, %c3_34], %34 {strides = array<i32>} : memref<22x22xf32, #tpu.memory_space<vmem>>, vector<1x16xf32>,
      %c0_35 = arith.constant 0 : index
      %c48 = arith.constant 48 : index
      %36 = vector.load %arg5[%c0_35, %c48] : memref<1x256xf32, #tpu.memory_space<vmem>>, vector<1x16xf32>
      %cst_36 = arith.constant 2.500000e-01 : f32
      %37 = vector.broadcast %cst_36 : f32 to vector<1x16xf32>
      %38 = arith.mulf %36, %37 : vector<1x16xf32>
      %c6 = arith.constant 6 : index
      %c3_37 = arith.constant 3 : index
      %39 = vector.load %arg7[%c6, %c3_37] : memref<22x22xf32, #tpu.memory_space<vmem>>, vector<1x16xf32>
      tpu.vector_store %arg7[%c6, %c3_37], %38 {strides = array<i32>} : memref<22x22xf32, #tpu.memory_space<vmem>>, vector<1x16xf32>,
      %c0_38 = arith.constant 0 : index
      %c48_39 = arith.constant 48 : index
      %40 = vector.load %arg6[%c0_38, %c48_39] : memref<1x256xf32, #tpu.memory_space<vmem>>, vector<1x16xf32>
      %c6_40 = arith.constant 6 : index
      %c3_41 = arith.constant 3 : index
      %41 = vector.load %arg8[%c6_40, %c3_41] : memref<22x22xf32, #tpu.memory_space<vmem>>, vector<1x16xf32>
      tpu.vector_store %arg8[%c6_40, %c3_41], %40 {strides = array<i32>} : memref<22x22xf32, #tpu.memory_space<vmem>>, vector<1x16xf32>,
      %c0_42 = arith.constant 0 : index
      %c64 = arith.constant 64 : index
      %42 = vector.load %arg5[%c0_42, %c64] : memref<1x256xf32, #tpu.memory_space<vmem>>, vector<1x16xf32>
      %cst_43 = arith.constant 2.500000e-01 : f32
      %43 = vector.broadcast %cst_43 : f32 to vector<1x16xf32>
      %44 = arith.mulf %42, %43 : vector<1x16xf32>
      %c7 = arith.constant 7 : index
      %c3_44 = arith.constant 3 : index
      %45 = vector.load %arg7[%c7, %c3_44] : memref<22x22xf32, #tpu.memory_space<vmem>>, vector<1x16xf32>
      tpu.vector_store %arg7[%c7, %c3_44], %44 {strides = array<i32>} : memref<22x22xf32, #tpu.memory_space<vmem>>, vector<1x16xf32>,
      %c0_45 = arith.constant 0 : index
      %c64_46 = arith.constant 64 : index
      %46 = vector.load %arg6[%c0_45, %c64_46] : memref<1x256xf32, #tpu.memory_space<vmem>>, vector<1x16xf32>
      %c7_47 = arith.constant 7 : index
      %c3_48 = arith.constant 3 : index
      %47 = vector.load %arg8[%c7_47, %c3_48] : memref<22x22xf32, #tpu.memory_space<vmem>>, vector<1x16xf32>
      tpu.vector_store %arg8[%c7_47, %c3_48], %46 {strides = array<i32>} : memref<22x22xf32, #tpu.memory_space<vmem>>, vector<1x16xf32>,
      %c0_49 = arith.constant 0 : index
      %c80 = arith.constant 80 : index
      %48 = vector.load %arg5[%c0_49, %c80] : memref<1x256xf32, #tpu.memory_space<vmem>>, vector<1x16xf32>
      %cst_50 = arith.constant 2.500000e-01 : f32
      %49 = vector.broadcast %cst_50 : f32 to vector<1x16xf32>
      %50 = arith.mulf %48, %49 : vector<1x16xf32>
      %c8 = arith.constant 8 : index
      %c3_51 = arith.constant 3 : index
      %51 = vector.load %arg7[%c8, %c3_51] : memref<22x22xf32, #tpu.memory_space<vmem>>, vector<1x16xf32>
      tpu.vector_store %arg7[%c8, %c3_51], %50 {strides = array<i32>} : memref<22x22xf32, #tpu.memory_space<vmem>>, vector<1x16xf32>,
      %c0_52 = arith.constant 0 : index
      %c80_53 = arith.constant 80 : index
      %52 = vector.load %arg6[%c0_52, %c80_53] : memref<1x256xf32, #tpu.memory_space<vmem>>, vector<1x16xf32>
      %c8_54 = arith.constant 8 : index
      %c3_55 = arith.constant 3 : index
      %53 = vector.load %arg8[%c8_54, %c3_55] : memref<22x22xf32, #tpu.memory_space<vmem>>, vector<1x16xf32>
      tpu.vector_store %arg8[%c8_54, %c3_55], %52 {strides = array<i32>} : memref<22x22xf32, #tpu.memory_space<vmem>>, vector<1x16xf32>,
      %c0_56 = arith.constant 0 : index
      %c96 = arith.constant 96 : index
      %54 = vector.load %arg5[%c0_56, %c96] : memref<1x256xf32, #tpu.memory_space<vmem>>, vector<1x16xf32>
      %cst_57 = arith.constant 2.500000e-01 : f32
      %55 = vector.broadcast %cst_57 : f32 to vector<1x16xf32>
      %56 = arith.mulf %54, %55 : vector<1x16xf32>
      %c9 = arith.constant 9 : index
      %c3_58 = arith.constant 3 : index
      %57 = vector.load %arg7[%c9, %c3_58] : memref<22x22xf32, #tpu.memory_space<vmem>>, vector<1x16xf32>
      tpu.vector_store %arg7[%c9, %c3_58], %56 {strides = array<i32>} : memref<22x22xf32, #tpu.memory_space<vmem>>, vector<1x16xf32>,
      %c0_59 = arith.constant 0 : index
      %c96_60 = arith.constant 96 : index
      %58 = vector.load %arg6[%c0_59, %c96_60] : memref<1x256xf32, #tpu.memory_space<vmem>>, vector<1x16xf32>
      %c9_61 = arith.constant 9 : index
      %c3_62 = arith.constant 3 : index
      %59 = vector.load %arg8[%c9_61, %c3_62] : memref<22x22xf32, #tpu.memory_space<vmem>>, vector<1x16xf32>
      tpu.vector_store %arg8[%c9_61, %c3_62], %58 {strides = array<i32>} : memref<22x22xf32, #tpu.memory_space<vmem>>, vector<1x16xf32>,
      %c0_63 = arith.constant 0 : index
      %c112 = arith.constant 112 : index
      %60 = vector.load %arg5[%c0_63, %c112] : memref<1x256xf32, #tpu.memory_space<vmem>>, vector<1x16xf32>
      %cst_64 = arith.constant 2.500000e-01 : f32
      %61 = vector.broadcast %cst_64 : f32 to vector<1x16xf32>
      %62 = arith.mulf %60, %61 : vector<1x16xf32>
      %c10 = arith.constant 10 : index
      %c3_65 = arith.constant 3 : index
      %63 = vector.load %arg7[%c10, %c3_65] : memref<22x22xf32, #tpu.memory_space<vmem>>, vector<1x16xf32>
      tpu.vector_store %arg7[%c10, %c3_65], %62 {strides = array<i32>} : memref<22x22xf32, #tpu.memory_space<vmem>>, vector<1x16xf32>,
      %c0_66 = arith.constant 0 : index
      %c112_67 = arith.constant 112 : index
      %64 = vector.load %arg6[%c0_66, %c112_67] : memref<1x256xf32, #tpu.memory_space<vmem>>, vector<1x16xf32>
      %c10_68 = arith.constant 10 : index
      %c3_69 = arith.constant 3 : index
      %65 = vector.load %arg8[%c10_68, %c3_69] : memref<22x22xf32, #tpu.memory_space<vmem>>, vector<1x16xf32>
      tpu.vector_store %arg8[%c10_68, %c3_69], %64 {strides = array<i32>} : memref<22x22xf32, #tpu.memory_space<vmem>>, vector<1x16xf32>,
      %c0_70 = arith.constant 0 : index
      %c128 = arith.constant 128 : index
      %66 = vector.load %arg5[%c0_70, %c128] : memref<1x256xf32, #tpu.memory_space<vmem>>, vector<1x16xf32>
      %cst_71 = arith.constant 2.500000e-01 : f32
      %67 = vector.broadcast %cst_71 : f32 to vector<1x16xf32>
      %68 = arith.mulf %66, %67 : vector<1x16xf32>
      %c11 = arith.constant 11 : index
      %c3_72 = arith.constant 3 : index
      %69 = vector.load %arg7[%c11, %c3_72] : memref<22x22xf32, #tpu.memory_space<vmem>>, vector<1x16xf32>
      tpu.vector_store %arg7[%c11, %c3_72], %68 {strides = array<i32>} : memref<22x22xf32, #tpu.memory_space<vmem>>, vector<1x16xf32>,
      %c0_73 = arith.constant 0 : index
      %c128_74 = arith.constant 128 : index
      %70 = vector.load %arg6[%c0_73, %c128_74] : memref<1x256xf32, #tpu.memory_space<vmem>>, vector<1x16xf32>
      %c11_75 = arith.constant 11 : index
      %c3_76 = arith.constant 3 : index
      %71 = vector.load %arg8[%c11_75, %c3_76] : memref<22x22xf32, #tpu.memory_space<vmem>>, vector<1x16xf32>
      tpu.vector_store %arg8[%c11_75, %c3_76], %70 {strides = array<i32>} : memref<22x22xf32, #tpu.memory_space<vmem>>, vector<1x16xf32>,
      %c0_77 = arith.constant 0 : index
      %c144 = arith.constant 144 : index
      %72 = vector.load %arg5[%c0_77, %c144] : memref<1x256xf32, #tpu.memory_space<vmem>>, vector<1x16xf32>
      %cst_78 = arith.constant 2.500000e-01 : f32
      %73 = vector.broadcast %cst_78 : f32 to vector<1x16xf32>
      %74 = arith.mulf %72, %73 : vector<1x16xf32>
      %c12 = arith.constant 12 : index
      %c3_79 = arith.constant 3 : index
      %75 = vector.load %arg7[%c12, %c3_79] : memref<22x22xf32, #tpu.memory_space<vmem>>, vector<1x16xf32>
      tpu.vector_store %arg7[%c12, %c3_79], %74 {strides = array<i32>} : memref<22x22xf32, #tpu.memory_space<vmem>>, vector<1x16xf32>,
      %c0_80 = arith.constant 0 : index
      %c144_81 = arith.constant 144 : index
      %76 = vector.load %arg6[%c0_80, %c144_81] : memref<1x256xf32, #tpu.memory_space<vmem>>, vector<1x16xf32>
      %c12_82 = arith.constant 12 : index
      %c3_83 = arith.constant 3 : index
      %77 = vector.load %arg8[%c12_82, %c3_83] : memref<22x22xf32, #tpu.memory_space<vmem>>, vector<1x16xf32>
      tpu.vector_store %arg8[%c12_82, %c3_83], %76 {strides = array<i32>} : memref<22x22xf32, #tpu.memory_space<vmem>>, vector<1x16xf32>,
      %c0_84 = arith.constant 0 : index
      %c160 = arith.constant 160 : index
      %78 = vector.load %arg5[%c0_84, %c160] : memref<1x256xf32, #tpu.memory_space<vmem>>, vector<1x16xf32>
      %cst_85 = arith.constant 2.500000e-01 : f32
      %79 = vector.broadcast %cst_85 : f32 to vector<1x16xf32>
      %80 = arith.mulf %78, %79 : vector<1x16xf32>
      %c13 = arith.constant 13 : index
      %c3_86 = arith.constant 3 : index
      %81 = vector.load %arg7[%c13, %c3_86] : memref<22x22xf32, #tpu.memory_space<vmem>>, vector<1x16xf32>
      tpu.vector_store %arg7[%c13, %c3_86], %80 {strides = array<i32>} : memref<22x22xf32, #tpu.memory_space<vmem>>, vector<1x16xf32>,
      %c0_87 = arith.constant 0 : index
      %c160_88 = arith.constant 160 : index
      %82 = vector.load %arg6[%c0_87, %c160_88] : memref<1x256xf32, #tpu.memory_space<vmem>>, vector<1x16xf32>
      %c13_89 = arith.constant 13 : index
      %c3_90 = arith.constant 3 : index
      %83 = vector.load %arg8[%c13_89, %c3_90] : memref<22x22xf32, #tpu.memory_space<vmem>>, vector<1x16xf32>
      tpu.vector_store %arg8[%c13_89, %c3_90], %82 {strides = array<i32>} : memref<22x22xf32, #tpu.memory_space<vmem>>, vector<1x16xf32>,
      %c0_91 = arith.constant 0 : index
      %c176 = arith.constant 176 : index
      %84 = vector.load %arg5[%c0_91, %c176] : memref<1x256xf32, #tpu.memory_space<vmem>>, vector<1x16xf32>
      %cst_92 = arith.constant 2.500000e-01 : f32
      %85 = vector.broadcast %cst_92 : f32 to vector<1x16xf32>
      %86 = arith.mulf %84, %85 : vector<1x16xf32>
      %c14 = arith.constant 14 : index
      %c3_93 = arith.constant 3 : index
      %87 = vector.load %arg7[%c14, %c3_93] : memref<22x22xf32, #tpu.memory_space<vmem>>, vector<1x16xf32>
      tpu.vector_store %arg7[%c14, %c3_93], %86 {strides = array<i32>} : memref<22x22xf32, #tpu.memory_space<vmem>>, vector<1x16xf32>,
      %c0_94 = arith.constant 0 : index
      %c176_95 = arith.constant 176 : index
      %88 = vector.load %arg6[%c0_94, %c176_95] : memref<1x256xf32, #tpu.memory_space<vmem>>, vector<1x16xf32>
      %c14_96 = arith.constant 14 : index
      %c3_97 = arith.constant 3 : index
      %89 = vector.load %arg8[%c14_96, %c3_97] : memref<22x22xf32, #tpu.memory_space<vmem>>, vector<1x16xf32>
      tpu.vector_store %arg8[%c14_96, %c3_97], %88 {strides = array<i32>} : memref<22x22xf32, #tpu.memory_space<vmem>>, vector<1x16xf32>,
      %c0_98 = arith.constant 0 : index
      %c192 = arith.constant 192 : index
      %90 = vector.load %arg5[%c0_98, %c192] : memref<1x256xf32, #tpu.memory_space<vmem>>, vector<1x16xf32>
      %cst_99 = arith.constant 2.500000e-01 : f32
      %91 = vector.broadcast %cst_99 : f32 to vector<1x16xf32>
      %92 = arith.mulf %90, %91 : vector<1x16xf32>
      %c15 = arith.constant 15 : index
      %c3_100 = arith.constant 3 : index
      %93 = vector.load %arg7[%c15, %c3_100] : memref<22x22xf32, #tpu.memory_space<vmem>>, vector<1x16xf32>
      tpu.vector_store %arg7[%c15, %c3_100], %92 {strides = array<i32>} : memref<22x22xf32, #tpu.memory_space<vmem>>, vector<1x16xf32>,
      %c0_101 = arith.constant 0 : index
      %c192_102 = arith.constant 192 : index
      %94 = vector.load %arg6[%c0_101, %c192_102] : memref<1x256xf32, #tpu.memory_space<vmem>>, vector<1x16xf32>
      %c15_103 = arith.constant 15 : index
      %c3_104 = arith.constant 3 : index
      %95 = vector.load %arg8[%c15_103, %c3_104] : memref<22x22xf32, #tpu.memory_space<vmem>>, vector<1x16xf32>
      tpu.vector_store %arg8[%c15_103, %c3_104], %94 {strides = array<i32>} : memref<22x22xf32, #tpu.memory_space<vmem>>, vector<1x16xf32>,
      %c0_105 = arith.constant 0 : index
      %c208 = arith.constant 208 : index
      %96 = vector.load %arg5[%c0_105, %c208] : memref<1x256xf32, #tpu.memory_space<vmem>>, vector<1x16xf32>
      %cst_106 = arith.constant 2.500000e-01 : f32
      %97 = vector.broadcast %cst_106 : f32 to vector<1x16xf32>
      %98 = arith.mulf %96, %97 : vector<1x16xf32>
      %c16_107 = arith.constant 16 : index
      %c3_108 = arith.constant 3 : index
      %99 = vector.load %arg7[%c16_107, %c3_108] : memref<22x22xf32, #tpu.memory_space<vmem>>, vector<1x16xf32>
      tpu.vector_store %arg7[%c16_107, %c3_108], %98 {strides = array<i32>} : memref<22x22xf32, #tpu.memory_space<vmem>>, vector<1x16xf32>,
      %c0_109 = arith.constant 0 : index
      %c208_110 = arith.constant 208 : index
      %100 = vector.load %arg6[%c0_109, %c208_110] : memref<1x256xf32, #tpu.memory_space<vmem>>, vector<1x16xf32>
      %c16_111 = arith.constant 16 : index
      %c3_112 = arith.constant 3 : index
      %101 = vector.load %arg8[%c16_111, %c3_112] : memref<22x22xf32, #tpu.memory_space<vmem>>, vector<1x16xf32>
      tpu.vector_store %arg8[%c16_111, %c3_112], %100 {strides = array<i32>} : memref<22x22xf32, #tpu.memory_space<vmem>>, vector<1x16xf32>,
      %c0_113 = arith.constant 0 : index
      %c224 = arith.constant 224 : index
      %102 = vector.load %arg5[%c0_113, %c224] : memref<1x256xf32, #tpu.memory_space<vmem>>, vector<1x16xf32>
      %cst_114 = arith.constant 2.500000e-01 : f32
      %103 = vector.broadcast %cst_114 : f32 to vector<1x16xf32>
      %104 = arith.mulf %102, %103 : vector<1x16xf32>
      %c17 = arith.constant 17 : index
      %c3_115 = arith.constant 3 : index
      %105 = vector.load %arg7[%c17, %c3_115] : memref<22x22xf32, #tpu.memory_space<vmem>>, vector<1x16xf32>
      tpu.vector_store %arg7[%c17, %c3_115], %104 {strides = array<i32>} : memref<22x22xf32, #tpu.memory_space<vmem>>, vector<1x16xf32>,
      %c0_116 = arith.constant 0 : index
      %c224_117 = arith.constant 224 : index
      %106 = vector.load %arg6[%c0_116, %c224_117] : memref<1x256xf32, #tpu.memory_space<vmem>>, vector<1x16xf32>
      %c17_118 = arith.constant 17 : index
      %c3_119 = arith.constant 3 : index
      %107 = vector.load %arg8[%c17_118, %c3_119] : memref<22x22xf32, #tpu.memory_space<vmem>>, vector<1x16xf32>
      tpu.vector_store %arg8[%c17_118, %c3_119], %106 {strides = array<i32>} : memref<22x22xf32, #tpu.memory_space<vmem>>, vector<1x16xf32>,
      %c0_120 = arith.constant 0 : index
      %c240 = arith.constant 240 : index
      %108 = vector.load %arg5[%c0_120, %c240] : memref<1x256xf32, #tpu.memory_space<vmem>>, vector<1x16xf32>
      %cst_121 = arith.constant 2.500000e-01 : f32
      %109 = vector.broadcast %cst_121 : f32 to vector<1x16xf32>
      %110 = arith.mulf %108, %109 : vector<1x16xf32>
      %c18 = arith.constant 18 : index
      %c3_122 = arith.constant 3 : index
      %111 = vector.load %arg7[%c18, %c3_122] : memref<22x22xf32, #tpu.memory_space<vmem>>, vector<1x16xf32>
      tpu.vector_store %arg7[%c18, %c3_122], %110 {strides = array<i32>} : memref<22x22xf32, #tpu.memory_space<vmem>>, vector<1x16xf32>,
      %c0_123 = arith.constant 0 : index
      %c240_124 = arith.constant 240 : index
      %112 = vector.load %arg6[%c0_123, %c240_124] : memref<1x256xf32, #tpu.memory_space<vmem>>, vector<1x16xf32>
      %c18_125 = arith.constant 18 : index
      %c3_126 = arith.constant 3 : index
      %113 = vector.load %arg8[%c18_125, %c3_126] : memref<22x22xf32, #tpu.memory_space<vmem>>, vector<1x16xf32>
      tpu.vector_store %arg8[%c18_125, %c3_126], %112 {strides = array<i32>} : memref<22x22xf32, #tpu.memory_space<vmem>>, vector<1x16xf32>,
      %c0_127 = arith.constant 0 : index
      %c0_128 = arith.constant 0 : index
      %114 = vector.load %arg7[%c0_127, %c0_128] : memref<22x22xf32, #tpu.memory_space<vmem>>, vector<22x22xf32>
      %c0_129 = arith.constant 0 : index
      %c0_130 = arith.constant 0 : index
      %115 = vector.load %arg8[%c0_129, %c0_130] : memref<22x22xf32, #tpu.memory_space<vmem>>, vector<22x22xf32>
      %116 = vector.extract_strided_slice %114 {offsets = [0, 0], sizes = [22, 16], strides = [1, 1]} : vector<22x22xf32> to vector<22x16xf32>
      %c0_131 = arith.constant 0 : index
      %c0_132 = arith.constant 0 : index
      %c0_133 = arith.constant 0 : index
      %117 = vector.load %arg9[%c0_131, %c0_132, %c0_133] : memref<7x22x16xf32, #tpu.memory_space<vmem>>, vector<1x22x16xf32>
      %118 = vector.shape_cast %117 : vector<1x22x16xf32> to vector<22x16xf32>
      %119 = vector.shape_cast %116 : vector<22x16xf32> to vector<1x22x16xf32>
      tpu.vector_store %arg9[%c0_131, %c0_132, %c0_133], %119 {strides = array<i32>} : memref<7x22x16xf32, #tpu.memory_space<vmem>>, vector<1x22x16xf32>,
      %120 = vector.extract_strided_slice %115 {offsets = [0, 0], sizes = [22, 16], strides = [1, 1]} : vector<22x22xf32> to vector<22x16xf32>
      %c0_134 = arith.constant 0 : index
      %c0_135 = arith.constant 0 : index
      %c0_136 = arith.constant 0 : index
      %121 = vector.load %arg10[%c0_134, %c0_135, %c0_136] : memref<7x22x16xf32, #tpu.memory_space<vmem>>, vector<1x22x16xf32>
      %122 = vector.shape_cast %121 : vector<1x22x16xf32> to vector<22x16xf32>
      %123 = vector.shape_cast %120 : vector<22x16xf32> to vector<1x22x16xf32>
      tpu.vector_store %arg10[%c0_134, %c0_135, %c0_136], %123 {strides = array<i32>} : memref<7x22x16xf32, #tpu.memory_space<vmem>>, vector<1x22x16xf32>,
      %124 = vector.extract_strided_slice %114 {offsets = [0, 1], sizes = [22, 16], strides = [1, 1]} : vector<22x22xf32> to vector<22x16xf32>
      %c1 = arith.constant 1 : index
      %c0_137 = arith.constant 0 : index
      %c0_138 = arith.constant 0 : index
      %125 = vector.load %arg9[%c1, %c0_137, %c0_138] : memref<7x22x16xf32, #tpu.memory_space<vmem>>, vector<1x22x16xf32>
      %126 = vector.shape_cast %125 : vector<1x22x16xf32> to vector<22x16xf32>
      %127 = vector.shape_cast %124 : vector<22x16xf32> to vector<1x22x16xf32>
      tpu.vector_store %arg9[%c1, %c0_137, %c0_138], %127 {strides = array<i32>} : memref<7x22x16xf32, #tpu.memory_space<vmem>>, vector<1x22x16xf32>,
      %128 = vector.extract_strided_slice %115 {offsets = [0, 1], sizes = [22, 16], strides = [1, 1]} : vector<22x22xf32> to vector<22x16xf32>
      %c1_139 = arith.constant 1 : index
      %c0_140 = arith.constant 0 : index
      %c0_141 = arith.constant 0 : index
      %129 = vector.load %arg10[%c1_139, %c0_140, %c0_141] : memref<7x22x16xf32, #tpu.memory_space<vmem>>, vector<1x22x16xf32>
      %130 = vector.shape_cast %129 : vector<1x22x16xf32> to vector<22x16xf32>
      %131 = vector.shape_cast %128 : vector<22x16xf32> to vector<1x22x16xf32>
      tpu.vector_store %arg10[%c1_139, %c0_140, %c0_141], %131 {strides = array<i32>} : memref<7x22x16xf32, #tpu.memory_space<vmem>>, vector<1x22x16xf32>,
      %132 = vector.extract_strided_slice %114 {offsets = [0, 2], sizes = [22, 16], strides = [1, 1]} : vector<22x22xf32> to vector<22x16xf32>
      %c2 = arith.constant 2 : index
      %c0_142 = arith.constant 0 : index
      %c0_143 = arith.constant 0 : index
      %133 = vector.load %arg9[%c2, %c0_142, %c0_143] : memref<7x22x16xf32, #tpu.memory_space<vmem>>, vector<1x22x16xf32>
      %134 = vector.shape_cast %133 : vector<1x22x16xf32> to vector<22x16xf32>
      %135 = vector.shape_cast %132 : vector<22x16xf32> to vector<1x22x16xf32>
      tpu.vector_store %arg9[%c2, %c0_142, %c0_143], %135 {strides = array<i32>} : memref<7x22x16xf32, #tpu.memory_space<vmem>>, vector<1x22x16xf32>,
      %136 = vector.extract_strided_slice %115 {offsets = [0, 2], sizes = [22, 16], strides = [1, 1]} : vector<22x22xf32> to vector<22x16xf32>
      %c2_144 = arith.constant 2 : index
      %c0_145 = arith.constant 0 : index
      %c0_146 = arith.constant 0 : index
      %137 = vector.load %arg10[%c2_144, %c0_145, %c0_146] : memref<7x22x16xf32, #tpu.memory_space<vmem>>, vector<1x22x16xf32>
      %138 = vector.shape_cast %137 : vector<1x22x16xf32> to vector<22x16xf32>
      %139 = vector.shape_cast %136 : vector<22x16xf32> to vector<1x22x16xf32>
      tpu.vector_store %arg10[%c2_144, %c0_145, %c0_146], %139 {strides = array<i32>} : memref<7x22x16xf32, #tpu.memory_space<vmem>>, vector<1x22x16xf32>,
      %140 = vector.extract_strided_slice %114 {offsets = [0, 3], sizes = [22, 16], strides = [1, 1]} : vector<22x22xf32> to vector<22x16xf32>
      %c3_147 = arith.constant 3 : index
      %c0_148 = arith.constant 0 : index
      %c0_149 = arith.constant 0 : index
      %141 = vector.load %arg9[%c3_147, %c0_148, %c0_149] : memref<7x22x16xf32, #tpu.memory_space<vmem>>, vector<1x22x16xf32>
      %142 = vector.shape_cast %141 : vector<1x22x16xf32> to vector<22x16xf32>
      %143 = vector.shape_cast %140 : vector<22x16xf32> to vector<1x22x16xf32>
      tpu.vector_store %arg9[%c3_147, %c0_148, %c0_149], %143 {strides = array<i32>} : memref<7x22x16xf32, #tpu.memory_space<vmem>>, vector<1x22x16xf32>,
      %144 = vector.extract_strided_slice %115 {offsets = [0, 3], sizes = [22, 16], strides = [1, 1]} : vector<22x22xf32> to vector<22x16xf32>
      %c3_150 = arith.constant 3 : index
      %c0_151 = arith.constant 0 : index
      %c0_152 = arith.constant 0 : index
      %145 = vector.load %arg10[%c3_150, %c0_151, %c0_152] : memref<7x22x16xf32, #tpu.memory_space<vmem>>, vector<1x22x16xf32>
      %146 = vector.shape_cast %145 : vector<1x22x16xf32> to vector<22x16xf32>
      %147 = vector.shape_cast %144 : vector<22x16xf32> to vector<1x22x16xf32>
      tpu.vector_store %arg10[%c3_150, %c0_151, %c0_152], %147 {strides = array<i32>} : memref<7x22x16xf32, #tpu.memory_space<vmem>>, vector<1x22x16xf32>,
      %148 = vector.extract_strided_slice %114 {offsets = [0, 4], sizes = [22, 16], strides = [1, 1]} : vector<22x22xf32> to vector<22x16xf32>
      %c4_153 = arith.constant 4 : index
      %c0_154 = arith.constant 0 : index
      %c0_155 = arith.constant 0 : index
      %149 = vector.load %arg9[%c4_153, %c0_154, %c0_155] : memref<7x22x16xf32, #tpu.memory_space<vmem>>, vector<1x22x16xf32>
      %150 = vector.shape_cast %149 : vector<1x22x16xf32> to vector<22x16xf32>
      %151 = vector.shape_cast %148 : vector<22x16xf32> to vector<1x22x16xf32>
      tpu.vector_store %arg9[%c4_153, %c0_154, %c0_155], %151 {strides = array<i32>} : memref<7x22x16xf32, #tpu.memory_space<vmem>>, vector<1x22x16xf32>,
      %152 = vector.extract_strided_slice %115 {offsets = [0, 4], sizes = [22, 16], strides = [1, 1]} : vector<22x22xf32> to vector<22x16xf32>
      %c4_156 = arith.constant 4 : index
      %c0_157 = arith.constant 0 : index
      %c0_158 = arith.constant 0 : index
      %153 = vector.load %arg10[%c4_156, %c0_157, %c0_158] : memref<7x22x16xf32, #tpu.memory_space<vmem>>, vector<1x22x16xf32>
      %154 = vector.shape_cast %153 : vector<1x22x16xf32> to vector<22x16xf32>
      %155 = vector.shape_cast %152 : vector<22x16xf32> to vector<1x22x16xf32>
      tpu.vector_store %arg10[%c4_156, %c0_157, %c0_158], %155 {strides = array<i32>} : memref<7x22x16xf32, #tpu.memory_space<vmem>>, vector<1x22x16xf32>,
      %156 = vector.extract_strided_slice %114 {offsets = [0, 5], sizes = [22, 16], strides = [1, 1]} : vector<22x22xf32> to vector<22x16xf32>
      %c5_159 = arith.constant 5 : index
      %c0_160 = arith.constant 0 : index
      %c0_161 = arith.constant 0 : index
      %157 = vector.load %arg9[%c5_159, %c0_160, %c0_161] : memref<7x22x16xf32, #tpu.memory_space<vmem>>, vector<1x22x16xf32>
      %158 = vector.shape_cast %157 : vector<1x22x16xf32> to vector<22x16xf32>
      %159 = vector.shape_cast %156 : vector<22x16xf32> to vector<1x22x16xf32>
      tpu.vector_store %arg9[%c5_159, %c0_160, %c0_161], %159 {strides = array<i32>} : memref<7x22x16xf32, #tpu.memory_space<vmem>>, vector<1x22x16xf32>,
      %160 = vector.extract_strided_slice %115 {offsets = [0, 5], sizes = [22, 16], strides = [1, 1]} : vector<22x22xf32> to vector<22x16xf32>
      %c5_162 = arith.constant 5 : index
      %c0_163 = arith.constant 0 : index
      %c0_164 = arith.constant 0 : index
      %161 = vector.load %arg10[%c5_162, %c0_163, %c0_164] : memref<7x22x16xf32, #tpu.memory_space<vmem>>, vector<1x22x16xf32>
      %162 = vector.shape_cast %161 : vector<1x22x16xf32> to vector<22x16xf32>
      %163 = vector.shape_cast %160 : vector<22x16xf32> to vector<1x22x16xf32>
      tpu.vector_store %arg10[%c5_162, %c0_163, %c0_164], %163 {strides = array<i32>} : memref<7x22x16xf32, #tpu.memory_space<vmem>>, vector<1x22x16xf32>,
      %164 = vector.extract_strided_slice %114 {offsets = [0, 6], sizes = [22, 16], strides = [1, 1]} : vector<22x22xf32> to vector<22x16xf32>
      %c6_165 = arith.constant 6 : index
      %c0_166 = arith.constant 0 : index
      %c0_167 = arith.constant 0 : index
      %165 = vector.load %arg9[%c6_165, %c0_166, %c0_167] : memref<7x22x16xf32, #tpu.memory_space<vmem>>, vector<1x22x16xf32>
      %166 = vector.shape_cast %165 : vector<1x22x16xf32> to vector<22x16xf32>
      %167 = vector.shape_cast %164 : vector<22x16xf32> to vector<1x22x16xf32>
      tpu.vector_store %arg9[%c6_165, %c0_166, %c0_167], %167 {strides = array<i32>} : memref<7x22x16xf32, #tpu.memory_space<vmem>>, vector<1x22x16xf32>,
      %168 = vector.extract_strided_slice %115 {offsets = [0, 6], sizes = [22, 16], strides = [1, 1]} : vector<22x22xf32> to vector<22x16xf32>
      %c6_168 = arith.constant 6 : index
      %c0_169 = arith.constant 0 : index
      %c0_170 = arith.constant 0 : index
      %169 = vector.load %arg10[%c6_168, %c0_169, %c0_170] : memref<7x22x16xf32, #tpu.memory_space<vmem>>, vector<1x22x16xf32>
      %170 = vector.shape_cast %169 : vector<1x22x16xf32> to vector<22x16xf32>
      %171 = vector.shape_cast %168 : vector<22x16xf32> to vector<1x22x16xf32>
      tpu.vector_store %arg10[%c6_168, %c0_169, %c0_170], %171 {strides = array<i32>} : memref<7x22x16xf32, #tpu.memory_space<vmem>>, vector<1x22x16xf32>,
      %cst_171 = arith.constant 0.000000e+00 : f32
      %172 = vector.broadcast %cst_171 : f32 to vector<16x16xf32>
      %cst_172 = arith.constant 0.000000e+00 : f32
      %173 = vector.broadcast %cst_172 : f32 to vector<16x16xf32>
      %cst_173 = arith.constant 0.000000e+00 : f32
      %174 = vector.broadcast %cst_173 : f32 to vector<16x16xf32>
      %cst_174 = arith.constant 0.000000e+00 : f32
      %175 = vector.broadcast %cst_174 : f32 to vector<16x16xf32>
      %c0_175 = arith.constant 0 : index
      %c0_176 = arith.constant 0 : index
      %176 = memref.load %arg2[%c0_175, %c0_176] : memref<2x49xf32, #tpu.memory_space<smem>>
      %c0_177 = arith.constant 0 : index
      %c0_178 = arith.constant 0 : index
      %c0_179 = arith.constant 0 : index
      %177 = vector.load %arg9[%c0_177, %c0_178, %c0_179] : memref<7x22x16xf32, #tpu.memory_space<vmem>>, vector<1x16x16xf32>
      %178 = vector.shape_cast %177 : vector<1x16x16xf32> to vector<16x16xf32>
      %179 = vector.broadcast %176 : f32 to vector<16x16xf32>
      %180 = arith.mulf %179, %178 : vector<16x16xf32>
      %c1_180 = arith.constant 1 : index
      %c0_181 = arith.constant 0 : index
      %181 = memref.load %arg2[%c1_180, %c0_181] : memref<2x49xf32, #tpu.memory_space<smem>>
      %c0_182 = arith.constant 0 : index
      %c0_183 = arith.constant 0 : index
      %c0_184 = arith.constant 0 : index
      %182 = vector.load %arg10[%c0_182, %c0_183, %c0_184] : memref<7x22x16xf32, #tpu.memory_space<vmem>>, vector<1x16x16xf32>
      %183 = vector.shape_cast %182 : vector<1x16x16xf32> to vector<16x16xf32>
      %184 = vector.broadcast %181 : f32 to vector<16x16xf32>
      %185 = arith.mulf %184, %183 : vector<16x16xf32>
      %186 = arith.addf %172, %180 : vector<16x16xf32>
      %187 = arith.addf %174, %185 : vector<16x16xf32>
      %c0_185 = arith.constant 0 : index
      %c1_186 = arith.constant 1 : index
      %188 = memref.load %arg2[%c0_185, %c1_186] : memref<2x49xf32, #tpu.memory_space<smem>>
      %c1_187 = arith.constant 1 : index
      %c0_188 = arith.constant 0 : index
      %c0_189 = arith.constant 0 : index
      %189 = vector.load %arg9[%c1_187, %c0_188, %c0_189] : memref<7x22x16xf32, #tpu.memory_space<vmem>>, vector<1x16x16xf32>
      %190 = vector.shape_cast %189 : vector<1x16x16xf32> to vector<16x16xf32>
      %191 = vector.broadcast %188 : f32 to vector<16x16xf32>
      %192 = arith.mulf %191, %190 : vector<16x16xf32>
      %c1_190 = arith.constant 1 : index
      %c1_191 = arith.constant 1 : index
      %193 = memref.load %arg2[%c1_190, %c1_191] : memref<2x49xf32, #tpu.memory_space<smem>>
      %c1_192 = arith.constant 1 : index
      %c0_193 = arith.constant 0 : index
      %c0_194 = arith.constant 0 : index
      %194 = vector.load %arg10[%c1_192, %c0_193, %c0_194] : memref<7x22x16xf32, #tpu.memory_space<vmem>>, vector<1x16x16xf32>
      %195 = vector.shape_cast %194 : vector<1x16x16xf32> to vector<16x16xf32>
      %196 = vector.broadcast %193 : f32 to vector<16x16xf32>
      %197 = arith.mulf %196, %195 : vector<16x16xf32>
      %198 = arith.addf %186, %192 : vector<16x16xf32>
      %199 = arith.addf %187, %197 : vector<16x16xf32>
      %c0_195 = arith.constant 0 : index
      %c2_196 = arith.constant 2 : index
      %200 = memref.load %arg2[%c0_195, %c2_196] : memref<2x49xf32, #tpu.memory_space<smem>>
      %c2_197 = arith.constant 2 : index
      %c0_198 = arith.constant 0 : index
      %c0_199 = arith.constant 0 : index
      %201 = vector.load %arg9[%c2_197, %c0_198, %c0_199] : memref<7x22x16xf32, #tpu.memory_space<vmem>>, vector<1x16x16xf32>
      %202 = vector.shape_cast %201 : vector<1x16x16xf32> to vector<16x16xf32>
      %203 = vector.broadcast %200 : f32 to vector<16x16xf32>
      %204 = arith.mulf %203, %202 : vector<16x16xf32>
      %c1_200 = arith.constant 1 : index
      %c2_201 = arith.constant 2 : index
      %205 = memref.load %arg2[%c1_200, %c2_201] : memref<2x49xf32, #tpu.memory_space<smem>>
      %c2_202 = arith.constant 2 : index
      %c0_203 = arith.constant 0 : index
      %c0_204 = arith.constant 0 : index
      %206 = vector.load %arg10[%c2_202, %c0_203, %c0_204] : memref<7x22x16xf32, #tpu.memory_space<vmem>>, vector<1x16x16xf32>
      %207 = vector.shape_cast %206 : vector<1x16x16xf32> to vector<16x16xf32>
      %208 = vector.broadcast %205 : f32 to vector<16x16xf32>
      %209 = arith.mulf %208, %207 : vector<16x16xf32>
      %210 = arith.addf %198, %204 : vector<16x16xf32>
      %211 = arith.addf %199, %209 : vector<16x16xf32>
      %c0_205 = arith.constant 0 : index
      %c3_206 = arith.constant 3 : index
      %212 = memref.load %arg2[%c0_205, %c3_206] : memref<2x49xf32, #tpu.memory_space<smem>>
      %c3_207 = arith.constant 3 : index
      %c0_208 = arith.constant 0 : index
      %c0_209 = arith.constant 0 : index
      %213 = vector.load %arg9[%c3_207, %c0_208, %c0_209] : memref<7x22x16xf32, #tpu.memory_space<vmem>>, vector<1x16x16xf32>
      %214 = vector.shape_cast %213 : vector<1x16x16xf32> to vector<16x16xf32>
      %215 = vector.broadcast %212 : f32 to vector<16x16xf32>
      %216 = arith.mulf %215, %214 : vector<16x16xf32>
      %c1_210 = arith.constant 1 : index
      %c3_211 = arith.constant 3 : index
      %217 = memref.load %arg2[%c1_210, %c3_211] : memref<2x49xf32, #tpu.memory_space<smem>>
      %c3_212 = arith.constant 3 : index
      %c0_213 = arith.constant 0 : index
      %c0_214 = arith.constant 0 : index
      %218 = vector.load %arg10[%c3_212, %c0_213, %c0_214] : memref<7x22x16xf32, #tpu.memory_space<vmem>>, vector<1x16x16xf32>
      %219 = vector.shape_cast %218 : vector<1x16x16xf32> to vector<16x16xf32>
      %220 = vector.broadcast %217 : f32 to vector<16x16xf32>
      %221 = arith.mulf %220, %219 : vector<16x16xf32>
      %222 = arith.addf %210, %216 : vector<16x16xf32>
      %223 = arith.addf %211, %221 : vector<16x16xf32>
      %c0_215 = arith.constant 0 : index
      %c4_216 = arith.constant 4 : index
      %224 = memref.load %arg2[%c0_215, %c4_216] : memref<2x49xf32, #tpu.memory_space<smem>>
      %c4_217 = arith.constant 4 : index
      %c0_218 = arith.constant 0 : index
      %c0_219 = arith.constant 0 : index
      %225 = vector.load %arg9[%c4_217, %c0_218, %c0_219] : memref<7x22x16xf32, #tpu.memory_space<vmem>>, vector<1x16x16xf32>
      %226 = vector.shape_cast %225 : vector<1x16x16xf32> to vector<16x16xf32>
      %227 = vector.broadcast %224 : f32 to vector<16x16xf32>
      %228 = arith.mulf %227, %226 : vector<16x16xf32>
      %c1_220 = arith.constant 1 : index
      %c4_221 = arith.constant 4 : index
      %229 = memref.load %arg2[%c1_220, %c4_221] : memref<2x49xf32, #tpu.memory_space<smem>>
      %c4_222 = arith.constant 4 : index
      %c0_223 = arith.constant 0 : index
      %c0_224 = arith.constant 0 : index
      %230 = vector.load %arg10[%c4_222, %c0_223, %c0_224] : memref<7x22x16xf32, #tpu.memory_space<vmem>>, vector<1x16x16xf32>
      %231 = vector.shape_cast %230 : vector<1x16x16xf32> to vector<16x16xf32>
      %232 = vector.broadcast %229 : f32 to vector<16x16xf32>
      %233 = arith.mulf %232, %231 : vector<16x16xf32>
      %234 = arith.addf %222, %228 : vector<16x16xf32>
      %235 = arith.addf %223, %233 : vector<16x16xf32>
      %c0_225 = arith.constant 0 : index
      %c5_226 = arith.constant 5 : index
      %236 = memref.load %arg2[%c0_225, %c5_226] : memref<2x49xf32, #tpu.memory_space<smem>>
      %c5_227 = arith.constant 5 : index
      %c0_228 = arith.constant 0 : index
      %c0_229 = arith.constant 0 : index
      %237 = vector.load %arg9[%c5_227, %c0_228, %c0_229] : memref<7x22x16xf32, #tpu.memory_space<vmem>>, vector<1x16x16xf32>
      %238 = vector.shape_cast %237 : vector<1x16x16xf32> to vector<16x16xf32>
      %239 = vector.broadcast %236 : f32 to vector<16x16xf32>
      %240 = arith.mulf %239, %238 : vector<16x16xf32>
      %c1_230 = arith.constant 1 : index
      %c5_231 = arith.constant 5 : index
      %241 = memref.load %arg2[%c1_230, %c5_231] : memref<2x49xf32, #tpu.memory_space<smem>>
      %c5_232 = arith.constant 5 : index
      %c0_233 = arith.constant 0 : index
      %c0_234 = arith.constant 0 : index
      %242 = vector.load %arg10[%c5_232, %c0_233, %c0_234] : memref<7x22x16xf32, #tpu.memory_space<vmem>>, vector<1x16x16xf32>
      %243 = vector.shape_cast %242 : vector<1x16x16xf32> to vector<16x16xf32>
      %244 = vector.broadcast %241 : f32 to vector<16x16xf32>
      %245 = arith.mulf %244, %243 : vector<16x16xf32>
      %246 = arith.addf %234, %240 : vector<16x16xf32>
      %247 = arith.addf %235, %245 : vector<16x16xf32>
      %c0_235 = arith.constant 0 : index
      %c6_236 = arith.constant 6 : index
      %248 = memref.load %arg2[%c0_235, %c6_236] : memref<2x49xf32, #tpu.memory_space<smem>>
      %c6_237 = arith.constant 6 : index
      %c0_238 = arith.constant 0 : index
      %c0_239 = arith.constant 0 : index
      %249 = vector.load %arg9[%c6_237, %c0_238, %c0_239] : memref<7x22x16xf32, #tpu.memory_space<vmem>>, vector<1x16x16xf32>
      %250 = vector.shape_cast %249 : vector<1x16x16xf32> to vector<16x16xf32>
      %251 = vector.broadcast %248 : f32 to vector<16x16xf32>
      %252 = arith.mulf %251, %250 : vector<16x16xf32>
      %c1_240 = arith.constant 1 : index
      %c6_241 = arith.constant 6 : index
      %253 = memref.load %arg2[%c1_240, %c6_241] : memref<2x49xf32, #tpu.memory_space<smem>>
      %c6_242 = arith.constant 6 : index
      %c0_243 = arith.constant 0 : index
      %c0_244 = arith.constant 0 : index
      %254 = vector.load %arg10[%c6_242, %c0_243, %c0_244] : memref<7x22x16xf32, #tpu.memory_space<vmem>>, vector<1x16x16xf32>
      %255 = vector.shape_cast %254 : vector<1x16x16xf32> to vector<16x16xf32>
      %256 = vector.broadcast %253 : f32 to vector<16x16xf32>
      %257 = arith.mulf %256, %255 : vector<16x16xf32>
      %258 = arith.addf %246, %252 : vector<16x16xf32>
      %259 = arith.addf %247, %257 : vector<16x16xf32>
      %c0_245 = arith.constant 0 : index
      %c7_246 = arith.constant 7 : index
      %260 = memref.load %arg2[%c0_245, %c7_246] : memref<2x49xf32, #tpu.memory_space<smem>>
      %c0_247 = arith.constant 0 : index
      %c1_248 = arith.constant 1 : index
      %c0_249 = arith.constant 0 : index
      %261 = vector.load %arg9[%c0_247, %c1_248, %c0_249] : memref<7x22x16xf32, #tpu.memory_space<vmem>>, vector<1x16x16xf32>
      %262 = vector.shape_cast %261 : vector<1x16x16xf32> to vector<16x16xf32>
      %263 = vector.broadcast %260 : f32 to vector<16x16xf32>
      %264 = arith.mulf %263, %262 : vector<16x16xf32>
      %c1_250 = arith.constant 1 : index
      %c7_251 = arith.constant 7 : index
      %265 = memref.load %arg2[%c1_250, %c7_251] : memref<2x49xf32, #tpu.memory_space<smem>>
      %c0_252 = arith.constant 0 : index
      %c1_253 = arith.constant 1 : index
      %c0_254 = arith.constant 0 : index
      %266 = vector.load %arg10[%c0_252, %c1_253, %c0_254] : memref<7x22x16xf32, #tpu.memory_space<vmem>>, vector<1x16x16xf32>
      %267 = vector.shape_cast %266 : vector<1x16x16xf32> to vector<16x16xf32>
      %268 = vector.broadcast %265 : f32 to vector<16x16xf32>
      %269 = arith.mulf %268, %267 : vector<16x16xf32>
      %270 = arith.addf %173, %264 : vector<16x16xf32>
      %271 = arith.addf %175, %269 : vector<16x16xf32>
      %c0_255 = arith.constant 0 : index
      %c8_256 = arith.constant 8 : index
      %272 = memref.load %arg2[%c0_255, %c8_256] : memref<2x49xf32, #tpu.memory_space<smem>>
      %c1_257 = arith.constant 1 : index
      %c1_258 = arith.constant 1 : index
      %c0_259 = arith.constant 0 : index
      %273 = vector.load %arg9[%c1_257, %c1_258, %c0_259] : memref<7x22x16xf32, #tpu.memory_space<vmem>>, vector<1x16x16xf32>
      %274 = vector.shape_cast %273 : vector<1x16x16xf32> to vector<16x16xf32>
      %275 = vector.broadcast %272 : f32 to vector<16x16xf32>
      %276 = arith.mulf %275, %274 : vector<16x16xf32>
      %c1_260 = arith.constant 1 : index
      %c8_261 = arith.constant 8 : index
      %277 = memref.load %arg2[%c1_260, %c8_261] : memref<2x49xf32, #tpu.memory_space<smem>>
      %c1_262 = arith.constant 1 : index
      %c1_263 = arith.constant 1 : index
      %c0_264 = arith.constant 0 : index
      %278 = vector.load %arg10[%c1_262, %c1_263, %c0_264] : memref<7x22x16xf32, #tpu.memory_space<vmem>>, vector<1x16x16xf32>
      %279 = vector.shape_cast %278 : vector<1x16x16xf32> to vector<16x16xf32>
      %280 = vector.broadcast %277 : f32 to vector<16x16xf32>
      %281 = arith.mulf %280, %279 : vector<16x16xf32>
      %282 = arith.addf %270, %276 : vector<16x16xf32>
      %283 = arith.addf %271, %281 : vector<16x16xf32>
      %c0_265 = arith.constant 0 : index
      %c9_266 = arith.constant 9 : index
      %284 = memref.load %arg2[%c0_265, %c9_266] : memref<2x49xf32, #tpu.memory_space<smem>>
      %c2_267 = arith.constant 2 : index
      %c1_268 = arith.constant 1 : index
      %c0_269 = arith.constant 0 : index
      %285 = vector.load %arg9[%c2_267, %c1_268, %c0_269] : memref<7x22x16xf32, #tpu.memory_space<vmem>>, vector<1x16x16xf32>
      %286 = vector.shape_cast %285 : vector<1x16x16xf32> to vector<16x16xf32>
      %287 = vector.broadcast %284 : f32 to vector<16x16xf32>
      %288 = arith.mulf %287, %286 : vector<16x16xf32>
      %c1_270 = arith.constant 1 : index
      %c9_271 = arith.constant 9 : index
      %289 = memref.load %arg2[%c1_270, %c9_271] : memref<2x49xf32, #tpu.memory_space<smem>>
      %c2_272 = arith.constant 2 : index
      %c1_273 = arith.constant 1 : index
      %c0_274 = arith.constant 0 : index
      %290 = vector.load %arg10[%c2_272, %c1_273, %c0_274] : memref<7x22x16xf32, #tpu.memory_space<vmem>>, vector<1x16x16xf32>
      %291 = vector.shape_cast %290 : vector<1x16x16xf32> to vector<16x16xf32>
      %292 = vector.broadcast %289 : f32 to vector<16x16xf32>
      %293 = arith.mulf %292, %291 : vector<16x16xf32>
      %294 = arith.addf %282, %288 : vector<16x16xf32>
      %295 = arith.addf %283, %293 : vector<16x16xf32>
      %c0_275 = arith.constant 0 : index
      %c10_276 = arith.constant 10 : index
      %296 = memref.load %arg2[%c0_275, %c10_276] : memref<2x49xf32, #tpu.memory_space<smem>>
      %c3_277 = arith.constant 3 : index
      %c1_278 = arith.constant 1 : index
      %c0_279 = arith.constant 0 : index
      %297 = vector.load %arg9[%c3_277, %c1_278, %c0_279] : memref<7x22x16xf32, #tpu.memory_space<vmem>>, vector<1x16x16xf32>
      %298 = vector.shape_cast %297 : vector<1x16x16xf32> to vector<16x16xf32>
      %299 = vector.broadcast %296 : f32 to vector<16x16xf32>
      %300 = arith.mulf %299, %298 : vector<16x16xf32>
      %c1_280 = arith.constant 1 : index
      %c10_281 = arith.constant 10 : index
      %301 = memref.load %arg2[%c1_280, %c10_281] : memref<2x49xf32, #tpu.memory_space<smem>>
      %c3_282 = arith.constant 3 : index
      %c1_283 = arith.constant 1 : index
      %c0_284 = arith.constant 0 : index
      %302 = vector.load %arg10[%c3_282, %c1_283, %c0_284] : memref<7x22x16xf32, #tpu.memory_space<vmem>>, vector<1x16x16xf32>
      %303 = vector.shape_cast %302 : vector<1x16x16xf32> to vector<16x16xf32>
      %304 = vector.broadcast %301 : f32 to vector<16x16xf32>
      %305 = arith.mulf %304, %303 : vector<16x16xf32>
      %306 = arith.addf %294, %300 : vector<16x16xf32>
      %307 = arith.addf %295, %305 : vector<16x16xf32>
      %c0_285 = arith.constant 0 : index
      %c11_286 = arith.constant 11 : index
      %308 = memref.load %arg2[%c0_285, %c11_286] : memref<2x49xf32, #tpu.memory_space<smem>>
      %c4_287 = arith.constant 4 : index
      %c1_288 = arith.constant 1 : index
      %c0_289 = arith.constant 0 : index
      %309 = vector.load %arg9[%c4_287, %c1_288, %c0_289] : memref<7x22x16xf32, #tpu.memory_space<vmem>>, vector<1x16x16xf32>
      %310 = vector.shape_cast %309 : vector<1x16x16xf32> to vector<16x16xf32>
      %311 = vector.broadcast %308 : f32 to vector<16x16xf32>
      %312 = arith.mulf %311, %310 : vector<16x16xf32>
      %c1_290 = arith.constant 1 : index
      %c11_291 = arith.constant 11 : index
      %313 = memref.load %arg2[%c1_290, %c11_291] : memref<2x49xf32, #tpu.memory_space<smem>>
      %c4_292 = arith.constant 4 : index
      %c1_293 = arith.constant 1 : index
      %c0_294 = arith.constant 0 : index
      %314 = vector.load %arg10[%c4_292, %c1_293, %c0_294] : memref<7x22x16xf32, #tpu.memory_space<vmem>>, vector<1x16x16xf32>
      %315 = vector.shape_cast %314 : vector<1x16x16xf32> to vector<16x16xf32>
      %316 = vector.broadcast %313 : f32 to vector<16x16xf32>
      %317 = arith.mulf %316, %315 : vector<16x16xf32>
      %318 = arith.addf %306, %312 : vector<16x16xf32>
      %319 = arith.addf %307, %317 : vector<16x16xf32>
      %c0_295 = arith.constant 0 : index
      %c12_296 = arith.constant 12 : index
      %320 = memref.load %arg2[%c0_295, %c12_296] : memref<2x49xf32, #tpu.memory_space<smem>>
      %c5_297 = arith.constant 5 : index
      %c1_298 = arith.constant 1 : index
      %c0_299 = arith.constant 0 : index
      %321 = vector.load %arg9[%c5_297, %c1_298, %c0_299] : memref<7x22x16xf32, #tpu.memory_space<vmem>>, vector<1x16x16xf32>
      %322 = vector.shape_cast %321 : vector<1x16x16xf32> to vector<16x16xf32>
      %323 = vector.broadcast %320 : f32 to vector<16x16xf32>
      %324 = arith.mulf %323, %322 : vector<16x16xf32>
      %c1_300 = arith.constant 1 : index
      %c12_301 = arith.constant 12 : index
      %325 = memref.load %arg2[%c1_300, %c12_301] : memref<2x49xf32, #tpu.memory_space<smem>>
      %c5_302 = arith.constant 5 : index
      %c1_303 = arith.constant 1 : index
      %c0_304 = arith.constant 0 : index
      %326 = vector.load %arg10[%c5_302, %c1_303, %c0_304] : memref<7x22x16xf32, #tpu.memory_space<vmem>>, vector<1x16x16xf32>
      %327 = vector.shape_cast %326 : vector<1x16x16xf32> to vector<16x16xf32>
      %328 = vector.broadcast %325 : f32 to vector<16x16xf32>
      %329 = arith.mulf %328, %327 : vector<16x16xf32>
      %330 = arith.addf %318, %324 : vector<16x16xf32>
      %331 = arith.addf %319, %329 : vector<16x16xf32>
      %c0_305 = arith.constant 0 : index
      %c13_306 = arith.constant 13 : index
      %332 = memref.load %arg2[%c0_305, %c13_306] : memref<2x49xf32, #tpu.memory_space<smem>>
      %c6_307 = arith.constant 6 : index
      %c1_308 = arith.constant 1 : index
      %c0_309 = arith.constant 0 : index
      %333 = vector.load %arg9[%c6_307, %c1_308, %c0_309] : memref<7x22x16xf32, #tpu.memory_space<vmem>>, vector<1x16x16xf32>
      %334 = vector.shape_cast %333 : vector<1x16x16xf32> to vector<16x16xf32>
      %335 = vector.broadcast %332 : f32 to vector<16x16xf32>
      %336 = arith.mulf %335, %334 : vector<16x16xf32>
      %c1_310 = arith.constant 1 : index
      %c13_311 = arith.constant 13 : index
      %337 = memref.load %arg2[%c1_310, %c13_311] : memref<2x49xf32, #tpu.memory_space<smem>>
      %c6_312 = arith.constant 6 : index
      %c1_313 = arith.constant 1 : index
      %c0_314 = arith.constant 0 : index
      %338 = vector.load %arg10[%c6_312, %c1_313, %c0_314] : memref<7x22x16xf32, #tpu.memory_space<vmem>>, vector<1x16x16xf32>
      %339 = vector.shape_cast %338 : vector<1x16x16xf32> to vector<16x16xf32>
      %340 = vector.broadcast %337 : f32 to vector<16x16xf32>
      %341 = arith.mulf %340, %339 : vector<16x16xf32>
      %342 = arith.addf %330, %336 : vector<16x16xf32>
      %343 = arith.addf %331, %341 : vector<16x16xf32>
      %c0_315 = arith.constant 0 : index
      %c14_316 = arith.constant 14 : index
      %344 = memref.load %arg2[%c0_315, %c14_316] : memref<2x49xf32, #tpu.memory_space<smem>>
      %c0_317 = arith.constant 0 : index
      %c2_318 = arith.constant 2 : index
      %c0_319 = arith.constant 0 : index
      %345 = vector.load %arg9[%c0_317, %c2_318, %c0_319] : memref<7x22x16xf32, #tpu.memory_space<vmem>>, vector<1x16x16xf32>
      %346 = vector.shape_cast %345 : vector<1x16x16xf32> to vector<16x16xf32>
      %347 = vector.broadcast %344 : f32 to vector<16x16xf32>
      %348 = arith.mulf %347, %346 : vector<16x16xf32>
      %c1_320 = arith.constant 1 : index
      %c14_321 = arith.constant 14 : index
      %349 = memref.load %arg2[%c1_320, %c14_321] : memref<2x49xf32, #tpu.memory_space<smem>>
      %c0_322 = arith.constant 0 : index
      %c2_323 = arith.constant 2 : index
      %c0_324 = arith.constant 0 : index
      %350 = vector.load %arg10[%c0_322, %c2_323, %c0_324] : memref<7x22x16xf32, #tpu.memory_space<vmem>>, vector<1x16x16xf32>
      %351 = vector.shape_cast %350 : vector<1x16x16xf32> to vector<16x16xf32>
      %352 = vector.broadcast %349 : f32 to vector<16x16xf32>
      %353 = arith.mulf %352, %351 : vector<16x16xf32>
      %354 = arith.addf %258, %348 : vector<16x16xf32>
      %355 = arith.addf %259, %353 : vector<16x16xf32>
      %c0_325 = arith.constant 0 : index
      %c15_326 = arith.constant 15 : index
      %356 = memref.load %arg2[%c0_325, %c15_326] : memref<2x49xf32, #tpu.memory_space<smem>>
      %c1_327 = arith.constant 1 : index
      %c2_328 = arith.constant 2 : index
      %c0_329 = arith.constant 0 : index
      %357 = vector.load %arg9[%c1_327, %c2_328, %c0_329] : memref<7x22x16xf32, #tpu.memory_space<vmem>>, vector<1x16x16xf32>
      %358 = vector.shape_cast %357 : vector<1x16x16xf32> to vector<16x16xf32>
      %359 = vector.broadcast %356 : f32 to vector<16x16xf32>
      %360 = arith.mulf %359, %358 : vector<16x16xf32>
      %c1_330 = arith.constant 1 : index
      %c15_331 = arith.constant 15 : index
      %361 = memref.load %arg2[%c1_330, %c15_331] : memref<2x49xf32, #tpu.memory_space<smem>>
      %c1_332 = arith.constant 1 : index
      %c2_333 = arith.constant 2 : index
      %c0_334 = arith.constant 0 : index
      %362 = vector.load %arg10[%c1_332, %c2_333, %c0_334] : memref<7x22x16xf32, #tpu.memory_space<vmem>>, vector<1x16x16xf32>
      %363 = vector.shape_cast %362 : vector<1x16x16xf32> to vector<16x16xf32>
      %364 = vector.broadcast %361 : f32 to vector<16x16xf32>
      %365 = arith.mulf %364, %363 : vector<16x16xf32>
      %366 = arith.addf %354, %360 : vector<16x16xf32>
      %367 = arith.addf %355, %365 : vector<16x16xf32>
      %c0_335 = arith.constant 0 : index
      %c16_336 = arith.constant 16 : index
      %368 = memref.load %arg2[%c0_335, %c16_336] : memref<2x49xf32, #tpu.memory_space<smem>>
      %c2_337 = arith.constant 2 : index
      %c2_338 = arith.constant 2 : index
      %c0_339 = arith.constant 0 : index
      %369 = vector.load %arg9[%c2_337, %c2_338, %c0_339] : memref<7x22x16xf32, #tpu.memory_space<vmem>>, vector<1x16x16xf32>
      %370 = vector.shape_cast %369 : vector<1x16x16xf32> to vector<16x16xf32>
      %371 = vector.broadcast %368 : f32 to vector<16x16xf32>
      %372 = arith.mulf %371, %370 : vector<16x16xf32>
      %c1_340 = arith.constant 1 : index
      %c16_341 = arith.constant 16 : index
      %373 = memref.load %arg2[%c1_340, %c16_341] : memref<2x49xf32, #tpu.memory_space<smem>>
      %c2_342 = arith.constant 2 : index
      %c2_343 = arith.constant 2 : index
      %c0_344 = arith.constant 0 : index
      %374 = vector.load %arg10[%c2_342, %c2_343, %c0_344] : memref<7x22x16xf32, #tpu.memory_space<vmem>>, vector<1x16x16xf32>
      %375 = vector.shape_cast %374 : vector<1x16x16xf32> to vector<16x16xf32>
      %376 = vector.broadcast %373 : f32 to vector<16x16xf32>
      %377 = arith.mulf %376, %375 : vector<16x16xf32>
      %378 = arith.addf %366, %372 : vector<16x16xf32>
      %379 = arith.addf %367, %377 : vector<16x16xf32>
      %c0_345 = arith.constant 0 : index
      %c17_346 = arith.constant 17 : index
      %380 = memref.load %arg2[%c0_345, %c17_346] : memref<2x49xf32, #tpu.memory_space<smem>>
      %c3_347 = arith.constant 3 : index
      %c2_348 = arith.constant 2 : index
      %c0_349 = arith.constant 0 : index
      %381 = vector.load %arg9[%c3_347, %c2_348, %c0_349] : memref<7x22x16xf32, #tpu.memory_space<vmem>>, vector<1x16x16xf32>
      %382 = vector.shape_cast %381 : vector<1x16x16xf32> to vector<16x16xf32>
      %383 = vector.broadcast %380 : f32 to vector<16x16xf32>
      %384 = arith.mulf %383, %382 : vector<16x16xf32>
      %c1_350 = arith.constant 1 : index
      %c17_351 = arith.constant 17 : index
      %385 = memref.load %arg2[%c1_350, %c17_351] : memref<2x49xf32, #tpu.memory_space<smem>>
      %c3_352 = arith.constant 3 : index
      %c2_353 = arith.constant 2 : index
      %c0_354 = arith.constant 0 : index
      %386 = vector.load %arg10[%c3_352, %c2_353, %c0_354] : memref<7x22x16xf32, #tpu.memory_space<vmem>>, vector<1x16x16xf32>
      %387 = vector.shape_cast %386 : vector<1x16x16xf32> to vector<16x16xf32>
      %388 = vector.broadcast %385 : f32 to vector<16x16xf32>
      %389 = arith.mulf %388, %387 : vector<16x16xf32>
      %390 = arith.addf %378, %384 : vector<16x16xf32>
      %391 = arith.addf %379, %389 : vector<16x16xf32>
      %c0_355 = arith.constant 0 : index
      %c18_356 = arith.constant 18 : index
      %392 = memref.load %arg2[%c0_355, %c18_356] : memref<2x49xf32, #tpu.memory_space<smem>>
      %c4_357 = arith.constant 4 : index
      %c2_358 = arith.constant 2 : index
      %c0_359 = arith.constant 0 : index
      %393 = vector.load %arg9[%c4_357, %c2_358, %c0_359] : memref<7x22x16xf32, #tpu.memory_space<vmem>>, vector<1x16x16xf32>
      %394 = vector.shape_cast %393 : vector<1x16x16xf32> to vector<16x16xf32>
      %395 = vector.broadcast %392 : f32 to vector<16x16xf32>
      %396 = arith.mulf %395, %394 : vector<16x16xf32>
      %c1_360 = arith.constant 1 : index
      %c18_361 = arith.constant 18 : index
      %397 = memref.load %arg2[%c1_360, %c18_361] : memref<2x49xf32, #tpu.memory_space<smem>>
      %c4_362 = arith.constant 4 : index
      %c2_363 = arith.constant 2 : index
      %c0_364 = arith.constant 0 : index
      %398 = vector.load %arg10[%c4_362, %c2_363, %c0_364] : memref<7x22x16xf32, #tpu.memory_space<vmem>>, vector<1x16x16xf32>
      %399 = vector.shape_cast %398 : vector<1x16x16xf32> to vector<16x16xf32>
      %400 = vector.broadcast %397 : f32 to vector<16x16xf32>
      %401 = arith.mulf %400, %399 : vector<16x16xf32>
      %402 = arith.addf %390, %396 : vector<16x16xf32>
      %403 = arith.addf %391, %401 : vector<16x16xf32>
      %c0_365 = arith.constant 0 : index
      %c19 = arith.constant 19 : index
      %404 = memref.load %arg2[%c0_365, %c19] : memref<2x49xf32, #tpu.memory_space<smem>>
      %c5_366 = arith.constant 5 : index
      %c2_367 = arith.constant 2 : index
      %c0_368 = arith.constant 0 : index
      %405 = vector.load %arg9[%c5_366, %c2_367, %c0_368] : memref<7x22x16xf32, #tpu.memory_space<vmem>>, vector<1x16x16xf32>
      %406 = vector.shape_cast %405 : vector<1x16x16xf32> to vector<16x16xf32>
      %407 = vector.broadcast %404 : f32 to vector<16x16xf32>
      %408 = arith.mulf %407, %406 : vector<16x16xf32>
      %c1_369 = arith.constant 1 : index
      %c19_370 = arith.constant 19 : index
      %409 = memref.load %arg2[%c1_369, %c19_370] : memref<2x49xf32, #tpu.memory_space<smem>>
      %c5_371 = arith.constant 5 : index
      %c2_372 = arith.constant 2 : index
      %c0_373 = arith.constant 0 : index
      %410 = vector.load %arg10[%c5_371, %c2_372, %c0_373] : memref<7x22x16xf32, #tpu.memory_space<vmem>>, vector<1x16x16xf32>
      %411 = vector.shape_cast %410 : vector<1x16x16xf32> to vector<16x16xf32>
      %412 = vector.broadcast %409 : f32 to vector<16x16xf32>
      %413 = arith.mulf %412, %411 : vector<16x16xf32>
      %414 = arith.addf %402, %408 : vector<16x16xf32>
      %415 = arith.addf %403, %413 : vector<16x16xf32>
      %c0_374 = arith.constant 0 : index
      %c20 = arith.constant 20 : index
      %416 = memref.load %arg2[%c0_374, %c20] : memref<2x49xf32, #tpu.memory_space<smem>>
      %c6_375 = arith.constant 6 : index
      %c2_376 = arith.constant 2 : index
      %c0_377 = arith.constant 0 : index
      %417 = vector.load %arg9[%c6_375, %c2_376, %c0_377] : memref<7x22x16xf32, #tpu.memory_space<vmem>>, vector<1x16x16xf32>
      %418 = vector.shape_cast %417 : vector<1x16x16xf32> to vector<16x16xf32>
      %419 = vector.broadcast %416 : f32 to vector<16x16xf32>
      %420 = arith.mulf %419, %418 : vector<16x16xf32>
      %c1_378 = arith.constant 1 : index
      %c20_379 = arith.constant 20 : index
      %421 = memref.load %arg2[%c1_378, %c20_379] : memref<2x49xf32, #tpu.memory_space<smem>>
      %c6_380 = arith.constant 6 : index
      %c2_381 = arith.constant 2 : index
      %c0_382 = arith.constant 0 : index
      %422 = vector.load %arg10[%c6_380, %c2_381, %c0_382] : memref<7x22x16xf32, #tpu.memory_space<vmem>>, vector<1x16x16xf32>
      %423 = vector.shape_cast %422 : vector<1x16x16xf32> to vector<16x16xf32>
      %424 = vector.broadcast %421 : f32 to vector<16x16xf32>
      %425 = arith.mulf %424, %423 : vector<16x16xf32>
      %426 = arith.addf %414, %420 : vector<16x16xf32>
      %427 = arith.addf %415, %425 : vector<16x16xf32>
      %c0_383 = arith.constant 0 : index
      %c21 = arith.constant 21 : index
      %428 = memref.load %arg2[%c0_383, %c21] : memref<2x49xf32, #tpu.memory_space<smem>>
      %c0_384 = arith.constant 0 : index
      %c3_385 = arith.constant 3 : index
      %c0_386 = arith.constant 0 : index
      %429 = vector.load %arg9[%c0_384, %c3_385, %c0_386] : memref<7x22x16xf32, #tpu.memory_space<vmem>>, vector<1x16x16xf32>
      %430 = vector.shape_cast %429 : vector<1x16x16xf32> to vector<16x16xf32>
      %431 = vector.broadcast %428 : f32 to vector<16x16xf32>
      %432 = arith.mulf %431, %430 : vector<16x16xf32>
      %c1_387 = arith.constant 1 : index
      %c21_388 = arith.constant 21 : index
      %433 = memref.load %arg2[%c1_387, %c21_388] : memref<2x49xf32, #tpu.memory_space<smem>>
      %c0_389 = arith.constant 0 : index
      %c3_390 = arith.constant 3 : index
      %c0_391 = arith.constant 0 : index
      %434 = vector.load %arg10[%c0_389, %c3_390, %c0_391] : memref<7x22x16xf32, #tpu.memory_space<vmem>>, vector<1x16x16xf32>
      %435 = vector.shape_cast %434 : vector<1x16x16xf32> to vector<16x16xf32>
      %436 = vector.broadcast %433 : f32 to vector<16x16xf32>
      %437 = arith.mulf %436, %435 : vector<16x16xf32>
      %438 = arith.addf %342, %432 : vector<16x16xf32>
      %439 = arith.addf %343, %437 : vector<16x16xf32>
      %c0_392 = arith.constant 0 : index
      %c22 = arith.constant 22 : index
      %440 = memref.load %arg2[%c0_392, %c22] : memref<2x49xf32, #tpu.memory_space<smem>>
      %c1_393 = arith.constant 1 : index
      %c3_394 = arith.constant 3 : index
      %c0_395 = arith.constant 0 : index
      %441 = vector.load %arg9[%c1_393, %c3_394, %c0_395] : memref<7x22x16xf32, #tpu.memory_space<vmem>>, vector<1x16x16xf32>
      %442 = vector.shape_cast %441 : vector<1x16x16xf32> to vector<16x16xf32>
      %443 = vector.broadcast %440 : f32 to vector<16x16xf32>
      %444 = arith.mulf %443, %442 : vector<16x16xf32>
      %c1_396 = arith.constant 1 : index
      %c22_397 = arith.constant 22 : index
      %445 = memref.load %arg2[%c1_396, %c22_397] : memref<2x49xf32, #tpu.memory_space<smem>>
      %c1_398 = arith.constant 1 : index
      %c3_399 = arith.constant 3 : index
      %c0_400 = arith.constant 0 : index
      %446 = vector.load %arg10[%c1_398, %c3_399, %c0_400] : memref<7x22x16xf32, #tpu.memory_space<vmem>>, vector<1x16x16xf32>
      %447 = vector.shape_cast %446 : vector<1x16x16xf32> to vector<16x16xf32>
      %448 = vector.broadcast %445 : f32 to vector<16x16xf32>
      %449 = arith.mulf %448, %447 : vector<16x16xf32>
      %450 = arith.addf %438, %444 : vector<16x16xf32>
      %451 = arith.addf %439, %449 : vector<16x16xf32>
      %c0_401 = arith.constant 0 : index
      %c23 = arith.constant 23 : index
      %452 = memref.load %arg2[%c0_401, %c23] : memref<2x49xf32, #tpu.memory_space<smem>>
      %c2_402 = arith.constant 2 : index
      %c3_403 = arith.constant 3 : index
      %c0_404 = arith.constant 0 : index
      %453 = vector.load %arg9[%c2_402, %c3_403, %c0_404] : memref<7x22x16xf32, #tpu.memory_space<vmem>>, vector<1x16x16xf32>
      %454 = vector.shape_cast %453 : vector<1x16x16xf32> to vector<16x16xf32>
      %455 = vector.broadcast %452 : f32 to vector<16x16xf32>
      %456 = arith.mulf %455, %454 : vector<16x16xf32>
      %c1_405 = arith.constant 1 : index
      %c23_406 = arith.constant 23 : index
      %457 = memref.load %arg2[%c1_405, %c23_406] : memref<2x49xf32, #tpu.memory_space<smem>>
      %c2_407 = arith.constant 2 : index
      %c3_408 = arith.constant 3 : index
      %c0_409 = arith.constant 0 : index
      %458 = vector.load %arg10[%c2_407, %c3_408, %c0_409] : memref<7x22x16xf32, #tpu.memory_space<vmem>>, vector<1x16x16xf32>
      %459 = vector.shape_cast %458 : vector<1x16x16xf32> to vector<16x16xf32>
      %460 = vector.broadcast %457 : f32 to vector<16x16xf32>
      %461 = arith.mulf %460, %459 : vector<16x16xf32>
      %462 = arith.addf %450, %456 : vector<16x16xf32>
      %463 = arith.addf %451, %461 : vector<16x16xf32>
      %c0_410 = arith.constant 0 : index
      %c24 = arith.constant 24 : index
      %464 = memref.load %arg2[%c0_410, %c24] : memref<2x49xf32, #tpu.memory_space<smem>>
      %c3_411 = arith.constant 3 : index
      %c3_412 = arith.constant 3 : index
      %c0_413 = arith.constant 0 : index
      %465 = vector.load %arg9[%c3_411, %c3_412, %c0_413] : memref<7x22x16xf32, #tpu.memory_space<vmem>>, vector<1x16x16xf32>
      %466 = vector.shape_cast %465 : vector<1x16x16xf32> to vector<16x16xf32>
      %467 = vector.broadcast %464 : f32 to vector<16x16xf32>
      %468 = arith.mulf %467, %466 : vector<16x16xf32>
      %c1_414 = arith.constant 1 : index
      %c24_415 = arith.constant 24 : index
      %469 = memref.load %arg2[%c1_414, %c24_415] : memref<2x49xf32, #tpu.memory_space<smem>>
      %c3_416 = arith.constant 3 : index
      %c3_417 = arith.constant 3 : index
      %c0_418 = arith.constant 0 : index
      %470 = vector.load %arg10[%c3_416, %c3_417, %c0_418] : memref<7x22x16xf32, #tpu.memory_space<vmem>>, vector<1x16x16xf32>
      %471 = vector.shape_cast %470 : vector<1x16x16xf32> to vector<16x16xf32>
      %472 = vector.broadcast %469 : f32 to vector<16x16xf32>
      %473 = arith.mulf %472, %471 : vector<16x16xf32>
      %474 = arith.addf %462, %468 : vector<16x16xf32>
      %475 = arith.addf %463, %473 : vector<16x16xf32>
      %c0_419 = arith.constant 0 : index
      %c25 = arith.constant 25 : index
      %476 = memref.load %arg2[%c0_419, %c25] : memref<2x49xf32, #tpu.memory_space<smem>>
      %c4_420 = arith.constant 4 : index
      %c3_421 = arith.constant 3 : index
      %c0_422 = arith.constant 0 : index
      %477 = vector.load %arg9[%c4_420, %c3_421, %c0_422] : memref<7x22x16xf32, #tpu.memory_space<vmem>>, vector<1x16x16xf32>
      %478 = vector.shape_cast %477 : vector<1x16x16xf32> to vector<16x16xf32>
      %479 = vector.broadcast %476 : f32 to vector<16x16xf32>
      %480 = arith.mulf %479, %478 : vector<16x16xf32>
      %c1_423 = arith.constant 1 : index
      %c25_424 = arith.constant 25 : index
      %481 = memref.load %arg2[%c1_423, %c25_424] : memref<2x49xf32, #tpu.memory_space<smem>>
      %c4_425 = arith.constant 4 : index
      %c3_426 = arith.constant 3 : index
      %c0_427 = arith.constant 0 : index
      %482 = vector.load %arg10[%c4_425, %c3_426, %c0_427] : memref<7x22x16xf32, #tpu.memory_space<vmem>>, vector<1x16x16xf32>
      %483 = vector.shape_cast %482 : vector<1x16x16xf32> to vector<16x16xf32>
      %484 = vector.broadcast %481 : f32 to vector<16x16xf32>
      %485 = arith.mulf %484, %483 : vector<16x16xf32>
      %486 = arith.addf %474, %480 : vector<16x16xf32>
      %487 = arith.addf %475, %485 : vector<16x16xf32>
      %c0_428 = arith.constant 0 : index
      %c26 = arith.constant 26 : index
      %488 = memref.load %arg2[%c0_428, %c26] : memref<2x49xf32, #tpu.memory_space<smem>>
      %c5_429 = arith.constant 5 : index
      %c3_430 = arith.constant 3 : index
      %c0_431 = arith.constant 0 : index
      %489 = vector.load %arg9[%c5_429, %c3_430, %c0_431] : memref<7x22x16xf32, #tpu.memory_space<vmem>>, vector<1x16x16xf32>
      %490 = vector.shape_cast %489 : vector<1x16x16xf32> to vector<16x16xf32>
      %491 = vector.broadcast %488 : f32 to vector<16x16xf32>
      %492 = arith.mulf %491, %490 : vector<16x16xf32>
      %c1_432 = arith.constant 1 : index
      %c26_433 = arith.constant 26 : index
      %493 = memref.load %arg2[%c1_432, %c26_433] : memref<2x49xf32, #tpu.memory_space<smem>>
      %c5_434 = arith.constant 5 : index
      %c3_435 = arith.constant 3 : index
      %c0_436 = arith.constant 0 : index
      %494 = vector.load %arg10[%c5_434, %c3_435, %c0_436] : memref<7x22x16xf32, #tpu.memory_space<vmem>>, vector<1x16x16xf32>
      %495 = vector.shape_cast %494 : vector<1x16x16xf32> to vector<16x16xf32>
      %496 = vector.broadcast %493 : f32 to vector<16x16xf32>
      %497 = arith.mulf %496, %495 : vector<16x16xf32>
      %498 = arith.addf %486, %492 : vector<16x16xf32>
      %499 = arith.addf %487, %497 : vector<16x16xf32>
      %c0_437 = arith.constant 0 : index
      %c27 = arith.constant 27 : index
      %500 = memref.load %arg2[%c0_437, %c27] : memref<2x49xf32, #tpu.memory_space<smem>>
      %c6_438 = arith.constant 6 : index
      %c3_439 = arith.constant 3 : index
      %c0_440 = arith.constant 0 : index
      %501 = vector.load %arg9[%c6_438, %c3_439, %c0_440] : memref<7x22x16xf32, #tpu.memory_space<vmem>>, vector<1x16x16xf32>
      %502 = vector.shape_cast %501 : vector<1x16x16xf32> to vector<16x16xf32>
      %503 = vector.broadcast %500 : f32 to vector<16x16xf32>
      %504 = arith.mulf %503, %502 : vector<16x16xf32>
      %c1_441 = arith.constant 1 : index
      %c27_442 = arith.constant 27 : index
      %505 = memref.load %arg2[%c1_441, %c27_442] : memref<2x49xf32, #tpu.memory_space<smem>>
      %c6_443 = arith.constant 6 : index
      %c3_444 = arith.constant 3 : index
      %c0_445 = arith.constant 0 : index
      %506 = vector.load %arg10[%c6_443, %c3_444, %c0_445] : memref<7x22x16xf32, #tpu.memory_space<vmem>>, vector<1x16x16xf32>
      %507 = vector.shape_cast %506 : vector<1x16x16xf32> to vector<16x16xf32>
      %508 = vector.broadcast %505 : f32 to vector<16x16xf32>
      %509 = arith.mulf %508, %507 : vector<16x16xf32>
      %510 = arith.addf %498, %504 : vector<16x16xf32>
      %511 = arith.addf %499, %509 : vector<16x16xf32>
      %c0_446 = arith.constant 0 : index
      %c28 = arith.constant 28 : index
      %512 = memref.load %arg2[%c0_446, %c28] : memref<2x49xf32, #tpu.memory_space<smem>>
      %c0_447 = arith.constant 0 : index
      %c4_448 = arith.constant 4 : index
      %c0_449 = arith.constant 0 : index
      %513 = vector.load %arg9[%c0_447, %c4_448, %c0_449] : memref<7x22x16xf32, #tpu.memory_space<vmem>>, vector<1x16x16xf32>
      %514 = vector.shape_cast %513 : vector<1x16x16xf32> to vector<16x16xf32>
      %515 = vector.broadcast %512 : f32 to vector<16x16xf32>
      %516 = arith.mulf %515, %514 : vector<16x16xf32>
      %c1_450 = arith.constant 1 : index
      %c28_451 = arith.constant 28 : index
      %517 = memref.load %arg2[%c1_450, %c28_451] : memref<2x49xf32, #tpu.memory_space<smem>>
      %c0_452 = arith.constant 0 : index
      %c4_453 = arith.constant 4 : index
      %c0_454 = arith.constant 0 : index
      %518 = vector.load %arg10[%c0_452, %c4_453, %c0_454] : memref<7x22x16xf32, #tpu.memory_space<vmem>>, vector<1x16x16xf32>
      %519 = vector.shape_cast %518 : vector<1x16x16xf32> to vector<16x16xf32>
      %520 = vector.broadcast %517 : f32 to vector<16x16xf32>
      %521 = arith.mulf %520, %519 : vector<16x16xf32>
      %522 = arith.addf %426, %516 : vector<16x16xf32>
      %523 = arith.addf %427, %521 : vector<16x16xf32>
      %c0_455 = arith.constant 0 : index
      %c29 = arith.constant 29 : index
      %524 = memref.load %arg2[%c0_455, %c29] : memref<2x49xf32, #tpu.memory_space<smem>>
      %c1_456 = arith.constant 1 : index
      %c4_457 = arith.constant 4 : index
      %c0_458 = arith.constant 0 : index
      %525 = vector.load %arg9[%c1_456, %c4_457, %c0_458] : memref<7x22x16xf32, #tpu.memory_space<vmem>>, vector<1x16x16xf32>
      %526 = vector.shape_cast %525 : vector<1x16x16xf32> to vector<16x16xf32>
      %527 = vector.broadcast %524 : f32 to vector<16x16xf32>
      %528 = arith.mulf %527, %526 : vector<16x16xf32>
      %c1_459 = arith.constant 1 : index
      %c29_460 = arith.constant 29 : index
      %529 = memref.load %arg2[%c1_459, %c29_460] : memref<2x49xf32, #tpu.memory_space<smem>>
      %c1_461 = arith.constant 1 : index
      %c4_462 = arith.constant 4 : index
      %c0_463 = arith.constant 0 : index
      %530 = vector.load %arg10[%c1_461, %c4_462, %c0_463] : memref<7x22x16xf32, #tpu.memory_space<vmem>>, vector<1x16x16xf32>
      %531 = vector.shape_cast %530 : vector<1x16x16xf32> to vector<16x16xf32>
      %532 = vector.broadcast %529 : f32 to vector<16x16xf32>
      %533 = arith.mulf %532, %531 : vector<16x16xf32>
      %534 = arith.addf %522, %528 : vector<16x16xf32>
      %535 = arith.addf %523, %533 : vector<16x16xf32>
      %c0_464 = arith.constant 0 : index
      %c30 = arith.constant 30 : index
      %536 = memref.load %arg2[%c0_464, %c30] : memref<2x49xf32, #tpu.memory_space<smem>>
      %c2_465 = arith.constant 2 : index
      %c4_466 = arith.constant 4 : index
      %c0_467 = arith.constant 0 : index
      %537 = vector.load %arg9[%c2_465, %c4_466, %c0_467] : memref<7x22x16xf32, #tpu.memory_space<vmem>>, vector<1x16x16xf32>
      %538 = vector.shape_cast %537 : vector<1x16x16xf32> to vector<16x16xf32>
      %539 = vector.broadcast %536 : f32 to vector<16x16xf32>
      %540 = arith.mulf %539, %538 : vector<16x16xf32>
      %c1_468 = arith.constant 1 : index
      %c30_469 = arith.constant 30 : index
      %541 = memref.load %arg2[%c1_468, %c30_469] : memref<2x49xf32, #tpu.memory_space<smem>>
      %c2_470 = arith.constant 2 : index
      %c4_471 = arith.constant 4 : index
      %c0_472 = arith.constant 0 : index
      %542 = vector.load %arg10[%c2_470, %c4_471, %c0_472] : memref<7x22x16xf32, #tpu.memory_space<vmem>>, vector<1x16x16xf32>
      %543 = vector.shape_cast %542 : vector<1x16x16xf32> to vector<16x16xf32>
      %544 = vector.broadcast %541 : f32 to vector<16x16xf32>
      %545 = arith.mulf %544, %543 : vector<16x16xf32>
      %546 = arith.addf %534, %540 : vector<16x16xf32>
      %547 = arith.addf %535, %545 : vector<16x16xf32>
      %c0_473 = arith.constant 0 : index
      %c31 = arith.constant 31 : index
      %548 = memref.load %arg2[%c0_473, %c31] : memref<2x49xf32, #tpu.memory_space<smem>>
      %c3_474 = arith.constant 3 : index
      %c4_475 = arith.constant 4 : index
      %c0_476 = arith.constant 0 : index
      %549 = vector.load %arg9[%c3_474, %c4_475, %c0_476] : memref<7x22x16xf32, #tpu.memory_space<vmem>>, vector<1x16x16xf32>
      %550 = vector.shape_cast %549 : vector<1x16x16xf32> to vector<16x16xf32>
      %551 = vector.broadcast %548 : f32 to vector<16x16xf32>
      %552 = arith.mulf %551, %550 : vector<16x16xf32>
      %c1_477 = arith.constant 1 : index
      %c31_478 = arith.constant 31 : index
      %553 = memref.load %arg2[%c1_477, %c31_478] : memref<2x49xf32, #tpu.memory_space<smem>>
      %c3_479 = arith.constant 3 : index
      %c4_480 = arith.constant 4 : index
      %c0_481 = arith.constant 0 : index
      %554 = vector.load %arg10[%c3_479, %c4_480, %c0_481] : memref<7x22x16xf32, #tpu.memory_space<vmem>>, vector<1x16x16xf32>
      %555 = vector.shape_cast %554 : vector<1x16x16xf32> to vector<16x16xf32>
      %556 = vector.broadcast %553 : f32 to vector<16x16xf32>
      %557 = arith.mulf %556, %555 : vector<16x16xf32>
      %558 = arith.addf %546, %552 : vector<16x16xf32>
      %559 = arith.addf %547, %557 : vector<16x16xf32>
      %c0_482 = arith.constant 0 : index
      %c32_483 = arith.constant 32 : index
      %560 = memref.load %arg2[%c0_482, %c32_483] : memref<2x49xf32, #tpu.memory_space<smem>>
      %c4_484 = arith.constant 4 : index
      %c4_485 = arith.constant 4 : index
      %c0_486 = arith.constant 0 : index
      %561 = vector.load %arg9[%c4_484, %c4_485, %c0_486] : memref<7x22x16xf32, #tpu.memory_space<vmem>>, vector<1x16x16xf32>
      %562 = vector.shape_cast %561 : vector<1x16x16xf32> to vector<16x16xf32>
      %563 = vector.broadcast %560 : f32 to vector<16x16xf32>
      %564 = arith.mulf %563, %562 : vector<16x16xf32>
      %c1_487 = arith.constant 1 : index
      %c32_488 = arith.constant 32 : index
      %565 = memref.load %arg2[%c1_487, %c32_488] : memref<2x49xf32, #tpu.memory_space<smem>>
      %c4_489 = arith.constant 4 : index
      %c4_490 = arith.constant 4 : index
      %c0_491 = arith.constant 0 : index
      %566 = vector.load %arg10[%c4_489, %c4_490, %c0_491] : memref<7x22x16xf32, #tpu.memory_space<vmem>>, vector<1x16x16xf32>
      %567 = vector.shape_cast %566 : vector<1x16x16xf32> to vector<16x16xf32>
      %568 = vector.broadcast %565 : f32 to vector<16x16xf32>
      %569 = arith.mulf %568, %567 : vector<16x16xf32>
      %570 = arith.addf %558, %564 : vector<16x16xf32>
      %571 = arith.addf %559, %569 : vector<16x16xf32>
      %c0_492 = arith.constant 0 : index
      %c33 = arith.constant 33 : index
      %572 = memref.load %arg2[%c0_492, %c33] : memref<2x49xf32, #tpu.memory_space<smem>>
      %c5_493 = arith.constant 5 : index
      %c4_494 = arith.constant 4 : index
      %c0_495 = arith.constant 0 : index
      %573 = vector.load %arg9[%c5_493, %c4_494, %c0_495] : memref<7x22x16xf32, #tpu.memory_space<vmem>>, vector<1x16x16xf32>
      %574 = vector.shape_cast %573 : vector<1x16x16xf32> to vector<16x16xf32>
      %575 = vector.broadcast %572 : f32 to vector<16x16xf32>
      %576 = arith.mulf %575, %574 : vector<16x16xf32>
      %c1_496 = arith.constant 1 : index
      %c33_497 = arith.constant 33 : index
      %577 = memref.load %arg2[%c1_496, %c33_497] : memref<2x49xf32, #tpu.memory_space<smem>>
      %c5_498 = arith.constant 5 : index
      %c4_499 = arith.constant 4 : index
      %c0_500 = arith.constant 0 : index
      %578 = vector.load %arg10[%c5_498, %c4_499, %c0_500] : memref<7x22x16xf32, #tpu.memory_space<vmem>>, vector<1x16x16xf32>
      %579 = vector.shape_cast %578 : vector<1x16x16xf32> to vector<16x16xf32>
      %580 = vector.broadcast %577 : f32 to vector<16x16xf32>
      %581 = arith.mulf %580, %579 : vector<16x16xf32>
      %582 = arith.addf %570, %576 : vector<16x16xf32>
      %583 = arith.addf %571, %581 : vector<16x16xf32>
      %c0_501 = arith.constant 0 : index
      %c34 = arith.constant 34 : index
      %584 = memref.load %arg2[%c0_501, %c34] : memref<2x49xf32, #tpu.memory_space<smem>>
      %c6_502 = arith.constant 6 : index
      %c4_503 = arith.constant 4 : index
      %c0_504 = arith.constant 0 : index
      %585 = vector.load %arg9[%c6_502, %c4_503, %c0_504] : memref<7x22x16xf32, #tpu.memory_space<vmem>>, vector<1x16x16xf32>
      %586 = vector.shape_cast %585 : vector<1x16x16xf32> to vector<16x16xf32>
      %587 = vector.broadcast %584 : f32 to vector<16x16xf32>
      %588 = arith.mulf %587, %586 : vector<16x16xf32>
      %c1_505 = arith.constant 1 : index
      %c34_506 = arith.constant 34 : index
      %589 = memref.load %arg2[%c1_505, %c34_506] : memref<2x49xf32, #tpu.memory_space<smem>>
      %c6_507 = arith.constant 6 : index
      %c4_508 = arith.constant 4 : index
      %c0_509 = arith.constant 0 : index
      %590 = vector.load %arg10[%c6_507, %c4_508, %c0_509] : memref<7x22x16xf32, #tpu.memory_space<vmem>>, vector<1x16x16xf32>
      %591 = vector.shape_cast %590 : vector<1x16x16xf32> to vector<16x16xf32>
      %592 = vector.broadcast %589 : f32 to vector<16x16xf32>
      %593 = arith.mulf %592, %591 : vector<16x16xf32>
      %594 = arith.addf %582, %588 : vector<16x16xf32>
      %595 = arith.addf %583, %593 : vector<16x16xf32>
      %c0_510 = arith.constant 0 : index
      %c35 = arith.constant 35 : index
      %596 = memref.load %arg2[%c0_510, %c35] : memref<2x49xf32, #tpu.memory_space<smem>>
      %c0_511 = arith.constant 0 : index
      %c5_512 = arith.constant 5 : index
      %c0_513 = arith.constant 0 : index
      %597 = vector.load %arg9[%c0_511, %c5_512, %c0_513] : memref<7x22x16xf32, #tpu.memory_space<vmem>>, vector<1x16x16xf32>
      %598 = vector.shape_cast %597 : vector<1x16x16xf32> to vector<16x16xf32>
      %599 = vector.broadcast %596 : f32 to vector<16x16xf32>
      %600 = arith.mulf %599, %598 : vector<16x16xf32>
      %c1_514 = arith.constant 1 : index
      %c35_515 = arith.constant 35 : index
      %601 = memref.load %arg2[%c1_514, %c35_515] : memref<2x49xf32, #tpu.memory_space<smem>>
      %c0_516 = arith.constant 0 : index
      %c5_517 = arith.constant 5 : index
      %c0_518 = arith.constant 0 : index
      %602 = vector.load %arg10[%c0_516, %c5_517, %c0_518] : memref<7x22x16xf32, #tpu.memory_space<vmem>>, vector<1x16x16xf32>
      %603 = vector.shape_cast %602 : vector<1x16x16xf32> to vector<16x16xf32>
      %604 = vector.broadcast %601 : f32 to vector<16x16xf32>
      %605 = arith.mulf %604, %603 : vector<16x16xf32>
      %606 = arith.addf %510, %600 : vector<16x16xf32>
      %607 = arith.addf %511, %605 : vector<16x16xf32>
      %c0_519 = arith.constant 0 : index
      %c36 = arith.constant 36 : index
      %608 = memref.load %arg2[%c0_519, %c36] : memref<2x49xf32, #tpu.memory_space<smem>>
      %c1_520 = arith.constant 1 : index
      %c5_521 = arith.constant 5 : index
      %c0_522 = arith.constant 0 : index
      %609 = vector.load %arg9[%c1_520, %c5_521, %c0_522] : memref<7x22x16xf32, #tpu.memory_space<vmem>>, vector<1x16x16xf32>
      %610 = vector.shape_cast %609 : vector<1x16x16xf32> to vector<16x16xf32>
      %611 = vector.broadcast %608 : f32 to vector<16x16xf32>
      %612 = arith.mulf %611, %610 : vector<16x16xf32>
      %c1_523 = arith.constant 1 : index
      %c36_524 = arith.constant 36 : index
      %613 = memref.load %arg2[%c1_523, %c36_524] : memref<2x49xf32, #tpu.memory_space<smem>>
      %c1_525 = arith.constant 1 : index
      %c5_526 = arith.constant 5 : index
      %c0_527 = arith.constant 0 : index
      %614 = vector.load %arg10[%c1_525, %c5_526, %c0_527] : memref<7x22x16xf32, #tpu.memory_space<vmem>>, vector<1x16x16xf32>
      %615 = vector.shape_cast %614 : vector<1x16x16xf32> to vector<16x16xf32>
      %616 = vector.broadcast %613 : f32 to vector<16x16xf32>
      %617 = arith.mulf %616, %615 : vector<16x16xf32>
      %618 = arith.addf %606, %612 : vector<16x16xf32>
      %619 = arith.addf %607, %617 : vector<16x16xf32>
      %c0_528 = arith.constant 0 : index
      %c37 = arith.constant 37 : index
      %620 = memref.load %arg2[%c0_528, %c37] : memref<2x49xf32, #tpu.memory_space<smem>>
      %c2_529 = arith.constant 2 : index
      %c5_530 = arith.constant 5 : index
      %c0_531 = arith.constant 0 : index
      %621 = vector.load %arg9[%c2_529, %c5_530, %c0_531] : memref<7x22x16xf32, #tpu.memory_space<vmem>>, vector<1x16x16xf32>
      %622 = vector.shape_cast %621 : vector<1x16x16xf32> to vector<16x16xf32>
      %623 = vector.broadcast %620 : f32 to vector<16x16xf32>
      %624 = arith.mulf %623, %622 : vector<16x16xf32>
      %c1_532 = arith.constant 1 : index
      %c37_533 = arith.constant 37 : index
      %625 = memref.load %arg2[%c1_532, %c37_533] : memref<2x49xf32, #tpu.memory_space<smem>>
      %c2_534 = arith.constant 2 : index
      %c5_535 = arith.constant 5 : index
      %c0_536 = arith.constant 0 : index
      %626 = vector.load %arg10[%c2_534, %c5_535, %c0_536] : memref<7x22x16xf32, #tpu.memory_space<vmem>>, vector<1x16x16xf32>
      %627 = vector.shape_cast %626 : vector<1x16x16xf32> to vector<16x16xf32>
      %628 = vector.broadcast %625 : f32 to vector<16x16xf32>
      %629 = arith.mulf %628, %627 : vector<16x16xf32>
      %630 = arith.addf %618, %624 : vector<16x16xf32>
      %631 = arith.addf %619, %629 : vector<16x16xf32>
      %c0_537 = arith.constant 0 : index
      %c38 = arith.constant 38 : index
      %632 = memref.load %arg2[%c0_537, %c38] : memref<2x49xf32, #tpu.memory_space<smem>>
      %c3_538 = arith.constant 3 : index
      %c5_539 = arith.constant 5 : index
      %c0_540 = arith.constant 0 : index
      %633 = vector.load %arg9[%c3_538, %c5_539, %c0_540] : memref<7x22x16xf32, #tpu.memory_space<vmem>>, vector<1x16x16xf32>
      %634 = vector.shape_cast %633 : vector<1x16x16xf32> to vector<16x16xf32>
      %635 = vector.broadcast %632 : f32 to vector<16x16xf32>
      %636 = arith.mulf %635, %634 : vector<16x16xf32>
      %c1_541 = arith.constant 1 : index
      %c38_542 = arith.constant 38 : index
      %637 = memref.load %arg2[%c1_541, %c38_542] : memref<2x49xf32, #tpu.memory_space<smem>>
      %c3_543 = arith.constant 3 : index
      %c5_544 = arith.constant 5 : index
      %c0_545 = arith.constant 0 : index
      %638 = vector.load %arg10[%c3_543, %c5_544, %c0_545] : memref<7x22x16xf32, #tpu.memory_space<vmem>>, vector<1x16x16xf32>
      %639 = vector.shape_cast %638 : vector<1x16x16xf32> to vector<16x16xf32>
      %640 = vector.broadcast %637 : f32 to vector<16x16xf32>
      %641 = arith.mulf %640, %639 : vector<16x16xf32>
      %642 = arith.addf %630, %636 : vector<16x16xf32>
      %643 = arith.addf %631, %641 : vector<16x16xf32>
      %c0_546 = arith.constant 0 : index
      %c39 = arith.constant 39 : index
      %644 = memref.load %arg2[%c0_546, %c39] : memref<2x49xf32, #tpu.memory_space<smem>>
      %c4_547 = arith.constant 4 : index
      %c5_548 = arith.constant 5 : index
      %c0_549 = arith.constant 0 : index
      %645 = vector.load %arg9[%c4_547, %c5_548, %c0_549] : memref<7x22x16xf32, #tpu.memory_space<vmem>>, vector<1x16x16xf32>
      %646 = vector.shape_cast %645 : vector<1x16x16xf32> to vector<16x16xf32>
      %647 = vector.broadcast %644 : f32 to vector<16x16xf32>
      %648 = arith.mulf %647, %646 : vector<16x16xf32>
      %c1_550 = arith.constant 1 : index
      %c39_551 = arith.constant 39 : index
      %649 = memref.load %arg2[%c1_550, %c39_551] : memref<2x49xf32, #tpu.memory_space<smem>>
      %c4_552 = arith.constant 4 : index
      %c5_553 = arith.constant 5 : index
      %c0_554 = arith.constant 0 : index
      %650 = vector.load %arg10[%c4_552, %c5_553, %c0_554] : memref<7x22x16xf32, #tpu.memory_space<vmem>>, vector<1x16x16xf32>
      %651 = vector.shape_cast %650 : vector<1x16x16xf32> to vector<16x16xf32>
      %652 = vector.broadcast %649 : f32 to vector<16x16xf32>
      %653 = arith.mulf %652, %651 : vector<16x16xf32>
      %654 = arith.addf %642, %648 : vector<16x16xf32>
      %655 = arith.addf %643, %653 : vector<16x16xf32>
      %c0_555 = arith.constant 0 : index
      %c40 = arith.constant 40 : index
      %656 = memref.load %arg2[%c0_555, %c40] : memref<2x49xf32, #tpu.memory_space<smem>>
      %c5_556 = arith.constant 5 : index
      %c5_557 = arith.constant 5 : index
      %c0_558 = arith.constant 0 : index
      %657 = vector.load %arg9[%c5_556, %c5_557, %c0_558] : memref<7x22x16xf32, #tpu.memory_space<vmem>>, vector<1x16x16xf32>
      %658 = vector.shape_cast %657 : vector<1x16x16xf32> to vector<16x16xf32>
      %659 = vector.broadcast %656 : f32 to vector<16x16xf32>
      %660 = arith.mulf %659, %658 : vector<16x16xf32>
      %c1_559 = arith.constant 1 : index
      %c40_560 = arith.constant 40 : index
      %661 = memref.load %arg2[%c1_559, %c40_560] : memref<2x49xf32, #tpu.memory_space<smem>>
      %c5_561 = arith.constant 5 : index
      %c5_562 = arith.constant 5 : index
      %c0_563 = arith.constant 0 : index
      %662 = vector.load %arg10[%c5_561, %c5_562, %c0_563] : memref<7x22x16xf32, #tpu.memory_space<vmem>>, vector<1x16x16xf32>
      %663 = vector.shape_cast %662 : vector<1x16x16xf32> to vector<16x16xf32>
      %664 = vector.broadcast %661 : f32 to vector<16x16xf32>
      %665 = arith.mulf %664, %663 : vector<16x16xf32>
      %666 = arith.addf %654, %660 : vector<16x16xf32>
      %667 = arith.addf %655, %665 : vector<16x16xf32>
      %c0_564 = arith.constant 0 : index
      %c41 = arith.constant 41 : index
      %668 = memref.load %arg2[%c0_564, %c41] : memref<2x49xf32, #tpu.memory_space<smem>>
      %c6_565 = arith.constant 6 : index
      %c5_566 = arith.constant 5 : index
      %c0_567 = arith.constant 0 : index
      %669 = vector.load %arg9[%c6_565, %c5_566, %c0_567] : memref<7x22x16xf32, #tpu.memory_space<vmem>>, vector<1x16x16xf32>
      %670 = vector.shape_cast %669 : vector<1x16x16xf32> to vector<16x16xf32>
      %671 = vector.broadcast %668 : f32 to vector<16x16xf32>
      %672 = arith.mulf %671, %670 : vector<16x16xf32>
      %c1_568 = arith.constant 1 : index
      %c41_569 = arith.constant 41 : index
      %673 = memref.load %arg2[%c1_568, %c41_569] : memref<2x49xf32, #tpu.memory_space<smem>>
      %c6_570 = arith.constant 6 : index
      %c5_571 = arith.constant 5 : index
      %c0_572 = arith.constant 0 : index
      %674 = vector.load %arg10[%c6_570, %c5_571, %c0_572] : memref<7x22x16xf32, #tpu.memory_space<vmem>>, vector<1x16x16xf32>
      %675 = vector.shape_cast %674 : vector<1x16x16xf32> to vector<16x16xf32>
      %676 = vector.broadcast %673 : f32 to vector<16x16xf32>
      %677 = arith.mulf %676, %675 : vector<16x16xf32>
      %678 = arith.addf %666, %672 : vector<16x16xf32>
      %679 = arith.addf %667, %677 : vector<16x16xf32>
      %c0_573 = arith.constant 0 : index
      %c42 = arith.constant 42 : index
      %680 = memref.load %arg2[%c0_573, %c42] : memref<2x49xf32, #tpu.memory_space<smem>>
      %c0_574 = arith.constant 0 : index
      %c6_575 = arith.constant 6 : index
      %c0_576 = arith.constant 0 : index
      %681 = vector.load %arg9[%c0_574, %c6_575, %c0_576] : memref<7x22x16xf32, #tpu.memory_space<vmem>>, vector<1x16x16xf32>
      %682 = vector.shape_cast %681 : vector<1x16x16xf32> to vector<16x16xf32>
      %683 = vector.broadcast %680 : f32 to vector<16x16xf32>
      %684 = arith.mulf %683, %682 : vector<16x16xf32>
      %c1_577 = arith.constant 1 : index
      %c42_578 = arith.constant 42 : index
      %685 = memref.load %arg2[%c1_577, %c42_578] : memref<2x49xf32, #tpu.memory_space<smem>>
      %c0_579 = arith.constant 0 : index
      %c6_580 = arith.constant 6 : index
      %c0_581 = arith.constant 0 : index
      %686 = vector.load %arg10[%c0_579, %c6_580, %c0_581] : memref<7x22x16xf32, #tpu.memory_space<vmem>>, vector<1x16x16xf32>
      %687 = vector.shape_cast %686 : vector<1x16x16xf32> to vector<16x16xf32>
      %688 = vector.broadcast %685 : f32 to vector<16x16xf32>
      %689 = arith.mulf %688, %687 : vector<16x16xf32>
      %690 = arith.addf %594, %684 : vector<16x16xf32>
      %691 = arith.addf %595, %689 : vector<16x16xf32>
      %c0_582 = arith.constant 0 : index
      %c43 = arith.constant 43 : index
      %692 = memref.load %arg2[%c0_582, %c43] : memref<2x49xf32, #tpu.memory_space<smem>>
      %c1_583 = arith.constant 1 : index
      %c6_584 = arith.constant 6 : index
      %c0_585 = arith.constant 0 : index
      %693 = vector.load %arg9[%c1_583, %c6_584, %c0_585] : memref<7x22x16xf32, #tpu.memory_space<vmem>>, vector<1x16x16xf32>
      %694 = vector.shape_cast %693 : vector<1x16x16xf32> to vector<16x16xf32>
      %695 = vector.broadcast %692 : f32 to vector<16x16xf32>
      %696 = arith.mulf %695, %694 : vector<16x16xf32>
      %c1_586 = arith.constant 1 : index
      %c43_587 = arith.constant 43 : index
      %697 = memref.load %arg2[%c1_586, %c43_587] : memref<2x49xf32, #tpu.memory_space<smem>>
      %c1_588 = arith.constant 1 : index
      %c6_589 = arith.constant 6 : index
      %c0_590 = arith.constant 0 : index
      %698 = vector.load %arg10[%c1_588, %c6_589, %c0_590] : memref<7x22x16xf32, #tpu.memory_space<vmem>>, vector<1x16x16xf32>
      %699 = vector.shape_cast %698 : vector<1x16x16xf32> to vector<16x16xf32>
      %700 = vector.broadcast %697 : f32 to vector<16x16xf32>
      %701 = arith.mulf %700, %699 : vector<16x16xf32>
      %702 = arith.addf %690, %696 : vector<16x16xf32>
      %703 = arith.addf %691, %701 : vector<16x16xf32>
      %c0_591 = arith.constant 0 : index
      %c44 = arith.constant 44 : index
      %704 = memref.load %arg2[%c0_591, %c44] : memref<2x49xf32, #tpu.memory_space<smem>>
      %c2_592 = arith.constant 2 : index
      %c6_593 = arith.constant 6 : index
      %c0_594 = arith.constant 0 : index
      %705 = vector.load %arg9[%c2_592, %c6_593, %c0_594] : memref<7x22x16xf32, #tpu.memory_space<vmem>>, vector<1x16x16xf32>
      %706 = vector.shape_cast %705 : vector<1x16x16xf32> to vector<16x16xf32>
      %707 = vector.broadcast %704 : f32 to vector<16x16xf32>
      %708 = arith.mulf %707, %706 : vector<16x16xf32>
      %c1_595 = arith.constant 1 : index
      %c44_596 = arith.constant 44 : index
      %709 = memref.load %arg2[%c1_595, %c44_596] : memref<2x49xf32, #tpu.memory_space<smem>>
      %c2_597 = arith.constant 2 : index
      %c6_598 = arith.constant 6 : index
      %c0_599 = arith.constant 0 : index
      %710 = vector.load %arg10[%c2_597, %c6_598, %c0_599] : memref<7x22x16xf32, #tpu.memory_space<vmem>>, vector<1x16x16xf32>
      %711 = vector.shape_cast %710 : vector<1x16x16xf32> to vector<16x16xf32>
      %712 = vector.broadcast %709 : f32 to vector<16x16xf32>
      %713 = arith.mulf %712, %711 : vector<16x16xf32>
      %714 = arith.addf %702, %708 : vector<16x16xf32>
      %715 = arith.addf %703, %713 : vector<16x16xf32>
      %c0_600 = arith.constant 0 : index
      %c45 = arith.constant 45 : index
      %716 = memref.load %arg2[%c0_600, %c45] : memref<2x49xf32, #tpu.memory_space<smem>>
      %c3_601 = arith.constant 3 : index
      %c6_602 = arith.constant 6 : index
      %c0_603 = arith.constant 0 : index
      %717 = vector.load %arg9[%c3_601, %c6_602, %c0_603] : memref<7x22x16xf32, #tpu.memory_space<vmem>>, vector<1x16x16xf32>
      %718 = vector.shape_cast %717 : vector<1x16x16xf32> to vector<16x16xf32>
      %719 = vector.broadcast %716 : f32 to vector<16x16xf32>
      %720 = arith.mulf %719, %718 : vector<16x16xf32>
      %c1_604 = arith.constant 1 : index
      %c45_605 = arith.constant 45 : index
      %721 = memref.load %arg2[%c1_604, %c45_605] : memref<2x49xf32, #tpu.memory_space<smem>>
      %c3_606 = arith.constant 3 : index
      %c6_607 = arith.constant 6 : index
      %c0_608 = arith.constant 0 : index
      %722 = vector.load %arg10[%c3_606, %c6_607, %c0_608] : memref<7x22x16xf32, #tpu.memory_space<vmem>>, vector<1x16x16xf32>
      %723 = vector.shape_cast %722 : vector<1x16x16xf32> to vector<16x16xf32>
      %724 = vector.broadcast %721 : f32 to vector<16x16xf32>
      %725 = arith.mulf %724, %723 : vector<16x16xf32>
      %726 = arith.addf %714, %720 : vector<16x16xf32>
      %727 = arith.addf %715, %725 : vector<16x16xf32>
      %c0_609 = arith.constant 0 : index
      %c46 = arith.constant 46 : index
      %728 = memref.load %arg2[%c0_609, %c46] : memref<2x49xf32, #tpu.memory_space<smem>>
      %c4_610 = arith.constant 4 : index
      %c6_611 = arith.constant 6 : index
      %c0_612 = arith.constant 0 : index
      %729 = vector.load %arg9[%c4_610, %c6_611, %c0_612] : memref<7x22x16xf32, #tpu.memory_space<vmem>>, vector<1x16x16xf32>
      %730 = vector.shape_cast %729 : vector<1x16x16xf32> to vector<16x16xf32>
      %731 = vector.broadcast %728 : f32 to vector<16x16xf32>
      %732 = arith.mulf %731, %730 : vector<16x16xf32>
      %c1_613 = arith.constant 1 : index
      %c46_614 = arith.constant 46 : index
      %733 = memref.load %arg2[%c1_613, %c46_614] : memref<2x49xf32, #tpu.memory_space<smem>>
      %c4_615 = arith.constant 4 : index
      %c6_616 = arith.constant 6 : index
      %c0_617 = arith.constant 0 : index
      %734 = vector.load %arg10[%c4_615, %c6_616, %c0_617] : memref<7x22x16xf32, #tpu.memory_space<vmem>>, vector<1x16x16xf32>
      %735 = vector.shape_cast %734 : vector<1x16x16xf32> to vector<16x16xf32>
      %736 = vector.broadcast %733 : f32 to vector<16x16xf32>
      %737 = arith.mulf %736, %735 : vector<16x16xf32>
      %738 = arith.addf %726, %732 : vector<16x16xf32>
      %739 = arith.addf %727, %737 : vector<16x16xf32>
      %c0_618 = arith.constant 0 : index
      %c47 = arith.constant 47 : index
      %740 = memref.load %arg2[%c0_618, %c47] : memref<2x49xf32, #tpu.memory_space<smem>>
      %c5_619 = arith.constant 5 : index
      %c6_620 = arith.constant 6 : index
      %c0_621 = arith.constant 0 : index
      %741 = vector.load %arg9[%c5_619, %c6_620, %c0_621] : memref<7x22x16xf32, #tpu.memory_space<vmem>>, vector<1x16x16xf32>
      %742 = vector.shape_cast %741 : vector<1x16x16xf32> to vector<16x16xf32>
      %743 = vector.broadcast %740 : f32 to vector<16x16xf32>
      %744 = arith.mulf %743, %742 : vector<16x16xf32>
      %c1_622 = arith.constant 1 : index
      %c47_623 = arith.constant 47 : index
      %745 = memref.load %arg2[%c1_622, %c47_623] : memref<2x49xf32, #tpu.memory_space<smem>>
      %c5_624 = arith.constant 5 : index
      %c6_625 = arith.constant 6 : index
      %c0_626 = arith.constant 0 : index
      %746 = vector.load %arg10[%c5_624, %c6_625, %c0_626] : memref<7x22x16xf32, #tpu.memory_space<vmem>>, vector<1x16x16xf32>
      %747 = vector.shape_cast %746 : vector<1x16x16xf32> to vector<16x16xf32>
      %748 = vector.broadcast %745 : f32 to vector<16x16xf32>
      %749 = arith.mulf %748, %747 : vector<16x16xf32>
      %750 = arith.addf %738, %744 : vector<16x16xf32>
      %751 = arith.addf %739, %749 : vector<16x16xf32>
      %c0_627 = arith.constant 0 : index
      %c48_628 = arith.constant 48 : index
      %752 = memref.load %arg2[%c0_627, %c48_628] : memref<2x49xf32, #tpu.memory_space<smem>>
      %c6_629 = arith.constant 6 : index
      %c6_630 = arith.constant 6 : index
      %c0_631 = arith.constant 0 : index
      %753 = vector.load %arg9[%c6_629, %c6_630, %c0_631] : memref<7x22x16xf32, #tpu.memory_space<vmem>>, vector<1x16x16xf32>
      %754 = vector.shape_cast %753 : vector<1x16x16xf32> to vector<16x16xf32>
      %755 = vector.broadcast %752 : f32 to vector<16x16xf32>
      %756 = arith.mulf %755, %754 : vector<16x16xf32>
      %c1_632 = arith.constant 1 : index
      %c48_633 = arith.constant 48 : index
      %757 = memref.load %arg2[%c1_632, %c48_633] : memref<2x49xf32, #tpu.memory_space<smem>>
      %c6_634 = arith.constant 6 : index
      %c6_635 = arith.constant 6 : index
      %c0_636 = arith.constant 0 : index
      %758 = vector.load %arg10[%c6_634, %c6_635, %c0_636] : memref<7x22x16xf32, #tpu.memory_space<vmem>>, vector<1x16x16xf32>
      %759 = vector.shape_cast %758 : vector<1x16x16xf32> to vector<16x16xf32>
      %760 = vector.broadcast %757 : f32 to vector<16x16xf32>
      %761 = arith.mulf %760, %759 : vector<16x16xf32>
      %762 = arith.addf %750, %756 : vector<16x16xf32>
      %763 = arith.addf %751, %761 : vector<16x16xf32>
      %764 = arith.addf %762, %678 : vector<16x16xf32>
      %765 = arith.addf %763, %679 : vector<16x16xf32>
      %766 = arith.addf %764, %765 : vector<16x16xf32>
      %767 = arith.negf %766 : vector<16x16xf32>
      %768 = math.exp %767 : vector<16x16xf32>
      %cst_637 = arith.constant 1.000000e+00 : f32
      %769 = vector.broadcast %cst_637 : f32 to vector<16x16xf32>
      %770 = arith.addf %769, %768 : vector<16x16xf32>
      %771 = arith.divf %769, %770 : vector<16x16xf32>
      %c0_638 = arith.constant 0 : index
      %c0_639 = arith.constant 0 : index
      %c0_640 = arith.constant 0 : index
      %c0_641 = arith.constant 0 : index
      %772 = vector.load %arg4[%c0_638, %c0_639, %c0_640, %c0_641] : memref<1x1x16x16xf32, #tpu.memory_space<vmem>>, vector<1x1x16x16xf32>
      %773 = vector.shape_cast %772 : vector<1x1x16x16xf32> to vector<16x16xf32>
      %774 = vector.shape_cast %771 : vector<16x16xf32> to vector<1x1x16x16xf32>
      tpu.vector_store %arg4[%c0_638, %c0_639, %c0_640, %c0_641], %774 {strides = array<i32>} : memref<1x1x16x16xf32, #tpu.memory_space<vmem>>, vector<1x1x16x16xf32>,
    } else {
    }
    return
  }
  func.func @transform_0(%arg0: i32, %arg1: i32) -> (i32, i32) {
    %c0_i32 = arith.constant 0 : i32
    %c0_i32_0 = arith.constant 0 : i32
    %c0_i32_1 = arith.constant 0 : i32
    return %c0_i32, %c0_i32_0 : i32, i32
  }
  func.func @transform_1(%arg0: i32, %arg1: i32) -> (i32, i32, i32) {
    %c0_i32 = arith.constant 0 : i32
    %c0_i32_0 = arith.constant 0 : i32
    return %arg0, %arg1, %c0_i32 : i32, i32, i32
  }
  func.func @transform_2(%arg0: i32, %arg1: i32) -> (i32, i32, i32, i32) {
    %c0_i32 = arith.constant 0 : i32
    %c0_i32_0 = arith.constant 0 : i32
    %c0_i32_1 = arith.constant 0 : i32
    %c0_i32_2 = arith.constant 0 : i32
    return %arg0, %c0_i32, %c0_i32_0, %c0_i32_1 : i32, i32, i32, i32
  }
}

</mosaic_0001>

<llo_original>
// kernel: tpu_custom_call.1
$region0: #{tpu_custom_call.1}
  #allocation0 [shape = 'u32[]', space=smem, size = 0x4, offset = 0x4, fixed_abs, tag = 'smem constant byte address 0x4 - core index']
  #allocation1 [shape = 'u32[144,128]{1,0:T(1,128)}', space=vmem, size = 0x12000, scoped, tag = 'internal scratch']
  #allocation2 [shape = 'f32[1,256]{1,0:T(1,128)}', space=vmem, size = 0x400, scoped, tag = 'scratch operand']
  #allocation3 [shape = 'f32[1,256]{1,0:T(1,128)}', space=vmem, size = 0x400, scoped, tag = 'scratch operand']
  #allocation4 [shape = 'f32[22,22]{1,0:T(8,128)}', space=vmem, size = 0x3000, scoped, tag = 'scratch operand']
  #allocation5 [shape = 'f32[22,22]{1,0:T(8,128)}', space=vmem, size = 0x3000, scoped, tag = 'scratch operand']
  #allocation6 [shape = 'f32[7,22,16]{2,1,0:T(8,128)}', space=vmem, size = 0x15000, scoped, tag = 'scratch operand']
  #allocation7 [shape = 'f32[7,22,16]{2,1,0:T(8,128)}', space=vmem, size = 0x15000, scoped, tag = 'scratch operand']
  %s0 = inlined_call_operand.hbm [shape: f32[2,49], index: 0, kind: input, shape index: {}]
  %s1 = inlined_call_operand.hbm [shape: f32[2,4,256], index: 1, kind: input, shape index: {}]
  %s2 = inlined_call_operand.hbm [shape: f32[2,1,16,16], index: 2, kind: output, shape index: {}]
  %s3 = sld [smem:[#allocation0]]
  $region61: #{tpu_custom_call.1} parent=0
    _
  %s5 = ssub.s32 1, %s3
  %s6 = scalar_select 0, %s5, %s3
  $region1: #{tpu_custom_call.1} parent=0
    #allocation8 [shape = 'u8[1024]{0}', space=smem, size = 0x400, scoped, tag = 'input window, operand 0, single buffered']
    #allocation9 [shape = 's32[2]{0}', space=sflag, size = 0x8, scoped, tag = 'scoped memory for tpu_custom_call.1']
    #allocation10 [shape = 's32[2]{0}', space=sflag, size = 0x8, scoped, tag = 'scoped memory for tpu_custom_call.1']
    #allocation11 [shape = 's32[2]{0}', space=sflag, size = 0x8, scoped, tag = 'scoped memory for tpu_custom_call.1']
    #allocation12 [shape = 'u8[8192]{0}', space=vmem, size = 0x2000, scoped, tag = 'input window, operand 1']
    #allocation13 [shape = 'u8[16384]{0}', space=vmem, size = 0x4000, scoped, tag = 'output window, operand 0']
    %7 = vsyncpa [#allocation11], 0
    %8 = vsyncpa [#allocation9], 0
    %s9 = scalar_lea.sflag [#allocation9], 1
    %10 = vsyncpa %s9, 0
    %11 = vsyncpa [#allocation10], 0
    %s12 = scalar_lea.sflag [#allocation10], 1
    %13 = vsyncpa %s12, 0
    loop: start=0, step=1, limit=4
    $region2: #{tpu_custom_call.1} parent=1 // loop_pre_header
      _
    $region3: #{tpu_custom_call.1} parent=1 // loop_header
      %s15 = sphi 0, %s19
      %p16 = scmp.ge.s32.totalorder %s15, 4
      %s22 = sphi 0, %s34
      %s23 = sphi 0, %s30
      %s24 = sphi 0, %s22
      %s25 = sphi 0, %s23
      %s26 = sphi 0, %s24
      %s27 = sphi 0, %s25
      %s35 = sphi 0, %s35
      %s37 = sphi 0, %s35
      %s38 = sphi 0, %s37
      %s52 = sphi 0, %s38
      %s60 = sphi 0, %s62
      %s63 = sphi 0, %s60
      %s64 = sphi 0, %s63
      %s80 = sphi 0, %s64
      %s86 = sphi 0, %s88
      %s89 = sphi 0, %s86
      %s90 = sphi 0, %s89
      %s106 = sphi 0, %s90
    $region4: #{tpu_custom_call.1} parent=1 // loop_header_branch
      %18 = sbr.rel (%p16) target = $region8
    $region5: #{tpu_custom_call.1} parent=1 // loop_body
      %s20 = ssub.s32 %s15, 1
      %s21 = ssub.s32 %s15, 2
      %s28 = sadd.s32 1, %s23
      %p29 = scmp.ge.s32.totalorder %s28, 1
      %s30 = scalar_select %p29, 0, %s28
      %s31 = sadd.s32 1, %s22
      %s32 = scalar_select %p29, %s31, %s22
      %p33 = scmp.ge.s32.totalorder %s32, 2
      %s34 = scalar_select %p33, 0, %s32
      %s36 = sadd.s32 %s35, 1
      %p39 = scmp.eq.s32.totalorder %s15, 1
      %p40 = scmp.ne.s32.totalorder %s35, %s37
      %p41 = scmp.eq.s32.totalorder %s15, 0
      %p42 = por %p40, %p41
      %p43 = scmp.ne.s32.totalorder %s35, %s37
      %p44 = scmp.eq.s32.totalorder %s20, 1
      %p45 = por %p43, %p44
      %p46 = scmp.ne.s32.totalorder %s37, %s38
      %p47 = scmp.eq.s32.totalorder %s20, 0
      %p48 = por %p46, %p47
      %p49 = scmp.ne.s32.totalorder %s37, %s38
      %p50 = scmp.eq.s32.totalorder %s21, 1
      %p51 = por %p49, %p50
      %p53 = scmp.ne.s32.totalorder %s38, %s52
      %p54 = scmp.eq.s32.totalorder %s21, 0
      %p55 = por %p53, %p54
      %s56 = ssub.s32 %s22, %s34
      %s57 = ssub.s32 %s23, %s30
      %s58 = sor.u32 %s56, %s57
      %p59 = scmp.eq.s32.totalorder %s58, 0
      %s61 = sadd.s32 %s60, 1
      %s62 = scalar_select %p59, %s60, %s61
      %p65 = pneg %p59
      %p66 = scmp.eq.s32.totalorder %s15, 1
      %p67 = por %p65, %p66
      %p68 = scmp.ne.s32.totalorder %s60, %s63
      %p69 = scmp.eq.s32.totalorder %s15, 0
      %p70 = por %p68, %p69
      %p71 = scmp.ne.s32.totalorder %s60, %s63
      %p72 = scmp.eq.s32.totalorder %s20, 1
      %p73 = por %p71, %p72
      %p74 = scmp.ne.s32.totalorder %s63, %s64
      %p75 = scmp.eq.s32.totalorder %s20, 0
      %p76 = por %p74, %p75
      %p77 = scmp.ne.s32.totalorder %s63, %s64
      %p78 = scmp.eq.s32.totalorder %s21, 1
      %p79 = por %p77, %p78
      %p81 = scmp.ne.s32.totalorder %s64, %s80
      %p82 = scmp.eq.s32.totalorder %s21, 0
      %p83 = por %p81, %p82
      %s84 = ssub.s32 %s22, %s34
      %p85 = scmp.eq.s32.totalorder %s84, 0
      %s87 = sadd.s32 %s86, 1
      %s88 = scalar_select %p85, %s86, %s87
      %p91 = pneg %p85
      %p92 = scmp.eq.s32.totalorder %s15, 1
      %p93 = por %p91, %p92
      %p94 = scmp.ne.s32.totalorder %s86, %s89
      %p95 = scmp.eq.s32.totalorder %s15, 0
      %p96 = por %p94, %p95
      %p97 = scmp.ne.s32.totalorder %s86, %s89
      %p98 = scmp.eq.s32.totalorder %s20, 1
      %p99 = por %p97, %p98
      %p100 = scmp.ne.s32.totalorder %s89, %s90
      %p101 = scmp.eq.s32.totalorder %s20, 0
      %p102 = por %p100, %p101
      %p103 = scmp.ne.s32.totalorder %s89, %s90
      %p104 = scmp.eq.s32.totalorder %s21, 1
      %p105 = por %p103, %p104
      %p107 = scmp.ne.s32.totalorder %s90, %s106
      %p108 = scmp.eq.s32.totalorder %s21, 0
      %p109 = por %p107, %p108
      %p110 = scmp.le.s32.totalorder 1, %s15
      %p111 = scmp.lt.s32.totalorder %s15, 3
      %p112 = pnand %p110, %p111
      %p113 = pneg %p112
      // Predicated region
      $region9: #{tpu_custom_call.1} parent=5 // pred_check
        _
      $region10: #{tpu_custom_call.1} parent=5 // pred_check_branch
        %115 = sbr.rel (%p112) target = $region12
      $region11: #{tpu_custom_call.1} parent=5 // pred_region
        %s116 = ssub.s32 %s15, 1
        // Predicated region
        $region13: #{tpu_custom_call.1} parent=11 // pred_check
          %p117 = pneg %p48
        $region14: #{tpu_custom_call.1} parent=11 // pred_check_branch
          %119 = sbr.rel (%p117) target = $region16
        $region15: #{tpu_custom_call.1} parent=11 // pred_region
          %s121 = ssub.s32 32, 32
          %122 = vsyncadd [#allocation11], %s121
          %125 = dma.hbm_to_smem %s0, 32, [#allocation8], [#allocation11]
        $region16: #{tpu_custom_call.1} parent=11 // pred_fallthru
          _
      $region12: #{tpu_custom_call.1} parent=5 // pred_fallthru
        _
      %p126 = scmp.lt.s32.totalorder %s15, 2
      // Predicated region
      $region17: #{tpu_custom_call.1} parent=5 // pred_check
        %p127 = pneg %p126
      $region18: #{tpu_custom_call.1} parent=5 // pred_check_branch
        %129 = sbr.rel (%p127) target = $region20
      $region19: #{tpu_custom_call.1} parent=5 // pred_region
        // Predicated region
        $region21: #{tpu_custom_call.1} parent=19 // pred_check
          %p130 = pneg %p70
        $region22: #{tpu_custom_call.1} parent=19 // pred_check_branch
          %132 = sbr.rel (%p130) target = $region24
        $region23: #{tpu_custom_call.1} parent=19 // pred_region
          %s133 = sand.u32 %s60, 1
          %s134 = scalar_lea.sflag [#allocation9], %s133
          %s135 = sand.u32 %s60, 1
          %s136 = smul.addr %s135, 8
          %s137 = scalar_lea.vmem [#allocation12], %s136
          %s139 = ssub.s32 128, 128
          %140 = vsyncadd %s134, %s139
          %s141 = smul.addr %s23, 2
          %s142 = smul.addr %s22, 2
          %s143 = sadd.s32 %s141, %s142
          %s144 = smul.addr %s143, 64
          %s145 = scalar_lea.hbm %s1, %s144
          %s147 = sshll.u32 %s137, 4
          %s148 = int_to_ptr.vmem [resolvable:$true] %s147
          %150 = dma.hbm_to_vmem [thread:$0]  %s145, 128, %s148, %s134
        $region24: #{tpu_custom_call.1} parent=19 // pred_fallthru
          _
      $region20: #{tpu_custom_call.1} parent=5 // pred_fallthru
        _
      %p151 = scmp.le.s32.totalorder 1, %s15
      %p152 = scmp.lt.s32.totalorder %s15, 3
      %p153 = pnand %p151, %p152
      %p154 = pneg %p153
      // Predicated region
      $region25: #{tpu_custom_call.1} parent=5 // pred_check
        _
      $region26: #{tpu_custom_call.1} parent=5 // pred_check_branch
        %156 = sbr.rel (%p153) target = $region28
      $region27: #{tpu_custom_call.1} parent=5 // pred_region
        %s157 = ssub.s32 %s15, 1
        // Predicated region
        $region29: #{tpu_custom_call.1} parent=27 // pred_check
          %p158 = pneg %p48
        $region30: #{tpu_custom_call.1} parent=27 // pred_check_branch
          %160 = sbr.rel (%p158) target = $region32
        $region31: #{tpu_custom_call.1} parent=27 // pred_region
          %161 = dma.done [#allocation11], 32
        $region32: #{tpu_custom_call.1} parent=27 // pred_fallthru
          _
        %s162 = sand.u32 %s63, 1
        %s163 = scalar_lea.sflag [#allocation9], %s162
        %s164 = sand.u32 %s63, 1
        %s165 = smul.addr %s164, 8
        %s166 = scalar_lea.vmem [#allocation12], %s165
        // Predicated region
        $region33: #{tpu_custom_call.1} parent=27 // pred_check
          %p167 = pneg %p76
        $region34: #{tpu_custom_call.1} parent=27 // pred_check_branch
          %169 = sbr.rel (%p167) target = $region36
        $region35: #{tpu_custom_call.1} parent=27 // pred_region
          %170 = dma.done %s163, 128
        $region36: #{tpu_custom_call.1} parent=27 // pred_fallthru
          _
        %171 = sfence
        %p172 = pneg %p48
        %p173 = pneg %p45
        %s174 = sand.u32 %s63, 1
        %s175 = scalar_lea.sflag [#allocation9], %s174
        %s176 = sand.u32 %s63, 1
        %s177 = smul.addr %s176, 8
        %s178 = scalar_lea.vmem [#allocation12], %s177
        %p179 = pneg %p76
        %p180 = pneg %p73
        %p181 = pneg %p102
        %p182 = pneg %p99
        %s183 = sand.u32 %s89, 1
        %s184 = scalar_lea.sflag [#allocation10], %s183
        %s185 = sand.u32 %s89, 1
        %s186 = smul.addr %s185, 16
        %s187 = scalar_lea.vmem [#allocation13], %s186
        %v188 = vld [vmem:[%s166] sm:$0xff]
        %v190 = vcombine.high %v188, %v188
        %vm192 = vcmask 1043456
        %v193 = vsel %vm192, %v188, 0.0
        %v194 = vrot.slane %v193, 4
        %v195 = vadd.f32 %v193, %v194
        %v196 = vrot.slane %v195, 2
        %v197 = vadd.f32 %v195, %v196
        %v198 = vrot.slane %v197, 1
        %v199 = vadd.f32 %v197, %v198
        %v200 = vsel %vm192, %v190, 0.0
        %v201 = vrot.slane %v200, 4
        %v202 = vadd.f32 %v200, %v201
        %v203 = vrot.slane %v202, 2
        %v204 = vadd.f32 %v202, %v203
        %v205 = vrot.slane %v204, 1
        %v206 = vadd.f32 %v204, %v205
        %v207 = vsel %vm192, %v188, -inf
        %v208 = vrot.slane %v207, 4
        %v209 = vmax.f32 %v207, %v208
        %v210 = vrot.slane %v209, 2
        %v211 = vmax.f32 %v209, %v210
        %v212 = vrot.slane %v211, 1
        %v213 = vmax.f32 %v211, %v212
        %v214 = vsel %vm192, %v190, -inf
        %v215 = vrot.slane %v214, 4
        %v216 = vmax.f32 %v214, %v215
        %v217 = vrot.slane %v216, 2
        %v218 = vmax.f32 %v216, %v217
        %v219 = vrot.slane %v218, 1
        %v220 = vmax.f32 %v218, %v219
        %p221 = scmp.eq.s32.totalorder %s25, 0
        // Predicated region
        $region37: #{tpu_custom_call.1} parent=27 // pred_check
          %p222 = pneg %p221
        $region38: #{tpu_custom_call.1} parent=27 // pred_check_branch
          %224 = sbr.rel (%p222) target = $region40
        $region39: #{tpu_custom_call.1} parent=27 // pred_region
          %v227 = vcombine.low %v199, %v206
          %v229 = vunpack.c.l.s4 1966171168
          %v230 = vunpack.c.0.s8 %v229
          %v231 = vlaneseq
          %v232 = vshrl.u32 %v231, 7
          %v233 = vsub.s32 %v230, %v232
          %v234 = vrot.slane %v227, %v233
          %v236 = vunpack.c.l.s4 1966171168
          %v237 = vunpack.c.0.s8 %v236
          %v238 = vlaneseq
          %v239 = vshrl.u32 %v238, 7
          %v240 = vsub.s32 %v237, %v239
          %v241 = vrot.slane %v234, %v240
          %v243 = vlaneseq
          %vm244 = vcmp.ge.s32.totalorder %v243, 0
          %vm245 = vcmp.lt.s32.totalorder %v243, 256
          %vm246 = vmand %vm244, %vm245
          %247 = vst.msk [vmem:[#allocation2] sm:$0x3] %vm246, %v241
          %v250 = vcombine.low %v213, %v220
          %v252 = vunpack.c.l.s4 1966171168
          %v253 = vunpack.c.0.s8 %v252
          %v254 = vlaneseq
          %v255 = vshrl.u32 %v254, 7
          %v256 = vsub.s32 %v253, %v255
          %v257 = vrot.slane %v250, %v256
          %v259 = vunpack.c.l.s4 1966171168
          %v260 = vunpack.c.0.s8 %v259
          %v261 = vlaneseq
          %v262 = vshrl.u32 %v261, 7
          %v263 = vsub.s32 %v260, %v262
          %v264 = vrot.slane %v257, %v263
          %266 = vst.msk [vmem:[#allocation3] sm:$0x3] %vm246, %v264
        $region40: #{tpu_custom_call.1} parent=27 // pred_fallthru
          _
        %p267 = scmp.gt.s32.totalorder %s25, 0
        // Predicated region
        $region41: #{tpu_custom_call.1} parent=27 // pred_check
          %p268 = pneg %p267
        $region42: #{tpu_custom_call.1} parent=27 // pred_check_branch
          %270 = sbr.rel (%p268) target = $region44
        $region43: #{tpu_custom_call.1} parent=27 // pred_region
          %v271 = vld [vmem:[#allocation2] sm:$0x3]
          %v274 = vcombine.low %v199, %v206
          %v276 = vunpack.c.l.s4 1966171168
          %v277 = vunpack.c.0.s8 %v276
          %v278 = vlaneseq
          %v279 = vshrl.u32 %v278, 7
          %v280 = vsub.s32 %v277, %v279
          %v281 = vrot.slane %v274, %v280
          %v283 = vunpack.c.l.s4 1966171168
          %v284 = vunpack.c.0.s8 %v283
          %v285 = vlaneseq
          %v286 = vshrl.u32 %v285, 7
          %v287 = vsub.s32 %v284, %v286
          %v288 = vrot.slane %v281, %v287
          %v290 = vadd.f32 %v271, %v288
          %v291 = vlaneseq
          %vm292 = vcmp.ge.s32.totalorder %v291, 0
          %vm293 = vcmp.lt.s32.totalorder %v291, 256
          %vm294 = vmand %vm292, %vm293
          %295 = vst.msk [vmem:[#allocation2] sm:$0x3] %vm294, %v290
          %v296 = vld [vmem:[#allocation3] sm:$0x3]
          %v299 = vcombine.low %v213, %v220
          %v301 = vunpack.c.l.s4 1966171168
          %v302 = vunpack.c.0.s8 %v301
          %v303 = vlaneseq
          %v304 = vshrl.u32 %v303, 7
          %v305 = vsub.s32 %v302, %v304
          %v306 = vrot.slane %v299, %v305
          %v308 = vunpack.c.l.s4 1966171168
          %v309 = vunpack.c.0.s8 %v308
          %v310 = vlaneseq
          %v311 = vshrl.u32 %v310, 7
          %v312 = vsub.s32 %v309, %v311
          %v313 = vrot.slane %v306, %v312
          %v315 = vmax.f32 %v296, %v313
          %316 = vst.msk [vmem:[#allocation3] sm:$0x3] %vm294, %v315
        $region44: #{tpu_custom_call.1} parent=27 // pred_fallthru
          _
        // Predicated region
        $region45: #{tpu_custom_call.1} parent=27 // pred_check
          %p317 = pneg %p221
        $region46: #{tpu_custom_call.1} parent=27 // pred_check_branch
          %319 = sbr.rel (%p317) target = $region48
        $region47: #{tpu_custom_call.1} parent=27 // pred_region
          %vm320 = vcmask 179200
          %321 = vst.msk [vmem:[#allocation4] sm:$0xff] %vm320, 0.0
          %322 = vst.msk [vmem:[#allocation4 + $0x8] sm:$0xff] %vm320, 0.0
          %vm323 = vcmask 177152
          %324 = vst.msk [vmem:[#allocation4 + $0x10] sm:$0x3f] %vm323, 0.0
          %325 = vst.msk [vmem:[#allocation5] sm:$0xff] %vm320, 0.0
          %326 = vst.msk [vmem:[#allocation5 + $0x8] sm:$0xff] %vm320, 0.0
          %327 = vst.msk [vmem:[#allocation5 + $0x10] sm:$0x3f] %vm323, 0.0
          %v328 = vld [vmem:[#allocation2] sm:$0x1]
          %v329 = vmul.f32 %v328, 0.25
          %v331 = vlaneseq
          %v332 = vshrl.u32 %v331, 7
          %v333 = vsub.s32 0, %v332
          %v334 = vrot.slane %v329, %v333
          %335 = vrot.lane.b32.xlu0 %v334, 3
          %v336 = vpop.permute.xlu0 %335
          %vm338 = vcmask 147480
          %339 = vst.msk [vmem:[#allocation4 + $0x3] sm:$0x1] %vm338, %v336
          %v340 = vld [vmem:[#allocation3] sm:$0x1]
          %v342 = vlaneseq
          %v343 = vshrl.u32 %v342, 7
          %v344 = vsub.s32 0, %v343
          %v345 = vrot.slane %v340, %v344
          %346 = vrot.lane.b32.xlu0 %v345, 3
          %v347 = vpop.permute.xlu0 %346
          %349 = vst.msk [vmem:[#allocation5 + $0x3] sm:$0x1] %vm338, %v347
          %v350 = vld [vmem:[#allocation2] sm:$0x1]
          %v351 = vmul.f32 %v350, 0.25
          %v353 = vlaneseq
          %v354 = vshrl.u32 %v353, 7
          %v355 = vsub.s32 0, %v354
          %v356 = vrot.slane %v351, %v355
          %357 = vrot.lane.b32.xlu0 %v356, 115
          %v358 = vpop.permute.xlu0 %357
          %360 = vst.msk [vmem:[#allocation4 + $0x4] sm:$0x1] %vm338, %v358
          %v361 = vld [vmem:[#allocation3] sm:$0x1]
          %v363 = vlaneseq
          %v364 = vshrl.u32 %v363, 7
          %v365 = vsub.s32 0, %v364
          %v366 = vrot.slane %v361, %v365
          %367 = vrot.lane.b32.xlu0 %v366, 115
          %v368 = vpop.permute.xlu0 %367
          %370 = vst.msk [vmem:[#allocation5 + $0x4] sm:$0x1] %vm338, %v368
          %v371 = vld [vmem:[#allocation2] sm:$0x1]
          %v372 = vmul.f32 %v371, 0.25
          %v374 = vlaneseq
          %v375 = vshrl.u32 %v374, 7
          %v376 = vsub.s32 0, %v375
          %v377 = vrot.slane %v372, %v376
          %378 = vrot.lane.b32.xlu0 %v377, 99
          %v379 = vpop.permute.xlu0 %378
          %381 = vst.msk [vmem:[#allocation4 + $0x5] sm:$0x1] %vm338, %v379
          %v382 = vld [vmem:[#allocation3] sm:$0x1]
          %v384 = vlaneseq
          %v385 = vshrl.u32 %v384, 7
          %v386 = vsub.s32 0, %v385
          %v387 = vrot.slane %v382, %v386
          %388 = vrot.lane.b32.xlu0 %v387, 99
          %v389 = vpop.permute.xlu0 %388
          %391 = vst.msk [vmem:[#allocation5 + $0x5] sm:$0x1] %vm338, %v389
          %v392 = vld [vmem:[#allocation2] sm:$0x1]
          %v393 = vmul.f32 %v392, 0.25
          %v395 = vlaneseq
          %v396 = vshrl.u32 %v395, 7
          %v397 = vsub.s32 0, %v396
          %v398 = vrot.slane %v393, %v397
          %399 = vrot.lane.b32.xlu0 %v398, 83
          %v400 = vpop.permute.xlu0 %399
          %402 = vst.msk [vmem:[#allocation4 + $0x6] sm:$0x1] %vm338, %v400
          %v403 = vld [vmem:[#allocation3] sm:$0x1]
          %v405 = vlaneseq
          %v406 = vshrl.u32 %v405, 7
          %v407 = vsub.s32 0, %v406
          %v408 = vrot.slane %v403, %v407
          %409 = vrot.lane.b32.xlu0 %v408, 83
          %v410 = vpop.permute.xlu0 %409
          %412 = vst.msk [vmem:[#allocation5 + $0x6] sm:$0x1] %vm338, %v410
          %v413 = vld [vmem:[#allocation2] sm:$0x1]
          %v414 = vmul.f32 %v413, 0.25
          %v416 = vlaneseq
          %v417 = vshrl.u32 %v416, 7
          %v418 = vsub.s32 0, %v417
          %v419 = vrot.slane %v414, %v418
          %420 = vrot.lane.b32.xlu0 %v419, 67
          %v421 = vpop.permute.xlu0 %420
          %423 = vst.msk [vmem:[#allocation4 + $0x7] sm:$0x1] %vm338, %v421
          %v424 = vld [vmem:[#allocation3] sm:$0x1]
          %v426 = vlaneseq
          %v427 = vshrl.u32 %v426, 7
          %v428 = vsub.s32 0, %v427
          %v429 = vrot.slane %v424, %v428
          %430 = vrot.lane.b32.xlu0 %v429, 67
          %v431 = vpop.permute.xlu0 %430
          %433 = vst.msk [vmem:[#allocation5 + $0x7] sm:$0x1] %vm338, %v431
          %v434 = vld [vmem:[#allocation2] sm:$0x1]
          %v435 = vmul.f32 %v434, 0.25
          %v437 = vlaneseq
          %v438 = vshrl.u32 %v437, 7
          %v439 = vsub.s32 0, %v438
          %v440 = vrot.slane %v435, %v439
          %441 = vrot.lane.b32.xlu0 %v440, 51
          %v442 = vpop.permute.xlu0 %441
          %444 = vst.msk [vmem:[#allocation4 + $0x8] sm:$0x1] %vm338, %v442
          %v445 = vld [vmem:[#allocation3] sm:$0x1]
          %v447 = vlaneseq
          %v448 = vshrl.u32 %v447, 7
          %v449 = vsub.s32 0, %v448
          %v450 = vrot.slane %v445, %v449
          %451 = vrot.lane.b32.xlu0 %v450, 51
          %v452 = vpop.permute.xlu0 %451
          %454 = vst.msk [vmem:[#allocation5 + $0x8] sm:$0x1] %vm338, %v452
          %v455 = vld [vmem:[#allocation2] sm:$0x1]
          %v456 = vmul.f32 %v455, 0.25
          %v458 = vlaneseq
          %v459 = vshrl.u32 %v458, 7
          %v460 = vsub.s32 0, %v459
          %v461 = vrot.slane %v456, %v460
          %462 = vrot.lane.b32.xlu0 %v461, 35
          %v463 = vpop.permute.xlu0 %462
          %465 = vst.msk [vmem:[#allocation4 + $0x9] sm:$0x1] %vm338, %v463
          %v466 = vld [vmem:[#allocation3] sm:$0x1]
          %v468 = vlaneseq
          %v469 = vshrl.u32 %v468, 7
          %v470 = vsub.s32 0, %v469
          %v471 = vrot.slane %v466, %v470
          %472 = vrot.lane.b32.xlu0 %v471, 35
          %v473 = vpop.permute.xlu0 %472
          %475 = vst.msk [vmem:[#allocation5 + $0x9] sm:$0x1] %vm338, %v473
          %v476 = vld [vmem:[#allocation2] sm:$0x1]
          %v477 = vmul.f32 %v476, 0.25
          %v479 = vlaneseq
          %v480 = vshrl.u32 %v479, 7
          %v481 = vsub.s32 0, %v480
          %v482 = vrot.slane %v477, %v481
          %483 = vrot.lane.b32.xlu0 %v482, 19
          %v484 = vpop.permute.xlu0 %483
          %486 = vst.msk [vmem:[#allocation4 + $0xa] sm:$0x1] %vm338, %v484
          %v487 = vld [vmem:[#allocation3] sm:$0x1]
          %v489 = vlaneseq
          %v490 = vshrl.u32 %v489, 7
          %v491 = vsub.s32 0, %v490
          %v492 = vrot.slane %v487, %v491
          %493 = vrot.lane.b32.xlu0 %v492, 19
          %v494 = vpop.permute.xlu0 %493
          %496 = vst.msk [vmem:[#allocation5 + $0xa] sm:$0x1] %vm338, %v494
          %v497 = vld [vmem:[#allocation2 + $0x1] sm:$0x1]
          %v498 = vmul.f32 %v497, 0.25
          %v500 = vlaneseq
          %v501 = vshrl.u32 %v500, 7
          %v502 = vsub.s32 0, %v501
          %v503 = vrot.slane %v498, %v502
          %504 = vrot.lane.b32.xlu0 %v503, 3
          %v505 = vpop.permute.xlu0 %504
          %507 = vst.msk [vmem:[#allocation4 + $0xb] sm:$0x1] %vm338, %v505
          %v508 = vld [vmem:[#allocation3 + $0x1] sm:$0x1]
          %v510 = vlaneseq
          %v511 = vshrl.u32 %v510, 7
          %v512 = vsub.s32 0, %v511
          %v513 = vrot.slane %v508, %v512
          %514 = vrot.lane.b32.xlu0 %v513, 3
          %v515 = vpop.permute.xlu0 %514
          %517 = vst.msk [vmem:[#allocation5 + $0xb] sm:$0x1] %vm338, %v515
          %v518 = vld [vmem:[#allocation2 + $0x1] sm:$0x1]
          %v519 = vmul.f32 %v518, 0.25
          %v521 = vlaneseq
          %v522 = vshrl.u32 %v521, 7
          %v523 = vsub.s32 0, %v522
          %v524 = vrot.slane %v519, %v523
          %525 = vrot.lane.b32.xlu0 %v524, 115
          %v526 = vpop.permute.xlu0 %525
          %528 = vst.msk [vmem:[#allocation4 + $0xc] sm:$0x1] %vm338, %v526
          %v529 = vld [vmem:[#allocation3 + $0x1] sm:$0x1]
          %v531 = vlaneseq
          %v532 = vshrl.u32 %v531, 7
          %v533 = vsub.s32 0, %v532
          %v534 = vrot.slane %v529, %v533
          %535 = vrot.lane.b32.xlu0 %v534, 115
          %v536 = vpop.permute.xlu0 %535
          %538 = vst.msk [vmem:[#allocation5 + $0xc] sm:$0x1] %vm338, %v536
          %v539 = vld [vmem:[#allocation2 + $0x1] sm:$0x1]
          %v540 = vmul.f32 %v539, 0.25
          %v542 = vlaneseq
          %v543 = vshrl.u32 %v542, 7
          %v544 = vsub.s32 0, %v543
          %v545 = vrot.slane %v540, %v544
          %546 = vrot.lane.b32.xlu0 %v545, 99
          %v547 = vpop.permute.xlu0 %546
          %549 = vst.msk [vmem:[#allocation4 + $0xd] sm:$0x1] %vm338, %v547
          %v550 = vld [vmem:[#allocation3 + $0x1] sm:$0x1]
          %v552 = vlaneseq
          %v553 = vshrl.u32 %v552, 7
          %v554 = vsub.s32 0, %v553
          %v555 = vrot.slane %v550, %v554
          %556 = vrot.lane.b32.xlu0 %v555, 99
          %v557 = vpop.permute.xlu0 %556
          %559 = vst.msk [vmem:[#allocation5 + $0xd] sm:$0x1] %vm338, %v557
          %v560 = vld [vmem:[#allocation2 + $0x1] sm:$0x1]
          %v561 = vmul.f32 %v560, 0.25
          %v563 = vlaneseq
          %v564 = vshrl.u32 %v563, 7
          %v565 = vsub.s32 0, %v564
          %v566 = vrot.slane %v561, %v565
          %567 = vrot.lane.b32.xlu0 %v566, 83
          %v568 = vpop.permute.xlu0 %567
          %570 = vst.msk [vmem:[#allocation4 + $0xe] sm:$0x1] %vm338, %v568
          %v571 = vld [vmem:[#allocation3 + $0x1] sm:$0x1]
          %v573 = vlaneseq
          %v574 = vshrl.u32 %v573, 7
          %v575 = vsub.s32 0, %v574
          %v576 = vrot.slane %v571, %v575
          %577 = vrot.lane.b32.xlu0 %v576, 83
          %v578 = vpop.permute.xlu0 %577
          %580 = vst.msk [vmem:[#allocation5 + $0xe] sm:$0x1] %vm338, %v578
          %v581 = vld [vmem:[#allocation2 + $0x1] sm:$0x1]
          %v582 = vmul.f32 %v581, 0.25
          %v584 = vlaneseq
          %v585 = vshrl.u32 %v584, 7
          %v586 = vsub.s32 0, %v585
          %v587 = vrot.slane %v582, %v586
          %588 = vrot.lane.b32.xlu0 %v587, 67
          %v589 = vpop.permute.xlu0 %588
          %591 = vst.msk [vmem:[#allocation4 + $0xf] sm:$0x1] %vm338, %v589
          %v592 = vld [vmem:[#allocation3 + $0x1] sm:$0x1]
          %v594 = vlaneseq
          %v595 = vshrl.u32 %v594, 7
          %v596 = vsub.s32 0, %v595
          %v597 = vrot.slane %v592, %v596
          %598 = vrot.lane.b32.xlu0 %v597, 67
          %v599 = vpop.permute.xlu0 %598
          %601 = vst.msk [vmem:[#allocation5 + $0xf] sm:$0x1] %vm338, %v599
          %v602 = vld [vmem:[#allocation2 + $0x1] sm:$0x1]
          %v603 = vmul.f32 %v602, 0.25
          %v605 = vlaneseq
          %v606 = vshrl.u32 %v605, 7
          %v607 = vsub.s32 0, %v606
          %v608 = vrot.slane %v603, %v607
          %609 = vrot.lane.b32.xlu0 %v608, 51
          %v610 = vpop.permute.xlu0 %609
          %612 = vst.msk [vmem:[#allocation4 + $0x10] sm:$0x1] %vm338, %v610
          %v613 = vld [vmem:[#allocation3 + $0x1] sm:$0x1]
          %v615 = vlaneseq
          %v616 = vshrl.u32 %v615, 7
          %v617 = vsub.s32 0, %v616
          %v618 = vrot.slane %v613, %v617
          %619 = vrot.lane.b32.xlu0 %v618, 51
          %v620 = vpop.permute.xlu0 %619
          %622 = vst.msk [vmem:[#allocation5 + $0x10] sm:$0x1] %vm338, %v620
          %v623 = vld [vmem:[#allocation2 + $0x1] sm:$0x1]
          %v624 = vmul.f32 %v623, 0.25
          %v626 = vlaneseq
          %v627 = vshrl.u32 %v626, 7
          %v628 = vsub.s32 0, %v627
          %v629 = vrot.slane %v624, %v628
          %630 = vrot.lane.b32.xlu0 %v629, 35
          %v631 = vpop.permute.xlu0 %630
          %633 = vst.msk [vmem:[#allocation4 + $0x11] sm:$0x1] %vm338, %v631
          %v634 = vld [vmem:[#allocation3 + $0x1] sm:$0x1]
          %v636 = vlaneseq
          %v637 = vshrl.u32 %v636, 7
          %v638 = vsub.s32 0, %v637
          %v639 = vrot.slane %v634, %v638
          %640 = vrot.lane.b32.xlu0 %v639, 35
          %v641 = vpop.permute.xlu0 %640
          %643 = vst.msk [vmem:[#allocation5 + $0x11] sm:$0x1] %vm338, %v641
          %v644 = vld [vmem:[#allocation2 + $0x1] sm:$0x1]
          %v645 = vmul.f32 %v644, 0.25
          %v647 = vlaneseq
          %v648 = vshrl.u32 %v647, 7
          %v649 = vsub.s32 0, %v648
          %v650 = vrot.slane %v645, %v649
          %651 = vrot.lane.b32.xlu0 %v650, 19
          %v652 = vpop.permute.xlu0 %651
          %654 = vst.msk [vmem:[#allocation4 + $0x12] sm:$0x1] %vm338, %v652
          %v655 = vld [vmem:[#allocation3 + $0x1] sm:$0x1]
          %v657 = vlaneseq
          %v658 = vshrl.u32 %v657, 7
          %v659 = vsub.s32 0, %v658
          %v660 = vrot.slane %v655, %v659
          %661 = vrot.lane.b32.xlu0 %v660, 19
          %v662 = vpop.permute.xlu0 %661
          %664 = vst.msk [vmem:[#allocation5 + $0x12] sm:$0x1] %vm338, %v662
          %v665 = vld [vmem:[#allocation4] sm:$0xff]
          %v666 = vld [vmem:[#allocation4 + $0x8] sm:$0xff]
          %v667 = vld [vmem:[#allocation4 + $0x10] sm:$0x3f]
          %v668 = vld [vmem:[#allocation5] sm:$0xff]
          %v669 = vld [vmem:[#allocation5 + $0x8] sm:$0xff]
          %v670 = vld [vmem:[#allocation5 + $0x10] sm:$0x3f]
          %vm671 = vcmask 130048
          %672 = vst.msk [vmem:[#allocation6] sm:$0xff] %vm671, %v665
          %673 = vst.msk [vmem:[#allocation6 + $0x8] sm:$0xff] %vm671, %v666
          %vm674 = vcmask 128000
          %675 = vst.msk [vmem:[#allocation6 + $0x10] sm:$0x3f] %vm674, %v667
          %676 = vst.msk [vmem:[#allocation7] sm:$0xff] %vm671, %v668
          %677 = vst.msk [vmem:[#allocation7 + $0x8] sm:$0xff] %vm671, %v669
          %678 = vst.msk [vmem:[#allocation7 + $0x10] sm:$0x3f] %vm674, %v670
          %682 = vrot.lane.b32.xlu0 %v665, 127
          %v683 = vpop.permute.xlu0 %682
          %684 = vrot.lane.b32.xlu0 %v666, 127
          %v685 = vpop.permute.xlu0 %684
          %686 = vrot.lane.b32.xlu0 %v667, 127
          %v687 = vpop.permute.xlu0 %686
          %s691 = scalar_lea.vmem [#allocation6], 24
          %692 = vst.msk [vmem:[%s691] sm:$0xff] %vm671, %v683
          %693 = vst.msk [vmem:[%s691 + $0x8] sm:$0xff] %vm671, %v685
          %694 = vst.msk [vmem:[%s691 + $0x10] sm:$0x3f] %vm674, %v687
          %698 = vrot.lane.b32.xlu0 %v668, 127
          %v699 = vpop.permute.xlu0 %698
          %700 = vrot.lane.b32.xlu0 %v669, 127
          %v701 = vpop.permute.xlu0 %700
          %702 = vrot.lane.b32.xlu0 %v670, 127
          %v703 = vpop.permute.xlu0 %702
          %s707 = scalar_lea.vmem [#allocation7], 24
          %708 = vst.msk [vmem:[%s707] sm:$0xff] %vm671, %v699
          %709 = vst.msk [vmem:[%s707 + $0x8] sm:$0xff] %vm671, %v701
          %710 = vst.msk [vmem:[%s707 + $0x10] sm:$0x3f] %vm674, %v703
          %711 = vrot.lane.b32.xlu0 %v665, 126
          %v712 = vpop.permute.xlu0 %711
          %713 = vrot.lane.b32.xlu0 %v666, 126
          %v714 = vpop.permute.xlu0 %713
          %715 = vrot.lane.b32.xlu0 %v667, 126
          %v716 = vpop.permute.xlu0 %715
          %s720 = scalar_lea.vmem [#allocation6], 48
          %721 = vst.msk [vmem:[%s720] sm:$0xff] %vm671, %v712
          %722 = vst.msk [vmem:[%s720 + $0x8] sm:$0xff] %vm671, %v714
          %723 = vst.msk [vmem:[%s720 + $0x10] sm:$0x3f] %vm674, %v716
          %724 = vrot.lane.b32.xlu0 %v668, 126
          %v725 = vpop.permute.xlu0 %724
          %726 = vrot.lane.b32.xlu0 %v669, 126
          %v727 = vpop.permute.xlu0 %726
          %728 = vrot.lane.b32.xlu0 %v670, 126
          %v729 = vpop.permute.xlu0 %728
          %s733 = scalar_lea.vmem [#allocation7], 48
          %734 = vst.msk [vmem:[%s733] sm:$0xff] %vm671, %v725
          %735 = vst.msk [vmem:[%s733 + $0x8] sm:$0xff] %vm671, %v727
          %736 = vst.msk [vmem:[%s733 + $0x10] sm:$0x3f] %vm674, %v729
          %737 = vrot.lane.b32.xlu0 %v665, 125
          %v738 = vpop.permute.xlu0 %737
          %739 = vrot.lane.b32.xlu0 %v666, 125
          %v740 = vpop.permute.xlu0 %739
          %741 = vrot.lane.b32.xlu0 %v667, 125
          %v742 = vpop.permute.xlu0 %741
          %s746 = scalar_lea.vmem [#allocation6], 72
          %747 = vst.msk [vmem:[%s746] sm:$0xff] %vm671, %v738
          %748 = vst.msk [vmem:[%s746 + $0x8] sm:$0xff] %vm671, %v740
          %749 = vst.msk [vmem:[%s746 + $0x10] sm:$0x3f] %vm674, %v742
          %750 = vrot.lane.b32.xlu0 %v668, 125
          %v751 = vpop.permute.xlu0 %750
          %752 = vrot.lane.b32.xlu0 %v669, 125
          %v753 = vpop.permute.xlu0 %752
          %754 = vrot.lane.b32.xlu0 %v670, 125
          %v755 = vpop.permute.xlu0 %754
          %s759 = scalar_lea.vmem [#allocation7], 72
          %760 = vst.msk [vmem:[%s759] sm:$0xff] %vm671, %v751
          %761 = vst.msk [vmem:[%s759 + $0x8] sm:$0xff] %vm671, %v753
          %762 = vst.msk [vmem:[%s759 + $0x10] sm:$0x3f] %vm674, %v755
          %763 = vrot.lane.b32.xlu0 %v665, 124
          %v764 = vpop.permute.xlu0 %763
          %765 = vrot.lane.b32.xlu0 %v666, 124
          %v766 = vpop.permute.xlu0 %765
          %767 = vrot.lane.b32.xlu0 %v667, 124
          %v768 = vpop.permute.xlu0 %767
          %s772 = scalar_lea.vmem [#allocation6], 96
          %773 = vst.msk [vmem:[%s772] sm:$0xff] %vm671, %v764
          %774 = vst.msk [vmem:[%s772 + $0x8] sm:$0xff] %vm671, %v766
          %775 = vst.msk [vmem:[%s772 + $0x10] sm:$0x3f] %vm674, %v768
          %776 = vrot.lane.b32.xlu0 %v668, 124
          %v777 = vpop.permute.xlu0 %776
          %778 = vrot.lane.b32.xlu0 %v669, 124
          %v779 = vpop.permute.xlu0 %778
          %780 = vrot.lane.b32.xlu0 %v670, 124
          %v781 = vpop.permute.xlu0 %780
          %s785 = scalar_lea.vmem [#allocation7], 96
          %786 = vst.msk [vmem:[%s785] sm:$0xff] %vm671, %v777
          %787 = vst.msk [vmem:[%s785 + $0x8] sm:$0xff] %vm671, %v779
          %788 = vst.msk [vmem:[%s785 + $0x10] sm:$0x3f] %vm674, %v781
          %789 = vrot.lane.b32.xlu0 %v665, 123
          %v790 = vpop.permute.xlu0 %789
          %791 = vrot.lane.b32.xlu0 %v666, 123
          %v792 = vpop.permute.xlu0 %791
          %793 = vrot.lane.b32.xlu0 %v667, 123
          %v794 = vpop.permute.xlu0 %793
          %s798 = scalar_lea.vmem [#allocation6], 120
          %799 = vst.msk [vmem:[%s798] sm:$0xff] %vm671, %v790
          %800 = vst.msk [vmem:[%s798 + $0x8] sm:$0xff] %vm671, %v792
          %801 = vst.msk [vmem:[%s798 + $0x10] sm:$0x3f] %vm674, %v794
          %802 = vrot.lane.b32.xlu0 %v668, 123
          %v803 = vpop.permute.xlu0 %802
          %804 = vrot.lane.b32.xlu0 %v669, 123
          %v805 = vpop.permute.xlu0 %804
          %806 = vrot.lane.b32.xlu0 %v670, 123
          %v807 = vpop.permute.xlu0 %806
          %s811 = scalar_lea.vmem [#allocation7], 120
          %812 = vst.msk [vmem:[%s811] sm:$0xff] %vm671, %v803
          %813 = vst.msk [vmem:[%s811 + $0x8] sm:$0xff] %vm671, %v805
          %814 = vst.msk [vmem:[%s811 + $0x10] sm:$0x3f] %vm674, %v807
          %815 = vrot.lane.b32.xlu0 %v665, 122
          %v816 = vpop.permute.xlu0 %815
          %817 = vrot.lane.b32.xlu0 %v666, 122
          %v818 = vpop.permute.xlu0 %817
          %819 = vrot.lane.b32.xlu0 %v667, 122
          %v820 = vpop.permute.xlu0 %819
          %s824 = scalar_lea.vmem [#allocation6], 144
          %825 = vst.msk [vmem:[%s824] sm:$0xff] %vm671, %v816
          %826 = vst.msk [vmem:[%s824 + $0x8] sm:$0xff] %vm671, %v818
          %827 = vst.msk [vmem:[%s824 + $0x10] sm:$0x3f] %vm674, %v820
          %828 = vrot.lane.b32.xlu0 %v668, 122
          %v829 = vpop.permute.xlu0 %828
          %830 = vrot.lane.b32.xlu0 %v669, 122
          %v831 = vpop.permute.xlu0 %830
          %832 = vrot.lane.b32.xlu0 %v670, 122
          %v833 = vpop.permute.xlu0 %832
          %s837 = scalar_lea.vmem [#allocation7], 144
          %838 = vst.msk [vmem:[%s837] sm:$0xff] %vm671, %v829
          %839 = vst.msk [vmem:[%s837 + $0x8] sm:$0xff] %vm671, %v831
          %840 = vst.msk [vmem:[%s837 + $0x10] sm:$0x3f] %vm674, %v833
          %s841 = sld [smem:[#allocation8]]
          %v842 = vld [vmem:[#allocation6] sm:$0xff]
          %v843 = vld [vmem:[#allocation6 + $0x8] sm:$0xff]
          %v844 = vstv %s841
          %v845 = vmul.f32 %v844, %v842
          %v846 = vmul.f32 %v844, %v843
          %s847 = sld [smem:[#allocation8 + $0x80]]
          %v848 = vld [vmem:[#allocation7] sm:$0xff]
          %v849 = vld [vmem:[#allocation7 + $0x8] sm:$0xff]
          %v850 = vstv %s847
          %v851 = vmul.f32 %v850, %v848
          %v852 = vmul.f32 %v850, %v849
          %v853 = vadd.f32 %v845, 0.0
          %v854 = vadd.f32 %v846, 0.0
          %v855 = vadd.f32 %v851, 0.0
          %v856 = vadd.f32 %v852, 0.0
          %s857 = sld [smem:[#allocation8 + $0x1]]
          %v858 = vld [vmem:[%s691] sm:$0xff]
          %v859 = vld [vmem:[%s691 + $0x8] sm:$0xff]
          %v860 = vstv %s857
          %v861 = vmul.f32 %v860, %v858
          %v862 = vmul.f32 %v860, %v859
          %s863 = sld [smem:[#allocation8 + $0x81]]
          %v864 = vld [vmem:[%s707] sm:$0xff]
          %v865 = vld [vmem:[%s707 + $0x8] sm:$0xff]
          %v866 = vstv %s863
          %v867 = vmul.f32 %v866, %v864
          %v868 = vmul.f32 %v866, %v865
          %v869 = vadd.f32 %v853, %v861
          %v870 = vadd.f32 %v854, %v862
          %v871 = vadd.f32 %v855, %v867
          %v872 = vadd.f32 %v856, %v868
          %s873 = sld [smem:[#allocation8 + $0x2]]
          %v874 = vld [vmem:[%s720] sm:$0xff]
          %v875 = vld [vmem:[%s720 + $0x8] sm:$0xff]
          %v876 = vstv %s873
          %v877 = vmul.f32 %v876, %v874
          %v878 = vmul.f32 %v876, %v875
          %s879 = sld [smem:[#allocation8 + $0x82]]
          %v880 = vld [vmem:[%s733] sm:$0xff]
          %v881 = vld [vmem:[%s733 + $0x8] sm:$0xff]
          %v882 = vstv %s879
          %v883 = vmul.f32 %v882, %v880
          %v884 = vmul.f32 %v882, %v881
          %v885 = vadd.f32 %v869, %v877
          %v886 = vadd.f32 %v870, %v878
          %v887 = vadd.f32 %v871, %v883
          %v888 = vadd.f32 %v872, %v884
          %s889 = sld [smem:[#allocation8 + $0x3]]
          %v890 = vld [vmem:[%s746] sm:$0xff]
          %v891 = vld [vmem:[%s746 + $0x8] sm:$0xff]
          %v892 = vstv %s889
          %v893 = vmul.f32 %v892, %v890
          %v894 = vmul.f32 %v892, %v891
          %s895 = sld [smem:[#allocation8 + $0x83]]
          %v896 = vld [vmem:[%s759] sm:$0xff]
          %v897 = vld [vmem:[%s759 + $0x8] sm:$0xff]
          %v898 = vstv %s895
          %v899 = vmul.f32 %v898, %v896
          %v900 = vmul.f32 %v898, %v897
          %v901 = vadd.f32 %v885, %v893
          %v902 = vadd.f32 %v886, %v894
          %v903 = vadd.f32 %v887, %v899
          %v904 = vadd.f32 %v888, %v900
          %s905 = sld [smem:[#allocation8 + $0x4]]
          %v906 = vld [vmem:[%s772] sm:$0xff]
          %v907 = vld [vmem:[%s772 + $0x8] sm:$0xff]
          %v908 = vstv %s905
          %v909 = vmul.f32 %v908, %v906
          %v910 = vmul.f32 %v908, %v907
          %s911 = sld [smem:[#allocation8 + $0x84]]
          %v912 = vld [vmem:[%s785] sm:$0xff]
          %v913 = vld [vmem:[%s785 + $0x8] sm:$0xff]
          %v914 = vstv %s911
          %v915 = vmul.f32 %v914, %v912
          %v916 = vmul.f32 %v914, %v913
          %v917 = vadd.f32 %v901, %v909
          %v918 = vadd.f32 %v902, %v910
          %v919 = vadd.f32 %v903, %v915
          %v920 = vadd.f32 %v904, %v916
          %s921 = sld [smem:[#allocation8 + $0x5]]
          %v922 = vld [vmem:[%s798] sm:$0xff]
          %v923 = vld [vmem:[%s798 + $0x8] sm:$0xff]
          %v924 = vstv %s921
          %v925 = vmul.f32 %v924, %v922
          %v926 = vmul.f32 %v924, %v923
          %s927 = sld [smem:[#allocation8 + $0x85]]
          %v928 = vld [vmem:[%s811] sm:$0xff]
          %v929 = vld [vmem:[%s811 + $0x8] sm:$0xff]
          %v930 = vstv %s927
          %v931 = vmul.f32 %v930, %v928
          %v932 = vmul.f32 %v930, %v929
          %v933 = vadd.f32 %v917, %v925
          %v934 = vadd.f32 %v918, %v926
          %v935 = vadd.f32 %v919, %v931
          %v936 = vadd.f32 %v920, %v932
          %s937 = sld [smem:[#allocation8 + $0x6]]
          %v938 = vld [vmem:[%s824] sm:$0xff]
          %v939 = vld [vmem:[%s824 + $0x8] sm:$0xff]
          %v940 = vstv %s937
          %v941 = vmul.f32 %v940, %v938
          %v942 = vmul.f32 %v940, %v939
          %s943 = sld [smem:[#allocation8 + $0x86]]
          %v944 = vld [vmem:[%s837] sm:$0xff]
          %v945 = vld [vmem:[%s837 + $0x8] sm:$0xff]
          %v946 = vstv %s943
          %v947 = vmul.f32 %v946, %v944
          %v948 = vmul.f32 %v946, %v945
          %v949 = vadd.f32 %v933, %v941
          %v950 = vadd.f32 %v934, %v942
          %v951 = vadd.f32 %v935, %v947
          %v952 = vadd.f32 %v936, %v948
          %s953 = sld [smem:[#allocation8 + $0x7]]
          %v954 = vld [vmem:[#allocation6 + $0x1] sm:$0xff]
          %v955 = vld [vmem:[#allocation6 + $0x9] sm:$0xff]
          %v956 = vstv %s953
          %v957 = vmul.f32 %v956, %v954
          %v958 = vmul.f32 %v956, %v955
          %s959 = sld [smem:[#allocation8 + $0x87]]
          %v960 = vld [vmem:[#allocation7 + $0x1] sm:$0xff]
          %v961 = vld [vmem:[#allocation7 + $0x9] sm:$0xff]
          %v962 = vstv %s959
          %v963 = vmul.f32 %v962, %v960
          %v964 = vmul.f32 %v962, %v961
          %v965 = vadd.f32 %v957, 0.0
          %v966 = vadd.f32 %v958, 0.0
          %v967 = vadd.f32 %v963, 0.0
          %v968 = vadd.f32 %v964, 0.0
          %s969 = sld [smem:[#allocation8 + $0x8]]
          %v970 = vld [vmem:[%s691 + $0x1] sm:$0xff]
          %v971 = vld [vmem:[%s691 + $0x9] sm:$0xff]
          %v972 = vstv %s969
          %v973 = vmul.f32 %v972, %v970
          %v974 = vmul.f32 %v972, %v971
          %s975 = sld [smem:[#allocation8 + $0x88]]
          %v976 = vld [vmem:[%s707 + $0x1] sm:$0xff]
          %v977 = vld [vmem:[%s707 + $0x9] sm:$0xff]
          %v978 = vstv %s975
          %v979 = vmul.f32 %v978, %v976
          %v980 = vmul.f32 %v978, %v977
          %v981 = vadd.f32 %v965, %v973
          %v982 = vadd.f32 %v966, %v974
          %v983 = vadd.f32 %v967, %v979
          %v984 = vadd.f32 %v968, %v980
          %s985 = sld [smem:[#allocation8 + $0x9]]
          %v986 = vld [vmem:[%s720 + $0x1] sm:$0xff]
          %v987 = vld [vmem:[%s720 + $0x9] sm:$0xff]
          %v988 = vstv %s985
          %v989 = vmul.f32 %v988, %v986
          %v990 = vmul.f32 %v988, %v987
          %s991 = sld [smem:[#allocation8 + $0x89]]
          %v992 = vld [vmem:[%s733 + $0x1] sm:$0xff]
          %v993 = vld [vmem:[%s733 + $0x9] sm:$0xff]
          %v994 = vstv %s991
          %v995 = vmul.f32 %v994, %v992
          %v996 = vmul.f32 %v994, %v993
          %v997 = vadd.f32 %v981, %v989
          %v998 = vadd.f32 %v982, %v990
          %v999 = vadd.f32 %v983, %v995
          %v1000 = vadd.f32 %v984, %v996
          %s1001 = sld [smem:[#allocation8 + $0xa]]
          %v1002 = vld [vmem:[%s746 + $0x1] sm:$0xff]
          %v1003 = vld [vmem:[%s746 + $0x9] sm:$0xff]
          %v1004 = vstv %s1001
          %v1005 = vmul.f32 %v1004, %v1002
          %v1006 = vmul.f32 %v1004, %v1003
          %s1007 = sld [smem:[#allocation8 + $0x8a]]
          %v1008 = vld [vmem:[%s759 + $0x1] sm:$0xff]
          %v1009 = vld [vmem:[%s759 + $0x9] sm:$0xff]
          %v1010 = vstv %s1007
          %v1011 = vmul.f32 %v1010, %v1008
          %v1012 = vmul.f32 %v1010, %v1009
          %v1013 = vadd.f32 %v997, %v1005
          %v1014 = vadd.f32 %v998, %v1006
          %v1015 = vadd.f32 %v999, %v1011
          %v1016 = vadd.f32 %v1000, %v1012
          %s1017 = sld [smem:[#allocation8 + $0xb]]
          %v1018 = vld [vmem:[%s772 + $0x1] sm:$0xff]
          %v1019 = vld [vmem:[%s772 + $0x9] sm:$0xff]
          %v1020 = vstv %s1017
          %v1021 = vmul.f32 %v1020, %v1018
          %v1022 = vmul.f32 %v1020, %v1019
          %s1023 = sld [smem:[#allocation8 + $0x8b]]
          %v1024 = vld [vmem:[%s785 + $0x1] sm:$0xff]
          %v1025 = vld [vmem:[%s785 + $0x9] sm:$0xff]
          %v1026 = vstv %s1023
          %v1027 = vmul.f32 %v1026, %v1024
          %v1028 = vmul.f32 %v1026, %v1025
          %v1029 = vadd.f32 %v1013, %v1021
          %v1030 = vadd.f32 %v1014, %v1022
          %v1031 = vadd.f32 %v1015, %v1027
          %v1032 = vadd.f32 %v1016, %v1028
          %s1033 = sld [smem:[#allocation8 + $0xc]]
          %v1034 = vld [vmem:[%s798 + $0x1] sm:$0xff]
          %v1035 = vld [vmem:[%s798 + $0x9] sm:$0xff]
          %v1036 = vstv %s1033
          %v1037 = vmul.f32 %v1036, %v1034
          %v1038 = vmul.f32 %v1036, %v1035
          %s1039 = sld [smem:[#allocation8 + $0x8c]]
          %v1040 = vld [vmem:[%s811 + $0x1] sm:$0xff]
          %v1041 = vld [vmem:[%s811 + $0x9] sm:$0xff]
          %v1042 = vstv %s1039
          %v1043 = vmul.f32 %v1042, %v1040
          %v1044 = vmul.f32 %v1042, %v1041
          %v1045 = vadd.f32 %v1029, %v1037
          %v1046 = vadd.f32 %v1030, %v1038
          %v1047 = vadd.f32 %v1031, %v1043
          %v1048 = vadd.f32 %v1032, %v1044
          %s1049 = sld [smem:[#allocation8 + $0xd]]
          %v1050 = vld [vmem:[%s824 + $0x1] sm:$0xff]
          %v1051 = vld [vmem:[%s824 + $0x9] sm:$0xff]
          %v1052 = vstv %s1049
          %v1053 = vmul.f32 %v1052, %v1050
          %v1054 = vmul.f32 %v1052, %v1051
          %s1055 = sld [smem:[#allocation8 + $0x8d]]
          %v1056 = vld [vmem:[%s837 + $0x1] sm:$0xff]
          %v1057 = vld [vmem:[%s837 + $0x9] sm:$0xff]
          %v1058 = vstv %s1055
          %v1059 = vmul.f32 %v1058, %v1056
          %v1060 = vmul.f32 %v1058, %v1057
          %v1061 = vadd.f32 %v1045, %v1053
          %v1062 = vadd.f32 %v1046, %v1054
          %v1063 = vadd.f32 %v1047, %v1059
          %v1064 = vadd.f32 %v1048, %v1060
          %s1065 = sld [smem:[#allocation8 + $0xe]]
          %v1066 = vld [vmem:[#allocation6 + $0x2] sm:$0xff]
          %v1067 = vld [vmem:[#allocation6 + $0xa] sm:$0xff]
          %v1068 = vstv %s1065
          %v1069 = vmul.f32 %v1068, %v1066
          %v1070 = vmul.f32 %v1068, %v1067
          %s1071 = sld [smem:[#allocation8 + $0x8e]]
          %v1072 = vld [vmem:[#allocation7 + $0x2] sm:$0xff]
          %v1073 = vld [vmem:[#allocation7 + $0xa] sm:$0xff]
          %v1074 = vstv %s1071
          %v1075 = vmul.f32 %v1074, %v1072
          %v1076 = vmul.f32 %v1074, %v1073
          %v1077 = vadd.f32 %v949, %v1069
          %v1078 = vadd.f32 %v950, %v1070
          %v1079 = vadd.f32 %v951, %v1075
          %v1080 = vadd.f32 %v952, %v1076
          %s1081 = sld [smem:[#allocation8 + $0xf]]
          %v1082 = vld [vmem:[%s691 + $0x2] sm:$0xff]
          %v1083 = vld [vmem:[%s691 + $0xa] sm:$0xff]
          %v1084 = vstv %s1081
          %v1085 = vmul.f32 %v1084, %v1082
          %v1086 = vmul.f32 %v1084, %v1083
          %s1087 = sld [smem:[#allocation8 + $0x8f]]
          %v1088 = vld [vmem:[%s707 + $0x2] sm:$0xff]
          %v1089 = vld [vmem:[%s707 + $0xa] sm:$0xff]
          %v1090 = vstv %s1087
          %v1091 = vmul.f32 %v1090, %v1088
          %v1092 = vmul.f32 %v1090, %v1089
          %v1093 = vadd.f32 %v1077, %v1085
          %v1094 = vadd.f32 %v1078, %v1086
          %v1095 = vadd.f32 %v1079, %v1091
          %v1096 = vadd.f32 %v1080, %v1092
          %s1097 = sld [smem:[#allocation8 + $0x10]]
          %v1098 = vld [vmem:[%s720 + $0x2] sm:$0xff]
          %v1099 = vld [vmem:[%s720 + $0xa] sm:$0xff]
          %v1100 = vstv %s1097
          %v1101 = vmul.f32 %v1100, %v1098
          %v1102 = vmul.f32 %v1100, %v1099
          %s1103 = sld [smem:[#allocation8 + $0x90]]
          %v1104 = vld [vmem:[%s733 + $0x2] sm:$0xff]
          %v1105 = vld [vmem:[%s733 + $0xa] sm:$0xff]
          %v1106 = vstv %s1103
          %v1107 = vmul.f32 %v1106, %v1104
          %v1108 = vmul.f32 %v1106, %v1105
          %v1109 = vadd.f32 %v1093, %v1101
          %v1110 = vadd.f32 %v1094, %v1102
          %v1111 = vadd.f32 %v1095, %v1107
          %v1112 = vadd.f32 %v1096, %v1108
          %s1113 = sld [smem:[#allocation8 + $0x11]]
          %v1114 = vld [vmem:[%s746 + $0x2] sm:$0xff]
          %v1115 = vld [vmem:[%s746 + $0xa] sm:$0xff]
          %v1116 = vstv %s1113
          %v1117 = vmul.f32 %v1116, %v1114
          %v1118 = vmul.f32 %v1116, %v1115
          %s1119 = sld [smem:[#allocation8 + $0x91]]
          %v1120 = vld [vmem:[%s759 + $0x2] sm:$0xff]
          %v1121 = vld [vmem:[%s759 + $0xa] sm:$0xff]
          %v1122 = vstv %s1119
          %v1123 = vmul.f32 %v1122, %v1120
          %v1124 = vmul.f32 %v1122, %v1121
          %v1125 = vadd.f32 %v1109, %v1117
          %v1126 = vadd.f32 %v1110, %v1118
          %v1127 = vadd.f32 %v1111, %v1123
          %v1128 = vadd.f32 %v1112, %v1124
          %s1129 = sld [smem:[#allocation8 + $0x12]]
          %v1130 = vld [vmem:[%s772 + $0x2] sm:$0xff]
          %v1131 = vld [vmem:[%s772 + $0xa] sm:$0xff]
          %v1132 = vstv %s1129
          %v1133 = vmul.f32 %v1132, %v1130
          %v1134 = vmul.f32 %v1132, %v1131
          %s1135 = sld [smem:[#allocation8 + $0x92]]
          %v1136 = vld [vmem:[%s785 + $0x2] sm:$0xff]
          %v1137 = vld [vmem:[%s785 + $0xa] sm:$0xff]
          %v1138 = vstv %s1135
          %v1139 = vmul.f32 %v1138, %v1136
          %v1140 = vmul.f32 %v1138, %v1137
          %v1141 = vadd.f32 %v1125, %v1133
          %v1142 = vadd.f32 %v1126, %v1134
          %v1143 = vadd.f32 %v1127, %v1139
          %v1144 = vadd.f32 %v1128, %v1140
          %s1145 = sld [smem:[#allocation8 + $0x13]]
          %v1146 = vld [vmem:[%s798 + $0x2] sm:$0xff]
          %v1147 = vld [vmem:[%s798 + $0xa] sm:$0xff]
          %v1148 = vstv %s1145
          %v1149 = vmul.f32 %v1148, %v1146
          %v1150 = vmul.f32 %v1148, %v1147
          %s1151 = sld [smem:[#allocation8 + $0x93]]
          %v1152 = vld [vmem:[%s811 + $0x2] sm:$0xff]
          %v1153 = vld [vmem:[%s811 + $0xa] sm:$0xff]
          %v1154 = vstv %s1151
          %v1155 = vmul.f32 %v1154, %v1152
          %v1156 = vmul.f32 %v1154, %v1153
          %v1157 = vadd.f32 %v1141, %v1149
          %v1158 = vadd.f32 %v1142, %v1150
          %v1159 = vadd.f32 %v1143, %v1155
          %v1160 = vadd.f32 %v1144, %v1156
          %s1161 = sld [smem:[#allocation8 + $0x14]]
          %v1162 = vld [vmem:[%s824 + $0x2] sm:$0xff]
          %v1163 = vld [vmem:[%s824 + $0xa] sm:$0xff]
          %v1164 = vstv %s1161
          %v1165 = vmul.f32 %v1164, %v1162
          %v1166 = vmul.f32 %v1164, %v1163
          %s1167 = sld [smem:[#allocation8 + $0x94]]
          %v1168 = vld [vmem:[%s837 + $0x2] sm:$0xff]
          %v1169 = vld [vmem:[%s837 + $0xa] sm:$0xff]
          %v1170 = vstv %s1167
          %v1171 = vmul.f32 %v1170, %v1168
          %v1172 = vmul.f32 %v1170, %v1169
          %v1173 = vadd.f32 %v1157, %v1165
          %v1174 = vadd.f32 %v1158, %v1166
          %v1175 = vadd.f32 %v1159, %v1171
          %v1176 = vadd.f32 %v1160, %v1172
          %s1177 = sld [smem:[#allocation8 + $0x15]]
          %v1178 = vld [vmem:[#allocation6 + $0x3] sm:$0xff]
          %v1179 = vld [vmem:[#allocation6 + $0xb] sm:$0xff]
          %v1180 = vstv %s1177
          %v1181 = vmul.f32 %v1180, %v1178
          %v1182 = vmul.f32 %v1180, %v1179
          %s1183 = sld [smem:[#allocation8 + $0x95]]
          %v1184 = vld [vmem:[#allocation7 + $0x3] sm:$0xff]
          %v1185 = vld [vmem:[#allocation7 + $0xb] sm:$0xff]
          %v1186 = vstv %s1183
          %v1187 = vmul.f32 %v1186, %v1184
          %v1188 = vmul.f32 %v1186, %v1185
          %v1189 = vadd.f32 %v1061, %v1181
          %v1190 = vadd.f32 %v1062, %v1182
          %v1191 = vadd.f32 %v1063, %v1187
          %v1192 = vadd.f32 %v1064, %v1188
          %s1193 = sld [smem:[#allocation8 + $0x16]]
          %v1194 = vld [vmem:[%s691 + $0x3] sm:$0xff]
          %v1195 = vld [vmem:[%s691 + $0xb] sm:$0xff]
          %v1196 = vstv %s1193
          %v1197 = vmul.f32 %v1196, %v1194
          %v1198 = vmul.f32 %v1196, %v1195
          %s1199 = sld [smem:[#allocation8 + $0x96]]
          %v1200 = vld [vmem:[%s707 + $0x3] sm:$0xff]
          %v1201 = vld [vmem:[%s707 + $0xb] sm:$0xff]
          %v1202 = vstv %s1199
          %v1203 = vmul.f32 %v1202, %v1200
          %v1204 = vmul.f32 %v1202, %v1201
          %v1205 = vadd.f32 %v1189, %v1197
          %v1206 = vadd.f32 %v1190, %v1198
          %v1207 = vadd.f32 %v1191, %v1203
          %v1208 = vadd.f32 %v1192, %v1204
          %s1209 = sld [smem:[#allocation8 + $0x17]]
          %v1210 = vld [vmem:[%s720 + $0x3] sm:$0xff]
          %v1211 = vld [vmem:[%s720 + $0xb] sm:$0xff]
          %v1212 = vstv %s1209
          %v1213 = vmul.f32 %v1212, %v1210
          %v1214 = vmul.f32 %v1212, %v1211
          %s1215 = sld [smem:[#allocation8 + $0x97]]
          %v1216 = vld [vmem:[%s733 + $0x3] sm:$0xff]
          %v1217 = vld [vmem:[%s733 + $0xb] sm:$0xff]
          %v1218 = vstv %s1215
          %v1219 = vmul.f32 %v1218, %v1216
          %v1220 = vmul.f32 %v1218, %v1217
          %v1221 = vadd.f32 %v1205, %v1213
          %v1222 = vadd.f32 %v1206, %v1214
          %v1223 = vadd.f32 %v1207, %v1219
          %v1224 = vadd.f32 %v1208, %v1220
          %s1225 = sld [smem:[#allocation8 + $0x18]]
          %v1226 = vld [vmem:[%s746 + $0x3] sm:$0xff]
          %v1227 = vld [vmem:[%s746 + $0xb] sm:$0xff]
          %v1228 = vstv %s1225
          %v1229 = vmul.f32 %v1228, %v1226
          %v1230 = vmul.f32 %v1228, %v1227
          %s1231 = sld [smem:[#allocation8 + $0x98]]
          %v1232 = vld [vmem:[%s759 + $0x3] sm:$0xff]
          %v1233 = vld [vmem:[%s759 + $0xb] sm:$0xff]
          %v1234 = vstv %s1231
          %v1235 = vmul.f32 %v1234, %v1232
          %v1236 = vmul.f32 %v1234, %v1233
          %v1237 = vadd.f32 %v1221, %v1229
          %v1238 = vadd.f32 %v1222, %v1230
          %v1239 = vadd.f32 %v1223, %v1235
          %v1240 = vadd.f32 %v1224, %v1236
          %s1241 = sld [smem:[#allocation8 + $0x19]]
          %v1242 = vld [vmem:[%s772 + $0x3] sm:$0xff]
          %v1243 = vld [vmem:[%s772 + $0xb] sm:$0xff]
          %v1244 = vstv %s1241
          %v1245 = vmul.f32 %v1244, %v1242
          %v1246 = vmul.f32 %v1244, %v1243
          %s1247 = sld [smem:[#allocation8 + $0x99]]
          %v1248 = vld [vmem:[%s785 + $0x3] sm:$0xff]
          %v1249 = vld [vmem:[%s785 + $0xb] sm:$0xff]
          %v1250 = vstv %s1247
          %v1251 = vmul.f32 %v1250, %v1248
          %v1252 = vmul.f32 %v1250, %v1249
          %v1253 = vadd.f32 %v1237, %v1245
          %v1254 = vadd.f32 %v1238, %v1246
          %v1255 = vadd.f32 %v1239, %v1251
          %v1256 = vadd.f32 %v1240, %v1252
          %s1257 = sld [smem:[#allocation8 + $0x1a]]
          %v1258 = vld [vmem:[%s798 + $0x3] sm:$0xff]
          %v1259 = vld [vmem:[%s798 + $0xb] sm:$0xff]
          %v1260 = vstv %s1257
          %v1261 = vmul.f32 %v1260, %v1258
          %v1262 = vmul.f32 %v1260, %v1259
          %s1263 = sld [smem:[#allocation8 + $0x9a]]
          %v1264 = vld [vmem:[%s811 + $0x3] sm:$0xff]
          %v1265 = vld [vmem:[%s811 + $0xb] sm:$0xff]
          %v1266 = vstv %s1263
          %v1267 = vmul.f32 %v1266, %v1264
          %v1268 = vmul.f32 %v1266, %v1265
          %v1269 = vadd.f32 %v1253, %v1261
          %v1270 = vadd.f32 %v1254, %v1262
          %v1271 = vadd.f32 %v1255, %v1267
          %v1272 = vadd.f32 %v1256, %v1268
          %s1273 = sld [smem:[#allocation8 + $0x1b]]
          %v1274 = vld [vmem:[%s824 + $0x3] sm:$0xff]
          %v1275 = vld [vmem:[%s824 + $0xb] sm:$0xff]
          %v1276 = vstv %s1273
          %v1277 = vmul.f32 %v1276, %v1274
          %v1278 = vmul.f32 %v1276, %v1275
          %s1279 = sld [smem:[#allocation8 + $0x9b]]
          %v1280 = vld [vmem:[%s837 + $0x3] sm:$0xff]
          %v1281 = vld [vmem:[%s837 + $0xb] sm:$0xff]
          %v1282 = vstv %s1279
          %v1283 = vmul.f32 %v1282, %v1280
          %v1284 = vmul.f32 %v1282, %v1281
          %v1285 = vadd.f32 %v1269, %v1277
          %v1286 = vadd.f32 %v1270, %v1278
          %v1287 = vadd.f32 %v1271, %v1283
          %v1288 = vadd.f32 %v1272, %v1284
          %s1289 = sld [smem:[#allocation8 + $0x1c]]
          %v1290 = vld [vmem:[#allocation6 + $0x4] sm:$0xff]
          %v1291 = vld [vmem:[#allocation6 + $0xc] sm:$0xff]
          %v1292 = vstv %s1289
          %v1293 = vmul.f32 %v1292, %v1290
          %v1294 = vmul.f32 %v1292, %v1291
          %s1295 = sld [smem:[#allocation8 + $0x9c]]
          %v1296 = vld [vmem:[#allocation7 + $0x4] sm:$0xff]
          %v1297 = vld [vmem:[#allocation7 + $0xc] sm:$0xff]
          %v1298 = vstv %s1295
          %v1299 = vmul.f32 %v1298, %v1296
          %v1300 = vmul.f32 %v1298, %v1297
          %v1301 = vadd.f32 %v1173, %v1293
          %v1302 = vadd.f32 %v1174, %v1294
          %v1303 = vadd.f32 %v1175, %v1299
          %v1304 = vadd.f32 %v1176, %v1300
          %s1305 = sld [smem:[#allocation8 + $0x1d]]
          %v1306 = vld [vmem:[%s691 + $0x4] sm:$0xff]
          %v1307 = vld [vmem:[%s691 + $0xc] sm:$0xff]
          %v1308 = vstv %s1305
          %v1309 = vmul.f32 %v1308, %v1306
          %v1310 = vmul.f32 %v1308, %v1307
          %s1311 = sld [smem:[#allocation8 + $0x9d]]
          %v1312 = vld [vmem:[%s707 + $0x4] sm:$0xff]
          %v1313 = vld [vmem:[%s707 + $0xc] sm:$0xff]
          %v1314 = vstv %s1311
          %v1315 = vmul.f32 %v1314, %v1312
          %v1316 = vmul.f32 %v1314, %v1313
          %v1317 = vadd.f32 %v1301, %v1309
          %v1318 = vadd.f32 %v1302, %v1310
          %v1319 = vadd.f32 %v1303, %v1315
          %v1320 = vadd.f32 %v1304, %v1316
          %s1321 = sld [smem:[#allocation8 + $0x1e]]
          %v1322 = vld [vmem:[%s720 + $0x4] sm:$0xff]
          %v1323 = vld [vmem:[%s720 + $0xc] sm:$0xff]
          %v1324 = vstv %s1321
          %v1325 = vmul.f32 %v1324, %v1322
          %v1326 = vmul.f32 %v1324, %v1323
          %s1327 = sld [smem:[#allocation8 + $0x9e]]
          %v1328 = vld [vmem:[%s733 + $0x4] sm:$0xff]
          %v1329 = vld [vmem:[%s733 + $0xc] sm:$0xff]
          %v1330 = vstv %s1327
          %v1331 = vmul.f32 %v1330, %v1328
          %v1332 = vmul.f32 %v1330, %v1329
          %v1333 = vadd.f32 %v1317, %v1325
          %v1334 = vadd.f32 %v1318, %v1326
          %v1335 = vadd.f32 %v1319, %v1331
          %v1336 = vadd.f32 %v1320, %v1332
          %s1337 = sld [smem:[#allocation8 + $0x1f]]
          %v1338 = vld [vmem:[%s746 + $0x4] sm:$0xff]
          %v1339 = vld [vmem:[%s746 + $0xc] sm:$0xff]
          %v1340 = vstv %s1337
          %v1341 = vmul.f32 %v1340, %v1338
          %v1342 = vmul.f32 %v1340, %v1339
          %s1343 = sld [smem:[#allocation8 + $0x9f]]
          %v1344 = vld [vmem:[%s759 + $0x4] sm:$0xff]
          %v1345 = vld [vmem:[%s759 + $0xc] sm:$0xff]
          %v1346 = vstv %s1343
          %v1347 = vmul.f32 %v1346, %v1344
          %v1348 = vmul.f32 %v1346, %v1345
          %v1349 = vadd.f32 %v1333, %v1341
          %v1350 = vadd.f32 %v1334, %v1342
          %v1351 = vadd.f32 %v1335, %v1347
          %v1352 = vadd.f32 %v1336, %v1348
          %s1353 = sld [smem:[#allocation8 + $0x20]]
          %v1354 = vld [vmem:[%s772 + $0x4] sm:$0xff]
          %v1355 = vld [vmem:[%s772 + $0xc] sm:$0xff]
          %v1356 = vstv %s1353
          %v1357 = vmul.f32 %v1356, %v1354
          %v1358 = vmul.f32 %v1356, %v1355
          %s1359 = sld [smem:[#allocation8 + $0xa0]]
          %v1360 = vld [vmem:[%s785 + $0x4] sm:$0xff]
          %v1361 = vld [vmem:[%s785 + $0xc] sm:$0xff]
          %v1362 = vstv %s1359
          %v1363 = vmul.f32 %v1362, %v1360
          %v1364 = vmul.f32 %v1362, %v1361
          %v1365 = vadd.f32 %v1349, %v1357
          %v1366 = vadd.f32 %v1350, %v1358
          %v1367 = vadd.f32 %v1351, %v1363
          %v1368 = vadd.f32 %v1352, %v1364
          %s1369 = sld [smem:[#allocation8 + $0x21]]
          %v1370 = vld [vmem:[%s798 + $0x4] sm:$0xff]
          %v1371 = vld [vmem:[%s798 + $0xc] sm:$0xff]
          %v1372 = vstv %s1369
          %v1373 = vmul.f32 %v1372, %v1370
          %v1374 = vmul.f32 %v1372, %v1371
          %s1375 = sld [smem:[#allocation8 + $0xa1]]
          %v1376 = vld [vmem:[%s811 + $0x4] sm:$0xff]
          %v1377 = vld [vmem:[%s811 + $0xc] sm:$0xff]
          %v1378 = vstv %s1375
          %v1379 = vmul.f32 %v1378, %v1376
          %v1380 = vmul.f32 %v1378, %v1377
          %v1381 = vadd.f32 %v1365, %v1373
          %v1382 = vadd.f32 %v1366, %v1374
          %v1383 = vadd.f32 %v1367, %v1379
          %v1384 = vadd.f32 %v1368, %v1380
          %s1385 = sld [smem:[#allocation8 + $0x22]]
          %v1386 = vld [vmem:[%s824 + $0x4] sm:$0xff]
          %v1387 = vld [vmem:[%s824 + $0xc] sm:$0xff]
          %v1388 = vstv %s1385
          %v1389 = vmul.f32 %v1388, %v1386
          %v1390 = vmul.f32 %v1388, %v1387
          %s1391 = sld [smem:[#allocation8 + $0xa2]]
          %v1392 = vld [vmem:[%s837 + $0x4] sm:$0xff]
          %v1393 = vld [vmem:[%s837 + $0xc] sm:$0xff]
          %v1394 = vstv %s1391
          %v1395 = vmul.f32 %v1394, %v1392
          %v1396 = vmul.f32 %v1394, %v1393
          %v1397 = vadd.f32 %v1381, %v1389
          %v1398 = vadd.f32 %v1382, %v1390
          %v1399 = vadd.f32 %v1383, %v1395
          %v1400 = vadd.f32 %v1384, %v1396
          %s1401 = sld [smem:[#allocation8 + $0x23]]
          %v1402 = vld [vmem:[#allocation6 + $0x5] sm:$0xff]
          %v1403 = vld [vmem:[#allocation6 + $0xd] sm:$0xff]
          %v1404 = vstv %s1401
          %v1405 = vmul.f32 %v1404, %v1402
          %v1406 = vmul.f32 %v1404, %v1403
          %s1407 = sld [smem:[#allocation8 + $0xa3]]
          %v1408 = vld [vmem:[#allocation7 + $0x5] sm:$0xff]
          %v1409 = vld [vmem:[#allocation7 + $0xd] sm:$0xff]
          %v1410 = vstv %s1407
          %v1411 = vmul.f32 %v1410, %v1408
          %v1412 = vmul.f32 %v1410, %v1409
          %v1413 = vadd.f32 %v1285, %v1405
          %v1414 = vadd.f32 %v1286, %v1406
          %v1415 = vadd.f32 %v1287, %v1411
          %v1416 = vadd.f32 %v1288, %v1412
          %s1417 = sld [smem:[#allocation8 + $0x24]]
          %v1418 = vld [vmem:[%s691 + $0x5] sm:$0xff]
          %v1419 = vld [vmem:[%s691 + $0xd] sm:$0xff]
          %v1420 = vstv %s1417
          %v1421 = vmul.f32 %v1420, %v1418
          %v1422 = vmul.f32 %v1420, %v1419
          %s1423 = sld [smem:[#allocation8 + $0xa4]]
          %v1424 = vld [vmem:[%s707 + $0x5] sm:$0xff]
          %v1425 = vld [vmem:[%s707 + $0xd] sm:$0xff]
          %v1426 = vstv %s1423
          %v1427 = vmul.f32 %v1426, %v1424
          %v1428 = vmul.f32 %v1426, %v1425
          %v1429 = vadd.f32 %v1413, %v1421
          %v1430 = vadd.f32 %v1414, %v1422
          %v1431 = vadd.f32 %v1415, %v1427
          %v1432 = vadd.f32 %v1416, %v1428
          %s1433 = sld [smem:[#allocation8 + $0x25]]
          %v1434 = vld [vmem:[%s720 + $0x5] sm:$0xff]
          %v1435 = vld [vmem:[%s720 + $0xd] sm:$0xff]
          %v1436 = vstv %s1433
          %v1437 = vmul.f32 %v1436, %v1434
          %v1438 = vmul.f32 %v1436, %v1435
          %s1439 = sld [smem:[#allocation8 + $0xa5]]
          %v1440 = vld [vmem:[%s733 + $0x5] sm:$0xff]
          %v1441 = vld [vmem:[%s733 + $0xd] sm:$0xff]
          %v1442 = vstv %s1439
          %v1443 = vmul.f32 %v1442, %v1440
          %v1444 = vmul.f32 %v1442, %v1441
          %v1445 = vadd.f32 %v1429, %v1437
          %v1446 = vadd.f32 %v1430, %v1438
          %v1447 = vadd.f32 %v1431, %v1443
          %v1448 = vadd.f32 %v1432, %v1444
          %s1449 = sld [smem:[#allocation8 + $0x26]]
          %v1450 = vld [vmem:[%s746 + $0x5] sm:$0xff]
          %v1451 = vld [vmem:[%s746 + $0xd] sm:$0xff]
          %v1452 = vstv %s1449
          %v1453 = vmul.f32 %v1452, %v1450
          %v1454 = vmul.f32 %v1452, %v1451
          %s1455 = sld [smem:[#allocation8 + $0xa6]]
          %v1456 = vld [vmem:[%s759 + $0x5] sm:$0xff]
          %v1457 = vld [vmem:[%s759 + $0xd] sm:$0xff]
          %v1458 = vstv %s1455
          %v1459 = vmul.f32 %v1458, %v1456
          %v1460 = vmul.f32 %v1458, %v1457
          %v1461 = vadd.f32 %v1445, %v1453
          %v1462 = vadd.f32 %v1446, %v1454
          %v1463 = vadd.f32 %v1447, %v1459
          %v1464 = vadd.f32 %v1448, %v1460
          %s1465 = sld [smem:[#allocation8 + $0x27]]
          %v1466 = vld [vmem:[%s772 + $0x5] sm:$0xff]
          %v1467 = vld [vmem:[%s772 + $0xd] sm:$0xff]
          %v1468 = vstv %s1465
          %v1469 = vmul.f32 %v1468, %v1466
          %v1470 = vmul.f32 %v1468, %v1467
          %s1471 = sld [smem:[#allocation8 + $0xa7]]
          %v1472 = vld [vmem:[%s785 + $0x5] sm:$0xff]
          %v1473 = vld [vmem:[%s785 + $0xd] sm:$0xff]
          %v1474 = vstv %s1471
          %v1475 = vmul.f32 %v1474, %v1472
          %v1476 = vmul.f32 %v1474, %v1473
          %v1477 = vadd.f32 %v1461, %v1469
          %v1478 = vadd.f32 %v1462, %v1470
          %v1479 = vadd.f32 %v1463, %v1475
          %v1480 = vadd.f32 %v1464, %v1476
          %s1481 = sld [smem:[#allocation8 + $0x28]]
          %v1482 = vld [vmem:[%s798 + $0x5] sm:$0xff]
          %v1483 = vld [vmem:[%s798 + $0xd] sm:$0xff]
          %v1484 = vstv %s1481
          %v1485 = vmul.f32 %v1484, %v1482
          %v1486 = vmul.f32 %v1484, %v1483
          %s1487 = sld [smem:[#allocation8 + $0xa8]]
          %v1488 = vld [vmem:[%s811 + $0x5] sm:$0xff]
          %v1489 = vld [vmem:[%s811 + $0xd] sm:$0xff]
          %v1490 = vstv %s1487
          %v1491 = vmul.f32 %v1490, %v1488
          %v1492 = vmul.f32 %v1490, %v1489
          %v1493 = vadd.f32 %v1477, %v1485
          %v1494 = vadd.f32 %v1478, %v1486
          %v1495 = vadd.f32 %v1479, %v1491
          %v1496 = vadd.f32 %v1480, %v1492
          %s1497 = sld [smem:[#allocation8 + $0x29]]
          %v1498 = vld [vmem:[%s824 + $0x5] sm:$0xff]
          %v1499 = vld [vmem:[%s824 + $0xd] sm:$0xff]
          %v1500 = vstv %s1497
          %v1501 = vmul.f32 %v1500, %v1498
          %v1502 = vmul.f32 %v1500, %v1499
          %s1503 = sld [smem:[#allocation8 + $0xa9]]
          %v1504 = vld [vmem:[%s837 + $0x5] sm:$0xff]
          %v1505 = vld [vmem:[%s837 + $0xd] sm:$0xff]
          %v1506 = vstv %s1503
          %v1507 = vmul.f32 %v1506, %v1504
          %v1508 = vmul.f32 %v1506, %v1505
          %v1509 = vadd.f32 %v1493, %v1501
          %v1510 = vadd.f32 %v1494, %v1502
          %v1511 = vadd.f32 %v1495, %v1507
          %v1512 = vadd.f32 %v1496, %v1508
          %s1513 = sld [smem:[#allocation8 + $0x2a]]
          %v1514 = vld [vmem:[#allocation6 + $0x6] sm:$0xff]
          %v1515 = vld [vmem:[#allocation6 + $0xe] sm:$0xff]
          %v1516 = vstv %s1513
          %v1517 = vmul.f32 %v1516, %v1514
          %v1518 = vmul.f32 %v1516, %v1515
          %s1519 = sld [smem:[#allocation8 + $0xaa]]
          %v1520 = vld [vmem:[#allocation7 + $0x6] sm:$0xff]
          %v1521 = vld [vmem:[#allocation7 + $0xe] sm:$0xff]
          %v1522 = vstv %s1519
          %v1523 = vmul.f32 %v1522, %v1520
          %v1524 = vmul.f32 %v1522, %v1521
          %v1525 = vadd.f32 %v1397, %v1517
          %v1526 = vadd.f32 %v1398, %v1518
          %v1527 = vadd.f32 %v1399, %v1523
          %v1528 = vadd.f32 %v1400, %v1524
          %s1529 = sld [smem:[#allocation8 + $0x2b]]
          %v1530 = vld [vmem:[%s691 + $0x6] sm:$0xff]
          %v1531 = vld [vmem:[%s691 + $0xe] sm:$0xff]
          %v1532 = vstv %s1529
          %v1533 = vmul.f32 %v1532, %v1530
          %v1534 = vmul.f32 %v1532, %v1531
          %s1535 = sld [smem:[#allocation8 + $0xab]]
          %v1536 = vld [vmem:[%s707 + $0x6] sm:$0xff]
          %v1537 = vld [vmem:[%s707 + $0xe] sm:$0xff]
          %v1538 = vstv %s1535
          %v1539 = vmul.f32 %v1538, %v1536
          %v1540 = vmul.f32 %v1538, %v1537
          %v1541 = vadd.f32 %v1525, %v1533
          %v1542 = vadd.f32 %v1526, %v1534
          %v1543 = vadd.f32 %v1527, %v1539
          %v1544 = vadd.f32 %v1528, %v1540
          %s1545 = sld [smem:[#allocation8 + $0x2c]]
          %v1546 = vld [vmem:[%s720 + $0x6] sm:$0xff]
          %v1547 = vld [vmem:[%s720 + $0xe] sm:$0xff]
          %v1548 = vstv %s1545
          %v1549 = vmul.f32 %v1548, %v1546
          %v1550 = vmul.f32 %v1548, %v1547
          %s1551 = sld [smem:[#allocation8 + $0xac]]
          %v1552 = vld [vmem:[%s733 + $0x6] sm:$0xff]
          %v1553 = vld [vmem:[%s733 + $0xe] sm:$0xff]
          %v1554 = vstv %s1551
          %v1555 = vmul.f32 %v1554, %v1552
          %v1556 = vmul.f32 %v1554, %v1553
          %v1557 = vadd.f32 %v1541, %v1549
          %v1558 = vadd.f32 %v1542, %v1550
          %v1559 = vadd.f32 %v1543, %v1555
          %v1560 = vadd.f32 %v1544, %v1556
          %s1561 = sld [smem:[#allocation8 + $0x2d]]
          %v1562 = vld [vmem:[%s746 + $0x6] sm:$0xff]
          %v1563 = vld [vmem:[%s746 + $0xe] sm:$0xff]
          %v1564 = vstv %s1561
          %v1565 = vmul.f32 %v1564, %v1562
          %v1566 = vmul.f32 %v1564, %v1563
          %s1567 = sld [smem:[#allocation8 + $0xad]]
          %v1568 = vld [vmem:[%s759 + $0x6] sm:$0xff]
          %v1569 = vld [vmem:[%s759 + $0xe] sm:$0xff]
          %v1570 = vstv %s1567
          %v1571 = vmul.f32 %v1570, %v1568
          %v1572 = vmul.f32 %v1570, %v1569
          %v1573 = vadd.f32 %v1557, %v1565
          %v1574 = vadd.f32 %v1558, %v1566
          %v1575 = vadd.f32 %v1559, %v1571
          %v1576 = vadd.f32 %v1560, %v1572
          %s1577 = sld [smem:[#allocation8 + $0x2e]]
          %v1578 = vld [vmem:[%s772 + $0x6] sm:$0xff]
          %v1579 = vld [vmem:[%s772 + $0xe] sm:$0xff]
          %v1580 = vstv %s1577
          %v1581 = vmul.f32 %v1580, %v1578
          %v1582 = vmul.f32 %v1580, %v1579
          %s1583 = sld [smem:[#allocation8 + $0xae]]
          %v1584 = vld [vmem:[%s785 + $0x6] sm:$0xff]
          %v1585 = vld [vmem:[%s785 + $0xe] sm:$0xff]
          %v1586 = vstv %s1583
          %v1587 = vmul.f32 %v1586, %v1584
          %v1588 = vmul.f32 %v1586, %v1585
          %v1589 = vadd.f32 %v1573, %v1581
          %v1590 = vadd.f32 %v1574, %v1582
          %v1591 = vadd.f32 %v1575, %v1587
          %v1592 = vadd.f32 %v1576, %v1588
          %s1593 = sld [smem:[#allocation8 + $0x2f]]
          %v1594 = vld [vmem:[%s798 + $0x6] sm:$0xff]
          %v1595 = vld [vmem:[%s798 + $0xe] sm:$0xff]
          %v1596 = vstv %s1593
          %v1597 = vmul.f32 %v1596, %v1594
          %v1598 = vmul.f32 %v1596, %v1595
          %s1599 = sld [smem:[#allocation8 + $0xaf]]
          %v1600 = vld [vmem:[%s811 + $0x6] sm:$0xff]
          %v1601 = vld [vmem:[%s811 + $0xe] sm:$0xff]
          %v1602 = vstv %s1599
          %v1603 = vmul.f32 %v1602, %v1600
          %v1604 = vmul.f32 %v1602, %v1601
          %v1605 = vadd.f32 %v1589, %v1597
          %v1606 = vadd.f32 %v1590, %v1598
          %v1607 = vadd.f32 %v1591, %v1603
          %v1608 = vadd.f32 %v1592, %v1604
          %s1609 = sld [smem:[#allocation8 + $0x30]]
          %v1610 = vld [vmem:[%s824 + $0x6] sm:$0xff]
          %v1611 = vld [vmem:[%s824 + $0xe] sm:$0xff]
          %v1612 = vstv %s1609
          %v1613 = vmul.f32 %v1612, %v1610
          %v1614 = vmul.f32 %v1612, %v1611
          %s1615 = sld [smem:[#allocation8 + $0xb0]]
          %v1616 = vld [vmem:[%s837 + $0x6] sm:$0xff]
          %v1617 = vld [vmem:[%s837 + $0xe] sm:$0xff]
          %v1618 = vstv %s1615
          %v1619 = vmul.f32 %v1618, %v1616
          %v1620 = vmul.f32 %v1618, %v1617
          %v1621 = vadd.f32 %v1605, %v1613
          %v1622 = vadd.f32 %v1606, %v1614
          %v1623 = vadd.f32 %v1607, %v1619
          %v1624 = vadd.f32 %v1608, %v1620
          %v1625 = vadd.f32 %v1621, %v1509
          %v1626 = vadd.f32 %v1622, %v1510
          %v1627 = vadd.f32 %v1623, %v1511
          %v1628 = vadd.f32 %v1624, %v1512
          %v1629 = vadd.f32 %v1625, %v1627
          %v1630 = vadd.f32 %v1626, %v1628
          %v1631 = vxor.u32 %v1629, 2147483648
          %v1632 = vxor.u32 %v1630, 2147483648
          %v1633 = vmul.f32 %v1631, 1.442695
          %v1634 = vpow.pop %v1633
          %v1635 = vmul.f32 %v1632, 1.442695
          %v1636 = vpow.pop %v1635
          %v1637 = vadd.f32 %v1634, 1.0
          %v1638 = vadd.f32 %v1636, 1.0
          %v1639 = vrcp.pop %v1637
          %v1640 = vmul.f32 1.0, %v1639
          %v1641 = vrcp.pop %v1638
          %v1642 = vmul.f32 1.0, %v1641
          %1643 = vst.msk [vmem:[%s187] sm:$0xff] %vm671, %v1640
          %1644 = vst.msk [vmem:[%s187 + $0x8] sm:$0xff] %vm671, %v1642
        $region48: #{tpu_custom_call.1} parent=27 // pred_fallthru
          _
        %s1645 = sand.u32 %s89, 1
        %s1646 = scalar_lea.sflag [#allocation10], %s1645
        %s1647 = sand.u32 %s89, 1
        %s1648 = smul.addr %s1647, 16
        %s1649 = scalar_lea.vmem [#allocation13], %s1648
        // Predicated region
        $region49: #{tpu_custom_call.1} parent=27 // pred_check
          %p1650 = pneg %p99
        $region50: #{tpu_custom_call.1} parent=27 // pred_check_branch
          %1652 = sbr.rel (%p1650) target = $region52
        $region51: #{tpu_custom_call.1} parent=27 // pred_region
          %s1654 = ssub.s32 256, 256
          %1655 = vsyncadd %s1646, %s1654
          %s1656 = smul.addr %s24, 2
          %s1657 = smul.addr %s1656, 128
          %s1658 = scalar_lea.hbm %s2, %s1657
          %s1659 = sshll.u32 %s1649, 4
          %s1660 = int_to_ptr.vmem [resolvable:$true] %s1659
          %1665 = dma.vmem_to_hbm [thread:$0]  %s1660, 256, %s1658, %s1646, 128, 128, 8
        $region52: #{tpu_custom_call.1} parent=27 // pred_fallthru
          _
      $region28: #{tpu_custom_call.1} parent=5 // pred_fallthru
        _
      %p1666 = scmp.le.s32.totalorder 2, %s15
      // Predicated region
      $region53: #{tpu_custom_call.1} parent=5 // pred_check
        %p1667 = pneg %p1666
      $region54: #{tpu_custom_call.1} parent=5 // pred_check_branch
        %1669 = sbr.rel (%p1667) target = $region56
      $region55: #{tpu_custom_call.1} parent=5 // pred_region
        %s1670 = ssub.s32 %s15, 2
        // Predicated region
        $region57: #{tpu_custom_call.1} parent=55 // pred_check
          %p1671 = pneg %p105
        $region58: #{tpu_custom_call.1} parent=55 // pred_check_branch
          %1673 = sbr.rel (%p1671) target = $region60
        $region59: #{tpu_custom_call.1} parent=55 // pred_region
          %s1674 = sand.u32 %s90, 1
          %s1675 = scalar_lea.sflag [#allocation10], %s1674
          %s1676 = sand.u32 %s90, 1
          %s1677 = smul.addr %s1676, 16
          %s1678 = scalar_lea.vmem [#allocation13], %s1677
          %1679 = dma.done %s1675, 256
        $region60: #{tpu_custom_call.1} parent=55 // pred_fallthru
          _
      $region56: #{tpu_custom_call.1} parent=5 // pred_fallthru
        _
    $region6: #{tpu_custom_call.1} parent=1 // loop_footer
      %s19 = sadd.s32 1, %s15
    $region7: #{tpu_custom_call.1} parent=1 // loop_footer_branch
      %14 = sbr.rel target = $region3
    $region8: #{tpu_custom_call.1} parent=1 // loop_exit
      _
    %1680 = vsyncpa [#allocation9], 1
    %s1681 = scalar_lea.sflag [#allocation9], 1
    %1682 = vsyncpa %s1681, 1
    %1683 = vsyncpa [#allocation10], 1
    %s1684 = scalar_lea.sflag [#allocation10], 1
    %1685 = vsyncpa %s1684, 1
    %1686 = vsyncpa [#allocation11], 1
    %s1687 = scalar_lea.sflag [#allocation11], 1
    %1688 = vsyncpa %s1687, 1

</llo_original>
